<compile_context>
chip_gen: v6e
topology: v6e:2x2x1
jax: 0.10.0
libtpu: 0.0.40
codegen_flags: <defaults>
</compile_context>

<pallas_src>
import jax
import jax.numpy as jnp
from jax import lax
from jax.experimental import pallas as pl
from jax.experimental.pallas import tpu as pltpu

EPS = 1e-5
LANES = 128
MiB = 1024 * 1024


def _round_up(v, m):
    return (v + m - 1) // m * m


def _pick_row_tile(h, w):
    """Largest divisor of h whose flattened tile (th*w rows) stays ~<= 2048."""
    target = max(1, 2048 // max(w, 1))
    best = 1
    for th in range(1, h + 1):
        if h % th == 0 and th <= target:
            best = th
    return best


def _vmem_limit_bytes():
    # Per-generation VMEM budget: ~100 MiB on 128-MiB parts (v5e/v6e),
    # capacity-minus-16MiB headroom (=> ~48 MiB) on 64-MiB v7x.
    cap = 64 * MiB
    try:
        cap = int(getattr(pltpu.get_tpu_info(), "vmem_capacity_bytes", cap))
    except Exception:
        pass
    return int(min(100 * MiB, max(cap - 16 * MiB, 32 * MiB)))


def _cparams(n_axes):
    return pltpu.CompilerParams(
        dimension_semantics=("parallel",) * n_axes,
        vmem_limit_bytes=_vmem_limit_bytes(),
    )


def _sum_sumsq(y2d):
    # Per-channel partial statistics for one tile: (2, C) = [sum; sum(x^2)], f32.
    s = jnp.sum(y2d, axis=0, keepdims=True)
    ss = jnp.sum(y2d * y2d, axis=0, keepdims=True)
    return jnp.concatenate([s, ss], axis=0)


# ----------------------------- kernels ------------------------------------- #

def _conv1_kernel(x_ref, w1_ref, y1_ref, s1_ref):
    # conv1 (1x1): (TH*W, Cin_p) @ (Cin_p, Pp), bf16 MXU, f32 accumulation.
    _, TH, W, Cin = x_ref.shape
    Pp = w1_ref.shape[1]
    x2d = x_ref[...].reshape(TH * W, Cin)          # already bf16
    y = jnp.dot(x2d, w1_ref[...], preferred_element_type=jnp.float32)
    s1_ref[...] = _sum_sumsq(y).reshape(s1_ref.shape)
    y1_ref[...] = y.astype(jnp.bfloat16).reshape(1, TH, W, Pp)


def _conv2_kernel(y1_ref, w2_ref, sc1_ref, sh1_ref, y2_ref, s2_ref):
    # bn1 (folded scale/shift, f32) + relu, then the 3x3 conv as ONE matmul with
    # the 9 shifted taps stacked along the contraction dim (K = 9*Pp).
    # All tap construction happens in bf16 (half the VMEM temporaries).
    _, H, W, Pp = y1_ref.shape
    y = jnp.maximum(
        y1_ref[...].astype(jnp.float32).reshape(H, W, Pp)
        * sc1_ref[...].reshape(1, 1, Pp)
        + sh1_ref[...].reshape(1, 1, Pp), 0.0).astype(jnp.bfloat16)

    # W-direction taps: zero border built by value-level concat (bf16).
    zc = jnp.zeros((H, 1, Pp), jnp.bfloat16)
    t0 = jnp.concatenate([zc, y[:, :W - 1, :]], axis=1)      # tap at w-1
    t2 = jnp.concatenate([y[:, 1:, :], zc], axis=1)          # tap at w+1
    z = jnp.concatenate([t0, y, t2], axis=2)                 # (H, W, 3*Pp)

    # H-direction taps: whole-row shifts (tile-granular slices along major dim).
    zr = jnp.zeros((1, W, 3 * Pp), jnp.bfloat16)
    u0 = jnp.concatenate([zr, z[:H - 1]], axis=0)            # tap at h-1
    u2 = jnp.concatenate([z[1:], zr], axis=0)                # tap at h+1
    taps = jnp.concatenate([u0, z, u2], axis=2).reshape(H * W, 9 * Pp)

    yc = jnp.dot(taps, w2_ref[...], preferred_element_type=jnp.float32)
    s2_ref[...] = _sum_sumsq(yc).reshape(s2_ref.shape)
    y2_ref[...] = yc.astype(jnp.bfloat16).reshape(1, H, W, Pp)


def _conv3_kernel(y2_ref, w3_ref, sc2_ref, sh2_ref, y3_ref, s3_ref):
    # bn2 (folded) + relu + conv3 (1x1).
    _, TH, W, Pp = y2_ref.shape
    Cout = w3_ref.shape[1]
    y = jnp.maximum(
        y2_ref[...].astype(jnp.float32).reshape(TH * W, Pp) * sc2_ref[...]
        + sh2_ref[...], 0.0).astype(jnp.bfloat16)
    y3 = jnp.dot(y, w3_ref[...], preferred_element_type=jnp.float32)
    s3_ref[...] = _sum_sumsq(y3).reshape(s3_ref.shape)
    y3_ref[...] = y3.astype(jnp.bfloat16).reshape(1, TH, W, Cout)


def _residual_kernel(y3_ref, x_ref, sc3_ref, sh3_ref, o_ref):
    # bn3 (folded) + identity residual + relu (elementwise math in f32).
    _, TH, W, C = y3_ref.shape
    y = (y3_ref[...].astype(jnp.float32).reshape(TH * W, C) * sc3_ref[...]
         + sh3_ref[...])
    out = jnp.maximum(y + x_ref[...].astype(jnp.float32).reshape(TH * W, C), 0.0)
    o_ref[...] = out.reshape(1, TH, W, C)


# ----------------------------- wrapper -------------------------------------- #

def _stats_to_scale_shift(partials, gamma, beta, count):
    # Reduce per-tile partials -> folded per-channel affine (tiny JAX glue).
    c = partials.shape[-1]
    tot = jnp.sum(partials.reshape(-1, 2, c), axis=0)     # (2, C)
    mean = tot[0] / count
    var = jnp.maximum(tot[1] / count - mean * mean, 0.0)
    scale = gamma * lax.rsqrt(var + EPS)
    shift = beta - mean * scale
    return scale[None, :], shift[None, :]                  # (1, C) each


@jax.jit
def bottleneck_forward(x, w1, g1, b1, w2, g2, b2, w3, g3, b3):
    """Bottleneck forward (stride=1, downsample=None), NHWC layout.

    x  : (N, H, W, Cin) float32
    w1 : (P, Cin, 1, 1)  torch OIHW 1x1 conv weight
    w2 : (P, P, 3, 3)    torch OIHW 3x3 conv weight
    w3 : (4P, P, 1, 1)   torch OIHW 1x1 conv weight
    g*, b*: per-channel BN gamma/beta (training-mode batch statistics).
    """
    N, H, W, Cin = x.shape
    P = w1.shape[0]
    Cout = w3.shape[0]
    # TODO(synk): downsample branch / stride>1 not implemented (module defaults).
    assert Cin == Cout == 4 * P, "identity residual requires inplanes == 4*planes"

    Cin_p = _round_up(Cin, LANES)
    Pp = _round_up(P, LANES)
    Cout_p = _round_up(Cout, LANES)
    cnt = float(N * H * W)
    TH = _pick_row_tile(H, W)
    RT = H // TH

    # --- parameter prep (tiny): lane-pad channels, bf16 MXU weights ---
    w1p = jnp.zeros((Cin_p, Pp), jnp.float32).at[:Cin, :P].set(
        jnp.transpose(w1[:, :, 0, 0], (1, 0))).astype(jnp.bfloat16)
    w2_hwio = jnp.transpose(w2, (2, 3, 1, 0))                        # (3,3,P,P)
    w2p = jnp.zeros((3, 3, Pp, Pp), jnp.float32).at[:, :, :P, :P].set(
        w2_hwio).reshape(9 * Pp, Pp).astype(jnp.bfloat16)
    w3p = jnp.zeros((Pp, Cout_p), jnp.float32).at[:P, :Cout].set(
        jnp.transpose(w3[:, :, 0, 0], (1, 0))).astype(jnp.bfloat16)

    def pad_gb(g, b, cp):
        gp = jnp.ones((cp,), jnp.float32).at[:g.shape[0]].set(g)
        bp = jnp.zeros((cp,), jnp.float32).at[:b.shape[0]].set(b)
        return gp, bp

    g1p, b1p = pad_gb(g1, b1, Pp)
    g2p, b2p = pad_gb(g2, b2, Pp)
    g3p, b3p = pad_gb(g3, b3, Cout_p)

    xp = x if Cin_p == Cin else jnp.pad(x, ((0, 0),) * 3 + ((0, Cin_p - Cin),))
    xp = xp.astype(jnp.bfloat16)       # halve HBM reads of x (passes 1 and 4)

    # --- BlockSpec helpers ---
    def img_rows(c):                      # 2-D grid (n, row-tile)
        return pl.BlockSpec((1, TH, W, c), lambda n, r: (n, r, 0, 0))

    def img_full(c):                      # 1-D grid (n), whole image (3x3 halo)
        return pl.BlockSpec((1, H, W, c), lambda n: (n, 0, 0, 0))

    def const2(shape):
        z = (0,) * len(shape)
        return pl.BlockSpec(shape, lambda n, r, _z=z: _z)

    def const1(shape):
        z = (0,) * len(shape)
        return pl.BlockSpec(shape, lambda n, _z=z: _z)

    def stat2(c):
        return pl.BlockSpec((1, 1, 2, c), lambda n, r: (n, r, 0, 0))

    def stat1(c):
        return pl.BlockSpec((1, 2, c), lambda n: (n, 0, 0))

    # Pass 1: conv1 + bn1 partial stats (row-tiled, both axes parallel)
    y1, s1 = pl.pallas_call(
        _conv1_kernel,
        grid=(N, RT),
        in_specs=[img_rows(Cin_p), const2((Cin_p, Pp))],
        out_specs=(img_rows(Pp), stat2(Pp)),
        out_shape=(jax.ShapeDtypeStruct((N, H, W, Pp), jnp.bfloat16),
                   jax.ShapeDtypeStruct((N, RT, 2, Pp), jnp.float32)),
        compiler_params=_cparams(2),
    )(xp, w1p)
    sc1, sh1 = _stats_to_scale_shift(s1, g1p, b1p, cnt)

    # Pass 2: bn1 + relu + fused 9-tap conv2 + bn2 partial stats (whole image)
    y2, s2 = pl.pallas_call(
        _conv2_kernel,
        grid=(N,),
        in_specs=[img_full(Pp), const1((9 * Pp, Pp)),
                  const1((1, Pp)), const1((1, Pp))],
        out_specs=(img_full(Pp), stat1(Pp)),
        out_shape=(jax.ShapeDtypeStruct((N, H, W, Pp), jnp.bfloat16),
                   jax.ShapeDtypeStruct((N, 2, Pp), jnp.float32)),
        compiler_params=_cparams(1),
    )(y1, w2p, sc1, sh1)
    sc2, sh2 = _stats_to_scale_shift(s2, g2p, b2p, cnt)

    # Pass 3: bn2 + relu + conv3 + bn3 partial stats (row-tiled)
    y3, s3 = pl.pallas_call(
        _conv3_kernel,
        grid=(N, RT),
        in_specs=[img_rows(Pp), const2((Pp, Cout_p)),
                  const2((1, Pp)), const2((1, Pp))],
        out_specs=(img_rows(Cout_p), stat2(Cout_p)),
        out_shape=(jax.ShapeDtypeStruct((N, H, W, Cout_p), jnp.bfloat16),
                   jax.ShapeDtypeStruct((N, RT, 2, Cout_p), jnp.float32)),
        compiler_params=_cparams(2),
    )(y2, w3p, sc2, sh2)
    sc3, sh3 = _stats_to_scale_shift(s3, g3p, b3p, cnt)

    # Pass 4: bn3 + residual add + relu (row-tiled, pure bandwidth)
    out_p = pl.pallas_call(
        _residual_kernel,
        grid=(N, RT),
        in_specs=[img_rows(Cout_p), img_rows(Cin_p),
                  const2((1, Cout_p)), const2((1, Cout_p))],
        out_specs=img_rows(Cout_p),
        out_shape=jax.ShapeDtypeStruct((N, H, W, Cout_p), jnp.float32),
        compiler_params=_cparams(2),
    )(y3, xp, sc3, sh3)

    return out_p if Cout_p == Cout else out_p[..., :Cout]


# ---------------- pure-JAX f32 reference (sanity check) ---------------------- #

def _bn_ref(y, gamma, beta):
    mean = jnp.mean(y, axis=(0, 1, 2), keepdims=True)
    var = jnp.mean((y - mean) ** 2, axis=(0, 1, 2), keepdims=True)
    return (y - mean) * lax.rsqrt(var + EPS) * gamma.reshape(1, 1, 1, -1) \
        + beta.reshape(1, 1, 1, -1)


def reference_forward(x, w1, g1, b1, w2, g2, b2, w3, g3, b3):
    def conv(y, w_oihw, padding):
        return lax.conv_general_dilated(
            y, jnp.transpose(w_oihw, (2, 3, 1, 0)), (1, 1), padding,
            dimension_numbers=('NHWC', 'HWIO', 'NHWC'))
    y = jax.nn.relu(_bn_ref(conv(x, w1, 'VALID'), g1, b1))
    y = jax.nn.relu(_bn_ref(conv(y, w2, 'SAME'), g2, b2))
    y = _bn_ref(conv(y, w3, 'VALID'), g3, b3)
    return jax.nn.relu(y + x)


if __name__ == "__main__":
    # Small shapes: inplanes=32, planes=8 (expansion 4 => out channels 32),
    # batch=2, spatial 8x8.  Input (NHWC): (2, 8, 8, 32).
    N, H, W = 2, 8, 8
    planes = 8
    inplanes = planes * 4   # required for identity add with downsample=None

    key = jax.random.PRNGKey(0)
    ks = jax.random.split(key, 10)

    x = jax.random.normal(ks[0], (N, H, W, inplanes), jnp.float32)

    # torch-style OIHW conv weights and BN affine params.
    w1 = 0.1 * jax.random.normal(ks[1], (planes, inplanes, 1, 1), jnp.float32)
    w2 = 0.1 * jax.random.normal(ks[2], (planes, planes, 3, 3), jnp.float32)
    w3 = 0.1 * jax.random.normal(ks[3], (planes * 4, planes, 1, 1), jnp.float32)

    g1 = 1.0 + 0.1 * jax.random.normal(ks[4], (planes,), jnp.float32)
    b1 = 0.1 * jax.random.normal(ks[5], (planes,), jnp.float32)
    g2 = 1.0 + 0.1 * jax.random.normal(ks[6], (planes,), jnp.float32)
    b2 = 0.1 * jax.random.normal(ks[7], (planes,), jnp.float32)
    g3 = 1.0 + 0.1 * jax.random.normal(ks[8], (planes * 4,), jnp.float32)
    b3 = 0.1 * jax.random.normal(ks[9], (planes * 4,), jnp.float32)

    out = bottleneck_forward(x, w1, g1, b1, w2, g2, b2, w3, g3, b3)
    out = jax.block_until_ready(out)

    ref = jax.block_until_ready(
        reference_forward(x, w1, g1, b1, w2, g2, b2, w3, g3, b3))

    assert out.shape == (N, H, W, inplanes), out.shape
    max_err = float(jnp.max(jnp.abs(out - ref)))
    # bf16 MXU operands + bf16 inter-pass activation storage vs f32 reference
    # -> loosened tolerance.
    assert jnp.allclose(out, ref, atol=7.5e-2, rtol=7.5e-2), max_err

    print("KERNEL_OK")
</pallas_src>

<mosaic_0001>
module attributes {stable_mosaic.version = 11 : i64} {
  func.func @_conv1_kernel(%arg0: i32, %arg1: i32, %arg2: memref<1x8x8x128xbf16, #tpu.memory_space<vmem>>, %arg3: memref<128x128xbf16, #tpu.memory_space<vmem>>, %arg4: memref<1x8x8x128xbf16, #tpu.memory_space<vmem>>, %arg5: memref<1x1x2x128xf32, #tpu.memory_space<vmem>>) attributes {dimension_semantics = [#tpu.dimension_semantics<parallel>, #tpu.dimension_semantics<parallel>], iteration_bounds = array<i64: 2, 1>, scalar_prefetch = 0 : i64, scratch_operands = 0 : i64, tpu.core_type = #tpu.core_type<tc>, window_params = [{transform_indices = @transform_0, window_bounds = array<i64: 1, 8, 8, 128>}, {pipeline_mode = #tpu.pipeline_mode<synchronous>, transform_indices = @transform_1, window_bounds = array<i64: 128, 128>}, {transform_indices = @transform_2, window_bounds = array<i64: 1, 8, 8, 128>}, {transform_indices = @transform_3, window_bounds = array<i64: 1, 1, 2, 128>}]} {
    %c0 = arith.constant 0 : index
    %c0_0 = arith.constant 0 : index
    %c0_1 = arith.constant 0 : index
    %c0_2 = arith.constant 0 : index
    %0 = vector.load %arg2[%c0, %c0_0, %c0_1, %c0_2] : memref<1x8x8x128xbf16, #tpu.memory_space<vmem>>, vector<1x8x8x128xbf16>
    %1 = vector.shape_cast %0 : vector<1x8x8x128xbf16> to vector<64x128xbf16>
    %c0_3 = arith.constant 0 : index
    %c0_4 = arith.constant 0 : index
    %2 = vector.load %arg3[%c0_3, %c0_4] : memref<128x128xbf16, #tpu.memory_space<vmem>>, vector<128x128xbf16>
    %cst = arith.constant dense<0.000000e+00> : vector<64x128xf32>
    %3 = tpu.matmul %1, %2, %cst {dimension_numbers = #tpu.dot_dimension_numbers<[1], [0], [0], [1], [0, 0, 1, 1], [], []>} : vector<64x128xbf16>, vector<128x128xbf16>, vector<64x128xf32> -> vector<64x128xf32>
    %cst_5 = arith.constant dense<0.000000e+00> : vector<128xf32>
    %4 = vector.multi_reduction <add>, %3, %cst_5 [0] : vector<64x128xf32> to vector<128xf32>
    %5 = vector.shape_cast %4 : vector<128xf32> to vector<1x128xf32>
    %6 = arith.mulf %3, %3 : vector<64x128xf32>
    %cst_6 = arith.constant dense<0.000000e+00> : vector<128xf32>
    %7 = vector.multi_reduction <add>, %6, %cst_6 [0] : vector<64x128xf32> to vector<128xf32>
    %8 = vector.shape_cast %7 : vector<128xf32> to vector<1x128xf32>
    %9 = tpu.concatenate %5, %8 in 0 : vector<1x128xf32>, vector<1x128xf32> -> vector<2x128xf32>
    %10 = vector.shape_cast %9 : vector<2x128xf32> to vector<1x1x2x128xf32>
    %c0_7 = arith.constant 0 : index
    %c0_8 = arith.constant 0 : index
    %c0_9 = arith.constant 0 : index
    %c0_10 = arith.constant 0 : index
    %11 = vector.load %arg5[%c0_7, %c0_8, %c0_9, %c0_10] : memref<1x1x2x128xf32, #tpu.memory_space<vmem>>, vector<1x1x2x128xf32>
    tpu.vector_store %arg5[%c0_7, %c0_8, %c0_9, %c0_10], %10 {strides = array<i32>} : memref<1x1x2x128xf32, #tpu.memory_space<vmem>>, vector<1x1x2x128xf32>,
    %12 = arith.truncf %3 : vector<64x128xf32> to vector<64x128xbf16>
    %13 = vector.shape_cast %12 : vector<64x128xbf16> to vector<1x8x8x128xbf16>
    %c0_11 = arith.constant 0 : index
    %c0_12 = arith.constant 0 : index
    %c0_13 = arith.constant 0 : index
    %c0_14 = arith.constant 0 : index
    %14 = vector.load %arg4[%c0_11, %c0_12, %c0_13, %c0_14] : memref<1x8x8x128xbf16, #tpu.memory_space<vmem>>, vector<1x8x8x128xbf16>
    tpu.vector_store %arg4[%c0_11, %c0_12, %c0_13, %c0_14], %13 {strides = array<i32>} : memref<1x8x8x128xbf16, #tpu.memory_space<vmem>>, vector<1x8x8x128xbf16>,
    return
  }
  func.func @transform_0(%arg0: i32, %arg1: i32) -> (i32, i32, i32, i32) {
    %c0_i32 = arith.constant 0 : i32
    %c0_i32_0 = arith.constant 0 : i32
    %c0_i32_1 = arith.constant 0 : i32
    return %arg0, %arg1, %c0_i32, %c0_i32_0 : i32, i32, i32, i32
  }
  func.func @transform_1(%arg0: i32, %arg1: i32) -> (i32, i32) {
    %c0_i32 = arith.constant 0 : i32
    %c0_i32_0 = arith.constant 0 : i32
    %c0_i32_1 = arith.constant 0 : i32
    return %c0_i32, %c0_i32_0 : i32, i32
  }
  func.func @transform_2(%arg0: i32, %arg1: i32) -> (i32, i32, i32, i32) {
    %c0_i32 = arith.constant 0 : i32
    %c0_i32_0 = arith.constant 0 : i32
    %c0_i32_1 = arith.constant 0 : i32
    return %arg0, %arg1, %c0_i32, %c0_i32_0 : i32, i32, i32, i32
  }
  func.func @transform_3(%arg0: i32, %arg1: i32) -> (i32, i32, i32, i32) {
    %c0_i32 = arith.constant 0 : i32
    %c0_i32_0 = arith.constant 0 : i32
    %c0_i32_1 = arith.constant 0 : i32
    return %arg0, %arg1, %c0_i32, %c0_i32_0 : i32, i32, i32, i32
  }
}

module attributes {stable_mosaic.version = 11 : i64} {
  func.func @_conv2_kernel(%arg0: i32, %arg1: memref<1x8x8x128xbf16, #tpu.memory_space<vmem>>, %arg2: memref<1152x128xbf16, #tpu.memory_space<vmem>>, %arg3: memref<1x128xf32, #tpu.memory_space<vmem>>, %arg4: memref<1x128xf32, #tpu.memory_space<vmem>>, %arg5: memref<1x8x8x128xbf16, #tpu.memory_space<vmem>>, %arg6: memref<1x2x128xf32, #tpu.memory_space<vmem>>) attributes {dimension_semantics = [#tpu.dimension_semantics<parallel>], iteration_bounds = array<i64: 2>, scalar_prefetch = 0 : i64, scratch_operands = 0 : i64, tpu.core_type = #tpu.core_type<tc>, window_params = [{transform_indices = @transform_0, window_bounds = array<i64: 1, 8, 8, 128>}, {pipeline_mode = #tpu.pipeline_mode<synchronous>, transform_indices = @transform_1, window_bounds = array<i64: 1152, 128>}, {pipeline_mode = #tpu.pipeline_mode<synchronous>, transform_indices = @transform_2, window_bounds = array<i64: 1, 128>}, {pipeline_mode = #tpu.pipeline_mode<synchronous>, transform_indices = @transform_3, window_bounds = array<i64: 1, 128>}, {transform_indices = @transform_4, window_bounds = array<i64: 1, 8, 8, 128>}, {transform_indices = @transform_5, window_bounds = array<i64: 1, 2, 128>}]} {
    %c0 = arith.constant 0 : index
    %c0_0 = arith.constant 0 : index
    %c0_1 = arith.constant 0 : index
    %c0_2 = arith.constant 0 : index
    %0 = vector.load %arg1[%c0, %c0_0, %c0_1, %c0_2] : memref<1x8x8x128xbf16, #tpu.memory_space<vmem>>, vector<1x8x8x128xbf16>
    %1 = arith.extf %0 : vector<1x8x8x128xbf16> to vector<1x8x8x128xf32>
    %2 = vector.shape_cast %1 : vector<1x8x8x128xf32> to vector<8x8x128xf32>
    %c0_3 = arith.constant 0 : index
    %c0_4 = arith.constant 0 : index
    %3 = vector.load %arg3[%c0_3, %c0_4] : memref<1x128xf32, #tpu.memory_space<vmem>>, vector<1x128xf32>
    %4 = vector.shape_cast %3 : vector<1x128xf32> to vector<1x1x128xf32>
    %5 = vector.broadcast %4 : vector<1x1x128xf32> to vector<8x8x128xf32>
    %6 = arith.mulf %2, %5 : vector<8x8x128xf32>
    %c0_5 = arith.constant 0 : index
    %c0_6 = arith.constant 0 : index
    %7 = vector.load %arg4[%c0_5, %c0_6] : memref<1x128xf32, #tpu.memory_space<vmem>>, vector<1x128xf32>
    %8 = vector.shape_cast %7 : vector<1x128xf32> to vector<1x1x128xf32>
    %9 = vector.broadcast %8 : vector<1x1x128xf32> to vector<8x8x128xf32>
    %10 = arith.addf %6, %9 : vector<8x8x128xf32>
    %cst = arith.constant 0.000000e+00 : f32
    %11 = vector.broadcast %cst : f32 to vector<8x8x128xf32>
    %12 = arith.maximumf %10, %11 : vector<8x8x128xf32>
    %13 = arith.truncf %12 : vector<8x8x128xf32> to vector<8x8x128xbf16>
    %cst_7 = arith.constant 0.000000e+00 : bf16
    %14 = vector.broadcast %cst_7 : bf16 to vector<8x1x128xbf16>
    %15 = vector.extract_strided_slice %13 {offsets = [0, 0, 0], sizes = [8, 7, 128], strides = [1, 1, 1]} : vector<8x8x128xbf16> to vector<8x7x128xbf16>
    %16 = tpu.concatenate %14, %15 in 1 : vector<8x1x128xbf16>, vector<8x7x128xbf16> -> vector<8x8x128xbf16>
    %17 = vector.extract_strided_slice %13 {offsets = [0, 1, 0], sizes = [8, 7, 128], strides = [1, 1, 1]} : vector<8x8x128xbf16> to vector<8x7x128xbf16>
    %18 = tpu.concatenate %17, %14 in 1 : vector<8x7x128xbf16>, vector<8x1x128xbf16> -> vector<8x8x128xbf16>
    %19 = tpu.concatenate %16, %13, %18 in 2 : vector<8x8x128xbf16>, vector<8x8x128xbf16>, vector<8x8x128xbf16> -> vector<8x8x384xbf16>
    %cst_8 = arith.constant 0.000000e+00 : bf16
    %20 = vector.broadcast %cst_8 : bf16 to vector<1x8x384xbf16>
    %21 = vector.extract_strided_slice %19 {offsets = [0, 0, 0], sizes = [7, 8, 384], strides = [1, 1, 1]} : vector<8x8x384xbf16> to vector<7x8x384xbf16>
    %22 = tpu.concatenate %20, %21 in 0 : vector<1x8x384xbf16>, vector<7x8x384xbf16> -> vector<8x8x384xbf16>
    %23 = vector.extract_strided_slice %19 {offsets = [1, 0, 0], sizes = [7, 8, 384], strides = [1, 1, 1]} : vector<8x8x384xbf16> to vector<7x8x384xbf16>
    %24 = tpu.concatenate %23, %20 in 0 : vector<7x8x384xbf16>, vector<1x8x384xbf16> -> vector<8x8x384xbf16>
    %25 = tpu.concatenate %22, %19, %24 in 2 : vector<8x8x384xbf16>, vector<8x8x384xbf16>, vector<8x8x384xbf16> -> vector<8x8x1152xbf16>
    %26 = vector.shape_cast %25 : vector<8x8x1152xbf16> to vector<64x1152xbf16>
    %c0_9 = arith.constant 0 : index
    %c0_10 = arith.constant 0 : index
    %27 = vector.load %arg2[%c0_9, %c0_10] : memref<1152x128xbf16, #tpu.memory_space<vmem>>, vector<1152x128xbf16>
    %cst_11 = arith.constant dense<0.000000e+00> : vector<64x128xf32>
    %28 = tpu.matmul %26, %27, %cst_11 {dimension_numbers = #tpu.dot_dimension_numbers<[1], [0], [0], [1], [0, 0, 1, 1], [], []>} : vector<64x1152xbf16>, vector<1152x128xbf16>, vector<64x128xf32> -> vector<64x128xf32>
    %cst_12 = arith.constant dense<0.000000e+00> : vector<128xf32>
    %29 = vector.multi_reduction <add>, %28, %cst_12 [0] : vector<64x128xf32> to vector<128xf32>
    %30 = vector.shape_cast %29 : vector<128xf32> to vector<1x128xf32>
    %31 = arith.mulf %28, %28 : vector<64x128xf32>
    %cst_13 = arith.constant dense<0.000000e+00> : vector<128xf32>
    %32 = vector.multi_reduction <add>, %31, %cst_13 [0] : vector<64x128xf32> to vector<128xf32>
    %33 = vector.shape_cast %32 : vector<128xf32> to vector<1x128xf32>
    %34 = tpu.concatenate %30, %33 in 0 : vector<1x128xf32>, vector<1x128xf32> -> vector<2x128xf32>
    %35 = vector.shape_cast %34 : vector<2x128xf32> to vector<1x2x128xf32>
    %c0_14 = arith.constant 0 : index
    %c0_15 = arith.constant 0 : index
    %c0_16 = arith.constant 0 : index
    %36 = vector.load %arg6[%c0_14, %c0_15, %c0_16] : memref<1x2x128xf32, #tpu.memory_space<vmem>>, vector<1x2x128xf32>
    tpu.vector_store %arg6[%c0_14, %c0_15, %c0_16], %35 {strides = array<i32>} : memref<1x2x128xf32, #tpu.memory_space<vmem>>, vector<1x2x128xf32>,
    %37 = arith.truncf %28 : vector<64x128xf32> to vector<64x128xbf16>
    %38 = vector.shape_cast %37 : vector<64x128xbf16> to vector<1x8x8x128xbf16>
    %c0_17 = arith.constant 0 : index
    %c0_18 = arith.constant 0 : index
    %c0_19 = arith.constant 0 : index
    %c0_20 = arith.constant 0 : index
    %39 = vector.load %arg5[%c0_17, %c0_18, %c0_19, %c0_20] : memref<1x8x8x128xbf16, #tpu.memory_space<vmem>>, vector<1x8x8x128xbf16>
    tpu.vector_store %arg5[%c0_17, %c0_18, %c0_19, %c0_20], %38 {strides = array<i32>} : memref<1x8x8x128xbf16, #tpu.memory_space<vmem>>, vector<1x8x8x128xbf16>,
    return
  }
  func.func @transform_0(%arg0: i32) -> (i32, i32, i32, i32) {
    %c0_i32 = arith.constant 0 : i32
    %c0_i32_0 = arith.constant 0 : i32
    %c0_i32_1 = arith.constant 0 : i32
    %c0_i32_2 = arith.constant 0 : i32
    return %arg0, %c0_i32, %c0_i32_0, %c0_i32_1 : i32, i32, i32, i32
  }
  func.func @transform_1(%arg0: i32) -> (i32, i32) {
    %c0_i32 = arith.constant 0 : i32
    %c0_i32_0 = arith.constant 0 : i32
    %c0_i32_1 = arith.constant 0 : i32
    return %c0_i32, %c0_i32_0 : i32, i32
  }
  func.func @transform_2(%arg0: i32) -> (i32, i32) {
    %c0_i32 = arith.constant 0 : i32
    %c0_i32_0 = arith.constant 0 : i32
    %c0_i32_1 = arith.constant 0 : i32
    return %c0_i32, %c0_i32_0 : i32, i32
  }
  func.func @transform_3(%arg0: i32) -> (i32, i32) {
    %c0_i32 = arith.constant 0 : i32
    %c0_i32_0 = arith.constant 0 : i32
    %c0_i32_1 = arith.constant 0 : i32
    return %c0_i32, %c0_i32_0 : i32, i32
  }
  func.func @transform_4(%arg0: i32) -> (i32, i32, i32, i32) {
    %c0_i32 = arith.constant 0 : i32
    %c0_i32_0 = arith.constant 0 : i32
    %c0_i32_1 = arith.constant 0 : i32
    %c0_i32_2 = arith.constant 0 : i32
    return %arg0, %c0_i32, %c0_i32_0, %c0_i32_1 : i32, i32, i32, i32
  }
  func.func @transform_5(%arg0: i32) -> (i32, i32, i32) {
    %c0_i32 = arith.constant 0 : i32
    %c0_i32_0 = arith.constant 0 : i32
    %c0_i32_1 = arith.constant 0 : i32
    return %arg0, %c0_i32, %c0_i32_0 : i32, i32, i32
  }
}

module attributes {stable_mosaic.version = 11 : i64} {
  func.func @_conv3_kernel(%arg0: i32, %arg1: i32, %arg2: memref<1x8x8x128xbf16, #tpu.memory_space<vmem>>, %arg3: memref<128x128xbf16, #tpu.memory_space<vmem>>, %arg4: memref<1x128xf32, #tpu.memory_space<vmem>>, %arg5: memref<1x128xf32, #tpu.memory_space<vmem>>, %arg6: memref<1x8x8x128xbf16, #tpu.memory_space<vmem>>, %arg7: memref<1x1x2x128xf32, #tpu.memory_space<vmem>>) attributes {dimension_semantics = [#tpu.dimension_semantics<parallel>, #tpu.dimension_semantics<parallel>], iteration_bounds = array<i64: 2, 1>, scalar_prefetch = 0 : i64, scratch_operands = 0 : i64, tpu.core_type = #tpu.core_type<tc>, window_params = [{transform_indices = @transform_0, window_bounds = array<i64: 1, 8, 8, 128>}, {pipeline_mode = #tpu.pipeline_mode<synchronous>, transform_indices = @transform_1, window_bounds = array<i64: 128, 128>}, {pipeline_mode = #tpu.pipeline_mode<synchronous>, transform_indices = @transform_2, window_bounds = array<i64: 1, 128>}, {pipeline_mode = #tpu.pipeline_mode<synchronous>, transform_indices = @transform_3, window_bounds = array<i64: 1, 128>}, {transform_indices = @transform_4, window_bounds = array<i64: 1, 8, 8, 128>}, {transform_indices = @transform_5, window_bounds = array<i64: 1, 1, 2, 128>}]} {
    %c0 = arith.constant 0 : index
    %c0_0 = arith.constant 0 : index
    %c0_1 = arith.constant 0 : index
    %c0_2 = arith.constant 0 : index
    %0 = vector.load %arg2[%c0, %c0_0, %c0_1, %c0_2] : memref<1x8x8x128xbf16, #tpu.memory_space<vmem>>, vector<1x8x8x128xbf16>
    %1 = arith.extf %0 : vector<1x8x8x128xbf16> to vector<1x8x8x128xf32>
    %2 = vector.shape_cast %1 : vector<1x8x8x128xf32> to vector<64x128xf32>
    %c0_3 = arith.constant 0 : index
    %c0_4 = arith.constant 0 : index
    %3 = vector.load %arg4[%c0_3, %c0_4] : memref<1x128xf32, #tpu.memory_space<vmem>>, vector<1x128xf32>
    %4 = vector.broadcast %3 : vector<1x128xf32> to vector<64x128xf32>
    %5 = arith.mulf %2, %4 : vector<64x128xf32>
    %c0_5 = arith.constant 0 : index
    %c0_6 = arith.constant 0 : index
    %6 = vector.load %arg5[%c0_5, %c0_6] : memref<1x128xf32, #tpu.memory_space<vmem>>, vector<1x128xf32>
    %7 = vector.broadcast %6 : vector<1x128xf32> to vector<64x128xf32>
    %8 = arith.addf %5, %7 : vector<64x128xf32>
    %cst = arith.constant 0.000000e+00 : f32
    %9 = vector.broadcast %cst : f32 to vector<64x128xf32>
    %10 = arith.maximumf %8, %9 : vector<64x128xf32>
    %11 = arith.truncf %10 : vector<64x128xf32> to vector<64x128xbf16>
    %c0_7 = arith.constant 0 : index
    %c0_8 = arith.constant 0 : index
    %12 = vector.load %arg3[%c0_7, %c0_8] : memref<128x128xbf16, #tpu.memory_space<vmem>>, vector<128x128xbf16>
    %cst_9 = arith.constant dense<0.000000e+00> : vector<64x128xf32>
    %13 = tpu.matmul %11, %12, %cst_9 {dimension_numbers = #tpu.dot_dimension_numbers<[1], [0], [0], [1], [0, 0, 1, 1], [], []>} : vector<64x128xbf16>, vector<128x128xbf16>, vector<64x128xf32> -> vector<64x128xf32>
    %cst_10 = arith.constant dense<0.000000e+00> : vector<128xf32>
    %14 = vector.multi_reduction <add>, %13, %cst_10 [0] : vector<64x128xf32> to vector<128xf32>
    %15 = vector.shape_cast %14 : vector<128xf32> to vector<1x128xf32>
    %16 = arith.mulf %13, %13 : vector<64x128xf32>
    %cst_11 = arith.constant dense<0.000000e+00> : vector<128xf32>
    %17 = vector.multi_reduction <add>, %16, %cst_11 [0] : vector<64x128xf32> to vector<128xf32>
    %18 = vector.shape_cast %17 : vector<128xf32> to vector<1x128xf32>
    %19 = tpu.concatenate %15, %18 in 0 : vector<1x128xf32>, vector<1x128xf32> -> vector<2x128xf32>
    %20 = vector.shape_cast %19 : vector<2x128xf32> to vector<1x1x2x128xf32>
    %c0_12 = arith.constant 0 : index
    %c0_13 = arith.constant 0 : index
    %c0_14 = arith.constant 0 : index
    %c0_15 = arith.constant 0 : index
    %21 = vector.load %arg7[%c0_12, %c0_13, %c0_14, %c0_15] : memref<1x1x2x128xf32, #tpu.memory_space<vmem>>, vector<1x1x2x128xf32>
    tpu.vector_store %arg7[%c0_12, %c0_13, %c0_14, %c0_15], %20 {strides = array<i32>} : memref<1x1x2x128xf32, #tpu.memory_space<vmem>>, vector<1x1x2x128xf32>,
    %22 = arith.truncf %13 : vector<64x128xf32> to vector<64x128xbf16>
    %23 = vector.shape_cast %22 : vector<64x128xbf16> to vector<1x8x8x128xbf16>
    %c0_16 = arith.constant 0 : index
    %c0_17 = arith.constant 0 : index
    %c0_18 = arith.constant 0 : index
    %c0_19 = arith.constant 0 : index
    %24 = vector.load %arg6[%c0_16, %c0_17, %c0_18, %c0_19] : memref<1x8x8x128xbf16, #tpu.memory_space<vmem>>, vector<1x8x8x128xbf16>
    tpu.vector_store %arg6[%c0_16, %c0_17, %c0_18, %c0_19], %23 {strides = array<i32>} : memref<1x8x8x128xbf16, #tpu.memory_space<vmem>>, vector<1x8x8x128xbf16>,
    return
  }
  func.func @transform_0(%arg0: i32, %arg1: i32) -> (i32, i32, i32, i32) {
    %c0_i32 = arith.constant 0 : i32
    %c0_i32_0 = arith.constant 0 : i32
    %c0_i32_1 = arith.constant 0 : i32
    return %arg0, %arg1, %c0_i32, %c0_i32_0 : i32, i32, i32, i32
  }
  func.func @transform_1(%arg0: i32, %arg1: i32) -> (i32, i32) {
    %c0_i32 = arith.constant 0 : i32
    %c0_i32_0 = arith.constant 0 : i32
    %c0_i32_1 = arith.constant 0 : i32
    return %c0_i32, %c0_i32_0 : i32, i32
  }
  func.func @transform_2(%arg0: i32, %arg1: i32) -> (i32, i32) {
    %c0_i32 = arith.constant 0 : i32
    %c0_i32_0 = arith.constant 0 : i32
    %c0_i32_1 = arith.constant 0 : i32
    return %c0_i32, %c0_i32_0 : i32, i32
  }
  func.func @transform_3(%arg0: i32, %arg1: i32) -> (i32, i32) {
    %c0_i32 = arith.constant 0 : i32
    %c0_i32_0 = arith.constant 0 : i32
    %c0_i32_1 = arith.constant 0 : i32
    return %c0_i32, %c0_i32_0 : i32, i32
  }
  func.func @transform_4(%arg0: i32, %arg1: i32) -> (i32, i32, i32, i32) {
    %c0_i32 = arith.constant 0 : i32
    %c0_i32_0 = arith.constant 0 : i32
    %c0_i32_1 = arith.constant 0 : i32
    return %arg0, %arg1, %c0_i32, %c0_i32_0 : i32, i32, i32, i32
  }
  func.func @transform_5(%arg0: i32, %arg1: i32) -> (i32, i32, i32, i32) {
    %c0_i32 = arith.constant 0 : i32
    %c0_i32_0 = arith.constant 0 : i32
    %c0_i32_1 = arith.constant 0 : i32
    return %arg0, %arg1, %c0_i32, %c0_i32_0 : i32, i32, i32, i32
  }
}

module attributes {stable_mosaic.version = 11 : i64} {
  func.func @_residual_kernel(%arg0: i32, %arg1: i32, %arg2: memref<1x8x8x128xbf16, #tpu.memory_space<vmem>>, %arg3: memref<1x8x8x128xbf16, #tpu.memory_space<vmem>>, %arg4: memref<1x128xf32, #tpu.memory_space<vmem>>, %arg5: memref<1x128xf32, #tpu.memory_space<vmem>>, %arg6: memref<1x8x8x128xf32, #tpu.memory_space<vmem>>) attributes {dimension_semantics = [#tpu.dimension_semantics<parallel>, #tpu.dimension_semantics<parallel>], iteration_bounds = array<i64: 2, 1>, scalar_prefetch = 0 : i64, scratch_operands = 0 : i64, tpu.core_type = #tpu.core_type<tc>, window_params = [{transform_indices = @transform_0, window_bounds = array<i64: 1, 8, 8, 128>}, {transform_indices = @transform_1, window_bounds = array<i64: 1, 8, 8, 128>}, {pipeline_mode = #tpu.pipeline_mode<synchronous>, transform_indices = @transform_2, window_bounds = array<i64: 1, 128>}, {pipeline_mode = #tpu.pipeline_mode<synchronous>, transform_indices = @transform_3, window_bounds = array<i64: 1, 128>}, {transform_indices = @transform_4, window_bounds = array<i64: 1, 8, 8, 128>}]} {
    %c0 = arith.constant 0 : index
    %c0_0 = arith.constant 0 : index
    %c0_1 = arith.constant 0 : index
    %c0_2 = arith.constant 0 : index
    %0 = vector.load %arg2[%c0, %c0_0, %c0_1, %c0_2] : memref<1x8x8x128xbf16, #tpu.memory_space<vmem>>, vector<1x8x8x128xbf16>
    %1 = arith.extf %0 : vector<1x8x8x128xbf16> to vector<1x8x8x128xf32>
    %2 = vector.shape_cast %1 : vector<1x8x8x128xf32> to vector<64x128xf32>
    %c0_3 = arith.constant 0 : index
    %c0_4 = arith.constant 0 : index
    %3 = vector.load %arg4[%c0_3, %c0_4] : memref<1x128xf32, #tpu.memory_space<vmem>>, vector<1x128xf32>
    %4 = vector.broadcast %3 : vector<1x128xf32> to vector<64x128xf32>
    %5 = arith.mulf %2, %4 : vector<64x128xf32>
    %c0_5 = arith.constant 0 : index
    %c0_6 = arith.constant 0 : index
    %6 = vector.load %arg5[%c0_5, %c0_6] : memref<1x128xf32, #tpu.memory_space<vmem>>, vector<1x128xf32>
    %7 = vector.broadcast %6 : vector<1x128xf32> to vector<64x128xf32>
    %8 = arith.addf %5, %7 : vector<64x128xf32>
    %c0_7 = arith.constant 0 : index
    %c0_8 = arith.constant 0 : index
    %c0_9 = arith.constant 0 : index
    %c0_10 = arith.constant 0 : index
    %9 = vector.load %arg3[%c0_7, %c0_8, %c0_9, %c0_10] : memref<1x8x8x128xbf16, #tpu.memory_space<vmem>>, vector<1x8x8x128xbf16>
    %10 = arith.extf %9 : vector<1x8x8x128xbf16> to vector<1x8x8x128xf32>
    %11 = vector.shape_cast %10 : vector<1x8x8x128xf32> to vector<64x128xf32>
    %12 = arith.addf %8, %11 : vector<64x128xf32>
    %cst = arith.constant 0.000000e+00 : f32
    %13 = vector.broadcast %cst : f32 to vector<64x128xf32>
    %14 = arith.maximumf %12, %13 : vector<64x128xf32>
    %15 = vector.shape_cast %14 : vector<64x128xf32> to vector<1x8x8x128xf32>
    %c0_11 = arith.constant 0 : index
    %c0_12 = arith.constant 0 : index
    %c0_13 = arith.constant 0 : index
    %c0_14 = arith.constant 0 : index
    %16 = vector.load %arg6[%c0_11, %c0_12, %c0_13, %c0_14] : memref<1x8x8x128xf32, #tpu.memory_space<vmem>>, vector<1x8x8x128xf32>
    tpu.vector_store %arg6[%c0_11, %c0_12, %c0_13, %c0_14], %15 {strides = array<i32>} : memref<1x8x8x128xf32, #tpu.memory_space<vmem>>, vector<1x8x8x128xf32>,
    return
  }
  func.func @transform_0(%arg0: i32, %arg1: i32) -> (i32, i32, i32, i32) {
    %c0_i32 = arith.constant 0 : i32
    %c0_i32_0 = arith.constant 0 : i32
    %c0_i32_1 = arith.constant 0 : i32
    return %arg0, %arg1, %c0_i32, %c0_i32_0 : i32, i32, i32, i32
  }
  func.func @transform_1(%arg0: i32, %arg1: i32) -> (i32, i32, i32, i32) {
    %c0_i32 = arith.constant 0 : i32
    %c0_i32_0 = arith.constant 0 : i32
    %c0_i32_1 = arith.constant 0 : i32
    return %arg0, %arg1, %c0_i32, %c0_i32_0 : i32, i32, i32, i32
  }
  func.func @transform_2(%arg0: i32, %arg1: i32) -> (i32, i32) {
    %c0_i32 = arith.constant 0 : i32
    %c0_i32_0 = arith.constant 0 : i32
    %c0_i32_1 = arith.constant 0 : i32
    return %c0_i32, %c0_i32_0 : i32, i32
  }
  func.func @transform_3(%arg0: i32, %arg1: i32) -> (i32, i32) {
    %c0_i32 = arith.constant 0 : i32
    %c0_i32_0 = arith.constant 0 : i32
    %c0_i32_1 = arith.constant 0 : i32
    return %c0_i32, %c0_i32_0 : i32, i32
  }
  func.func @transform_4(%arg0: i32, %arg1: i32) -> (i32, i32, i32, i32) {
    %c0_i32 = arith.constant 0 : i32
    %c0_i32_0 = arith.constant 0 : i32
    %c0_i32_1 = arith.constant 0 : i32
    return %arg0, %arg1, %c0_i32, %c0_i32_0 : i32, i32, i32, i32
  }
}

</mosaic_0001>

<llo_original>
// kernel: bottleneck_forward.7
$region0: #{bottleneck_forward.7}
  #allocation0 [shape = 'u32[]', space=smem, size = 0x4, offset = 0x4, fixed_abs, tag = 'smem constant byte address 0x4 - core index']
  #allocation1 [shape = 'u32[144,128]{1,0:T(1,128)}', space=vmem, size = 0x12000, scoped, tag = 'internal scratch']
  %s0 = inlined_call_operand.vmem [shape: bf16[2,8,8,128], index: 0, kind: input, shape index: {}]
  %s1 = inlined_call_operand.vmem [shape: bf16[2,8,8,128], index: 1, kind: input, shape index: {}]
  %s2 = inlined_call_operand.vmem [shape: f32[1,128], index: 2, kind: input, shape index: {}]
  %s3 = inlined_call_operand.vmem [shape: f32[1,128], index: 3, kind: input, shape index: {}]
  %s4 = inlined_call_operand.hbm [shape: f32[2,8,8,128], index: 4, kind: output, shape index: {}]
  %s5 = sld [smem:[#allocation0]]
  $region49: #{bottleneck_forward.7} parent=0
    _
  %s7 = ssub.s32 1, %s5
  %s8 = scalar_select 0, %s7, %s5
  $region1: #{bottleneck_forward.7} parent=0
    #allocation2 [shape = 'u8[65536]{0}', space=vmem, size = 0x10000, scoped, tag = 'output window, operand 0']
    #allocation3 [shape = 's32[2]{0}', space=sflag, size = 0x8, scoped, tag = 'scoped memory for bottleneck_forward.7']
    %9 = vsyncpa [#allocation3], 0
    %s10 = scalar_lea.sflag [#allocation3], 1
    %11 = vsyncpa %s10, 0
    loop: start=0, step=1, limit=4
    $region2: #{bottleneck_forward.7} parent=1 // loop_pre_header
      _
    $region3: #{bottleneck_forward.7} parent=1 // loop_header
      %s13 = sphi 0, %s17
      %p14 = scmp.ge.s32.totalorder %s13, 4
      %s20 = sphi 0, %s32
      %s21 = sphi 0, %s28
      %s22 = sphi 0, %s20
      %s23 = sphi 0, %s21
      %s24 = sphi 0, %s22
      %s25 = sphi 0, %s23
      %s37 = sphi 0, %s39
      %s40 = sphi 0, %s37
      %s41 = sphi 0, %s40
      %s57 = sphi 0, %s41
      %s65 = sphi 0, %s67
      %s68 = sphi 0, %s65
      %s69 = sphi 0, %s68
      %s85 = sphi 0, %s69
      %s89 = sphi 0, %s89
      %s91 = sphi 0, %s89
      %s92 = sphi 0, %s91
      %s106 = sphi 0, %s92
      %s110 = sphi 0, %s110
      %s112 = sphi 0, %s110
      %s113 = sphi 0, %s112
      %s127 = sphi 0, %s113
      %s135 = sphi 0, %s137
      %s138 = sphi 0, %s135
      %s139 = sphi 0, %s138
      %s155 = sphi 0, %s139
    $region4: #{bottleneck_forward.7} parent=1 // loop_header_branch
      %16 = sbr.rel (%p14) target = $region8
    $region5: #{bottleneck_forward.7} parent=1 // loop_body
      %s18 = ssub.s32 %s13, 1
      %s19 = ssub.s32 %s13, 2
      %s26 = sadd.s32 1, %s21
      %p27 = scmp.ge.s32.totalorder %s26, 1
      %s28 = scalar_select %p27, 0, %s26
      %s29 = sadd.s32 1, %s20
      %s30 = scalar_select %p27, %s29, %s20
      %p31 = scmp.ge.s32.totalorder %s30, 2
      %s32 = scalar_select %p31, 0, %s30
      %s33 = ssub.s32 %s20, %s32
      %s34 = ssub.s32 %s21, %s28
      %s35 = sor.u32 %s33, %s34
      %p36 = scmp.eq.s32.totalorder %s35, 0
      %s38 = sadd.s32 %s37, 1
      %s39 = scalar_select %p36, %s37, %s38
      %p42 = pneg %p36
      %p43 = scmp.eq.s32.totalorder %s13, 1
      %p44 = por %p42, %p43
      %p45 = scmp.ne.s32.totalorder %s37, %s40
      %p46 = scmp.eq.s32.totalorder %s13, 0
      %p47 = por %p45, %p46
      %p48 = scmp.ne.s32.totalorder %s37, %s40
      %p49 = scmp.eq.s32.totalorder %s18, 1
      %p50 = por %p48, %p49
      %p51 = scmp.ne.s32.totalorder %s40, %s41
      %p52 = scmp.eq.s32.totalorder %s18, 0
      %p53 = por %p51, %p52
      %p54 = scmp.ne.s32.totalorder %s40, %s41
      %p55 = scmp.eq.s32.totalorder %s19, 1
      %p56 = por %p54, %p55
      %p58 = scmp.ne.s32.totalorder %s41, %s57
      %p59 = scmp.eq.s32.totalorder %s19, 0
      %p60 = por %p58, %p59
      %s61 = ssub.s32 %s20, %s32
      %s62 = ssub.s32 %s21, %s28
      %s63 = sor.u32 %s61, %s62
      %p64 = scmp.eq.s32.totalorder %s63, 0
      %s66 = sadd.s32 %s65, 1
      %s67 = scalar_select %p64, %s65, %s66
      %p70 = pneg %p64
      %p71 = scmp.eq.s32.totalorder %s13, 1
      %p72 = por %p70, %p71
      %p73 = scmp.ne.s32.totalorder %s65, %s68
      %p74 = scmp.eq.s32.totalorder %s13, 0
      %p75 = por %p73, %p74
      %p76 = scmp.ne.s32.totalorder %s65, %s68
      %p77 = scmp.eq.s32.totalorder %s18, 1
      %p78 = por %p76, %p77
      %p79 = scmp.ne.s32.totalorder %s68, %s69
      %p80 = scmp.eq.s32.totalorder %s18, 0
      %p81 = por %p79, %p80
      %p82 = scmp.ne.s32.totalorder %s68, %s69
      %p83 = scmp.eq.s32.totalorder %s19, 1
      %p84 = por %p82, %p83
      %p86 = scmp.ne.s32.totalorder %s69, %s85
      %p87 = scmp.eq.s32.totalorder %s19, 0
      %p88 = por %p86, %p87
      %s90 = sadd.s32 %s89, 1
      %p93 = scmp.eq.s32.totalorder %s13, 1
      %p94 = scmp.ne.s32.totalorder %s89, %s91
      %p95 = scmp.eq.s32.totalorder %s13, 0
      %p96 = por %p94, %p95
      %p97 = scmp.ne.s32.totalorder %s89, %s91
      %p98 = scmp.eq.s32.totalorder %s18, 1
      %p99 = por %p97, %p98
      %p100 = scmp.ne.s32.totalorder %s91, %s92
      %p101 = scmp.eq.s32.totalorder %s18, 0
      %p102 = por %p100, %p101
      %p103 = scmp.ne.s32.totalorder %s91, %s92
      %p104 = scmp.eq.s32.totalorder %s19, 1
      %p105 = por %p103, %p104
      %p107 = scmp.ne.s32.totalorder %s92, %s106
      %p108 = scmp.eq.s32.totalorder %s19, 0
      %p109 = por %p107, %p108
      %s111 = sadd.s32 %s110, 1
      %p114 = scmp.eq.s32.totalorder %s13, 1
      %p115 = scmp.ne.s32.totalorder %s110, %s112
      %p116 = scmp.eq.s32.totalorder %s13, 0
      %p117 = por %p115, %p116
      %p118 = scmp.ne.s32.totalorder %s110, %s112
      %p119 = scmp.eq.s32.totalorder %s18, 1
      %p120 = por %p118, %p119
      %p121 = scmp.ne.s32.totalorder %s112, %s113
      %p122 = scmp.eq.s32.totalorder %s18, 0
      %p123 = por %p121, %p122
      %p124 = scmp.ne.s32.totalorder %s112, %s113
      %p125 = scmp.eq.s32.totalorder %s19, 1
      %p126 = por %p124, %p125
      %p128 = scmp.ne.s32.totalorder %s113, %s127
      %p129 = scmp.eq.s32.totalorder %s19, 0
      %p130 = por %p128, %p129
      %s131 = ssub.s32 %s20, %s32
      %s132 = ssub.s32 %s21, %s28
      %s133 = sor.u32 %s131, %s132
      %p134 = scmp.eq.s32.totalorder %s133, 0
      %s136 = sadd.s32 %s135, 1
      %s137 = scalar_select %p134, %s135, %s136
      %p140 = pneg %p134
      %p141 = scmp.eq.s32.totalorder %s13, 1
      %p142 = por %p140, %p141
      %p143 = scmp.ne.s32.totalorder %s135, %s138
      %p144 = scmp.eq.s32.totalorder %s13, 0
      %p145 = por %p143, %p144
      %p146 = scmp.ne.s32.totalorder %s135, %s138
      %p147 = scmp.eq.s32.totalorder %s18, 1
      %p148 = por %p146, %p147
      %p149 = scmp.ne.s32.totalorder %s138, %s139
      %p150 = scmp.eq.s32.totalorder %s18, 0
      %p151 = por %p149, %p150
      %p152 = scmp.ne.s32.totalorder %s138, %s139
      %p153 = scmp.eq.s32.totalorder %s19, 1
      %p154 = por %p152, %p153
      %p156 = scmp.ne.s32.totalorder %s139, %s155
      %p157 = scmp.eq.s32.totalorder %s19, 0
      %p158 = por %p156, %p157
      %p159 = scmp.le.s32.totalorder 1, %s13
      %p160 = scmp.lt.s32.totalorder %s13, 3
      %p161 = pnand %p159, %p160
      %p162 = pneg %p161
      // Predicated region
      $region9: #{bottleneck_forward.7} parent=5 // pred_check
        _
      $region10: #{bottleneck_forward.7} parent=5 // pred_check_branch
        %164 = sbr.rel (%p161) target = $region12
      $region11: #{bottleneck_forward.7} parent=5 // pred_region
        %s165 = ssub.s32 %s13, 1
        // Predicated region
        $region13: #{bottleneck_forward.7} parent=11 // pred_check
          %p166 = pneg %p102
        $region14: #{bottleneck_forward.7} parent=11 // pred_check_branch
          %168 = sbr.rel (%p166) target = $region16
        $region15: #{bottleneck_forward.7} parent=11 // pred_region
          _
        $region16: #{bottleneck_forward.7} parent=11 // pred_fallthru
          _
        // Predicated region
        $region17: #{bottleneck_forward.7} parent=11 // pred_check
          %p169 = pneg %p123
        $region18: #{bottleneck_forward.7} parent=11 // pred_check_branch
          %171 = sbr.rel (%p169) target = $region20
        $region19: #{bottleneck_forward.7} parent=11 // pred_region
          _
        $region20: #{bottleneck_forward.7} parent=11 // pred_fallthru
          _
      $region12: #{bottleneck_forward.7} parent=5 // pred_fallthru
        _
      %p172 = scmp.lt.s32.totalorder %s13, 2
      // Predicated region
      $region21: #{bottleneck_forward.7} parent=5 // pred_check
        %p173 = pneg %p172
      $region22: #{bottleneck_forward.7} parent=5 // pred_check_branch
        %175 = sbr.rel (%p173) target = $region24
      $region23: #{bottleneck_forward.7} parent=5 // pred_region
        // Predicated region
        $region25: #{bottleneck_forward.7} parent=23 // pred_check
          %p176 = pneg %p47
        $region26: #{bottleneck_forward.7} parent=23 // pred_check_branch
          %178 = sbr.rel (%p176) target = $region28
        $region27: #{bottleneck_forward.7} parent=23 // pred_region
          %s179 = smul.u32 8, %s21
          %p180 = scmp.lt.s32.totalorder %s20, 1
          %s181 = scalar_select %p180, %s20, 1
          %p182 = scmp.lt.s32.totalorder %s179, 7
          %s183 = scalar_select %p182, %s179, 7
          %s184 = smul.addr %s181, 8
          %s185 = sadd.s32 %s183, %s184
          %s186 = smul.addr %s185, 4
          %s187 = scalar_lea.vmem %s0, %s186
          %s188 = smul.u32 8, %s21
        $region28: #{bottleneck_forward.7} parent=23 // pred_fallthru
          _
        // Predicated region
        $region29: #{bottleneck_forward.7} parent=23 // pred_check
          %p189 = pneg %p75
        $region30: #{bottleneck_forward.7} parent=23 // pred_check_branch
          %191 = sbr.rel (%p189) target = $region32
        $region31: #{bottleneck_forward.7} parent=23 // pred_region
          %s192 = smul.u32 8, %s21
          %p193 = scmp.lt.s32.totalorder %s20, 1
          %s194 = scalar_select %p193, %s20, 1
          %p195 = scmp.lt.s32.totalorder %s192, 7
          %s196 = scalar_select %p195, %s192, 7
          %s197 = smul.addr %s194, 8
          %s198 = sadd.s32 %s196, %s197
          %s199 = smul.addr %s198, 4
          %s200 = scalar_lea.vmem %s1, %s199
          %s201 = smul.u32 8, %s21
        $region32: #{bottleneck_forward.7} parent=23 // pred_fallthru
          _
      $region24: #{bottleneck_forward.7} parent=5 // pred_fallthru
        _
      %p202 = scmp.le.s32.totalorder 1, %s13
      %p203 = scmp.lt.s32.totalorder %s13, 3
      %p204 = pnand %p202, %p203
      %p205 = pneg %p204
      // Predicated region
      $region33: #{bottleneck_forward.7} parent=5 // pred_check
        _
      $region34: #{bottleneck_forward.7} parent=5 // pred_check_branch
        %207 = sbr.rel (%p204) target = $region36
      $region35: #{bottleneck_forward.7} parent=5 // pred_region
        %s208 = ssub.s32 %s13, 1
        %s209 = smul.u32 8, %s23
        %p210 = scmp.lt.s32.totalorder %s22, 1
        %s211 = scalar_select %p210, %s22, 1
        %p212 = scmp.lt.s32.totalorder %s209, 7
        %s213 = scalar_select %p212, %s209, 7
        %s214 = smul.addr %s211, 8
        %s215 = sadd.s32 %s213, %s214
        %s216 = smul.addr %s215, 4
        %s217 = scalar_lea.vmem %s0, %s216
        %p218 = pneg %p53
        %p219 = pneg %p50
        %s220 = smul.u32 8, %s23
        %p221 = scmp.lt.s32.totalorder %s22, 1
        %s222 = scalar_select %p221, %s22, 1
        %p223 = scmp.lt.s32.totalorder %s220, 7
        %s224 = scalar_select %p223, %s220, 7
        %s225 = smul.addr %s222, 8
        %s226 = sadd.s32 %s224, %s225
        %s227 = smul.addr %s226, 4
        %s228 = scalar_lea.vmem %s1, %s227
        %p229 = pneg %p81
        %p230 = pneg %p78
        %p231 = pneg %p102
        %p232 = pneg %p99
        %p233 = pneg %p123
        %p234 = pneg %p120
        %p235 = pneg %p151
        %p236 = pneg %p148
        %s237 = sand.u32 %s138, 1
        %s238 = scalar_lea.sflag [#allocation3], %s237
        %s239 = sand.u32 %s138, 1
        %s240 = smul.addr %s239, 64
        %s241 = scalar_lea.vmem [#allocation2], %s240
        %s242 = smul.u32 8, %s23
        %p243 = scmp.lt.s32.totalorder %s22, 1
        %s244 = scalar_select %p243, %s22, 1
        %p245 = scmp.lt.s32.totalorder %s242, 7
        %s246 = scalar_select %p245, %s242, 7
        %s247 = smul.addr %s244, 8
        %s248 = sadd.s32 %s246, %s247
        %s249 = smul.addr %s248, 4
        %s250 = scalar_lea.vmem %s0, %s249
        %s251 = smul.u32 8, %s23
        %s252 = smul.u32 8, %s23
        %p253 = scmp.lt.s32.totalorder %s22, 1
        %s254 = scalar_select %p253, %s22, 1
        %p255 = scmp.lt.s32.totalorder %s252, 7
        %s256 = scalar_select %p255, %s252, 7
        %s257 = smul.addr %s254, 8
        %s258 = sadd.s32 %s256, %s257
        %s259 = smul.addr %s258, 4
        %s260 = scalar_lea.vmem %s1, %s259
        %s261 = smul.u32 8, %s23
        %s262 = smul.u32 8, %s23
        %v263 = vld [vmem:[%s250] sm:$0xf]
        %v264 = vld [vmem:[%s250 + $0x4] sm:$0xf]
        %v265 = vld [vmem:[%s250 + $0x8] sm:$0xf]
        %v266 = vld [vmem:[%s250 + $0xc] sm:$0xf]
        %v267 = vld [vmem:[%s250 + $0x10] sm:$0xf]
        %v268 = vld [vmem:[%s250 + $0x14] sm:$0xf]
        %v269 = vld [vmem:[%s250 + $0x18] sm:$0xf]
        %v270 = vld [vmem:[%s250 + $0x1c] sm:$0xf]
        %v271 = vunpack.c.l.bf16 %v263
        %v272 = vunpack.c.l.bf16 %v264
        %v273 = vunpack.c.l.bf16 %v265
        %v274 = vunpack.c.l.bf16 %v266
        %v275 = vunpack.c.l.bf16 %v267
        %v276 = vunpack.c.l.bf16 %v268
        %v277 = vunpack.c.l.bf16 %v269
        %v278 = vunpack.c.l.bf16 %v270
        %v279 = vld [vmem:[%s2] sm:$0x1]
        %v281 = vlaneseq
        %v282 = vshrl.u32 %v281, 7
        %v283 = vsub.s32 0, %v282
        %v284 = vrot.slane %v279, %v283
        %v286 = vmul.f32 %v271, %v284
        %v287 = vmul.f32 %v272, %v284
        %v288 = vmul.f32 %v273, %v284
        %v289 = vmul.f32 %v274, %v284
        %v290 = vmul.f32 %v275, %v284
        %v291 = vmul.f32 %v276, %v284
        %v292 = vmul.f32 %v277, %v284
        %v293 = vmul.f32 %v278, %v284
        %v294 = vld [vmem:[%s3] sm:$0x1]
        %v296 = vlaneseq
        %v297 = vshrl.u32 %v296, 7
        %v298 = vsub.s32 0, %v297
        %v299 = vrot.slane %v294, %v298
        %v301 = vadd.f32 %v286, %v299
        %v302 = vadd.f32 %v287, %v299
        %v303 = vadd.f32 %v288, %v299
        %v304 = vadd.f32 %v289, %v299
        %v305 = vadd.f32 %v290, %v299
        %v306 = vadd.f32 %v291, %v299
        %v307 = vadd.f32 %v292, %v299
        %v308 = vadd.f32 %v293, %v299
        %v309 = vld [vmem:[%s260] sm:$0xf]
        %v310 = vld [vmem:[%s260 + $0x4] sm:$0xf]
        %v311 = vld [vmem:[%s260 + $0x8] sm:$0xf]
        %v312 = vld [vmem:[%s260 + $0xc] sm:$0xf]
        %v313 = vld [vmem:[%s260 + $0x10] sm:$0xf]
        %v314 = vld [vmem:[%s260 + $0x14] sm:$0xf]
        %v315 = vld [vmem:[%s260 + $0x18] sm:$0xf]
        %v316 = vld [vmem:[%s260 + $0x1c] sm:$0xf]
        %v317 = vunpack.c.l.bf16 %v309
        %v318 = vunpack.c.l.bf16 %v310
        %v319 = vunpack.c.l.bf16 %v311
        %v320 = vunpack.c.l.bf16 %v312
        %v321 = vunpack.c.l.bf16 %v313
        %v322 = vunpack.c.l.bf16 %v314
        %v323 = vunpack.c.l.bf16 %v315
        %v324 = vunpack.c.l.bf16 %v316
        %v325 = vadd.f32 %v301, %v317
        %v326 = vadd.f32 %v302, %v318
        %v327 = vadd.f32 %v303, %v319
        %v328 = vadd.f32 %v304, %v320
        %v329 = vadd.f32 %v305, %v321
        %v330 = vadd.f32 %v306, %v322
        %v331 = vadd.f32 %v307, %v323
        %v332 = vadd.f32 %v308, %v324
        %v333 = vmax.f32 %v325, 0.0
        %v334 = vmax.f32 %v326, 0.0
        %v335 = vmax.f32 %v327, 0.0
        %v336 = vmax.f32 %v328, 0.0
        %v337 = vmax.f32 %v329, 0.0
        %v338 = vmax.f32 %v330, 0.0
        %v339 = vmax.f32 %v331, 0.0
        %v340 = vmax.f32 %v332, 0.0
        %341 = vst [vmem:[%s241] sm:$0xff] %v333
        %342 = vst [vmem:[%s241 + $0x8] sm:$0xff] %v334
        %343 = vst [vmem:[%s241 + $0x10] sm:$0xff] %v335
        %344 = vst [vmem:[%s241 + $0x18] sm:$0xff] %v336
        %345 = vst [vmem:[%s241 + $0x20] sm:$0xff] %v337
        %346 = vst [vmem:[%s241 + $0x28] sm:$0xff] %v338
        %347 = vst [vmem:[%s241 + $0x30] sm:$0xff] %v339
        %348 = vst [vmem:[%s241 + $0x38] sm:$0xff] %v340
        %s349 = sand.u32 %s138, 1
        %s350 = scalar_lea.sflag [#allocation3], %s349
        %s351 = sand.u32 %s138, 1
        %s352 = smul.addr %s351, 64
        %s353 = scalar_lea.vmem [#allocation2], %s352
        // Predicated region
        $region37: #{bottleneck_forward.7} parent=35 // pred_check
          %p354 = pneg %p148
        $region38: #{bottleneck_forward.7} parent=35 // pred_check_branch
          %356 = sbr.rel (%p354) target = $region40
        $region39: #{bottleneck_forward.7} parent=35 // pred_region
          %s357 = smul.u32 8, %s23
          %s359 = ssub.s32 1024, 1024
          %360 = vsyncadd %s350, %s359
          %s361 = smul.addr %s22, 8
          %s362 = sadd.s32 %s357, %s361
          %s363 = smul.addr %s362, 128
          %s364 = scalar_lea.hbm %s4, %s363
          %s365 = sshll.u32 %s353, 4
          %s366 = int_to_ptr.vmem [resolvable:$true] %s365
          %371 = dma.vmem_to_hbm [thread:$0]  %s366, 1024, %s364, %s350, 128, 128, 8
        $region40: #{bottleneck_forward.7} parent=35 // pred_fallthru
          _
      $region36: #{bottleneck_forward.7} parent=5 // pred_fallthru
        _
      %p372 = scmp.le.s32.totalorder 2, %s13
      // Predicated region
      $region41: #{bottleneck_forward.7} parent=5 // pred_check
        %p373 = pneg %p372
      $region42: #{bottleneck_forward.7} parent=5 // pred_check_branch
        %375 = sbr.rel (%p373) target = $region44
      $region43: #{bottleneck_forward.7} parent=5 // pred_region
        %s376 = ssub.s32 %s13, 2
        // Predicated region
        $region45: #{bottleneck_forward.7} parent=43 // pred_check
          %p377 = pneg %p154
        $region46: #{bottleneck_forward.7} parent=43 // pred_check_branch
          %379 = sbr.rel (%p377) target = $region48
        $region47: #{bottleneck_forward.7} parent=43 // pred_region
          %s380 = sand.u32 %s139, 1
          %s381 = scalar_lea.sflag [#allocation3], %s380
          %s382 = sand.u32 %s139, 1
          %s383 = smul.addr %s382, 64
          %s384 = scalar_lea.vmem [#allocation2], %s383
          %385 = dma.done %s381, 1024
        $region48: #{bottleneck_forward.7} parent=43 // pred_fallthru
          _
      $region44: #{bottleneck_forward.7} parent=5 // pred_fallthru
        _
    $region6: #{bottleneck_forward.7} parent=1 // loop_footer
      %s17 = sadd.s32 1, %s13
    $region7: #{bottleneck_forward.7} parent=1 // loop_footer_branch
      %12 = sbr.rel target = $region3
    $region8: #{bottleneck_forward.7} parent=1 // loop_exit
      _
    %386 = vsyncpa [#allocation3], 1
    %s387 = scalar_lea.sflag [#allocation3], 1
    %388 = vsyncpa %s387, 1

// kernel: bottleneck_forward.4
$region0: #{bottleneck_forward.4}
  #allocation0 [shape = 'u32[]', space=smem, size = 0x4, offset = 0x4, fixed_abs, tag = 'smem constant byte address 0x4 - core index']
  #allocation1 [shape = 'u32[144,128]{1,0:T(1,128)}', space=vmem, size = 0x12000, scoped, tag = 'internal scratch']
  %s0 = inlined_call_operand.vmem [shape: bf16[2,8,8,128], index: 0, kind: input, shape index: {}]
  %s1 = inlined_call_operand.vmem [shape: bf16[128,128], index: 1, kind: input, shape index: {}]
  %s2 = inlined_call_operand.vmem [shape: bf16[2,8,8,128], index: 2, kind: output, shape index: {0}]
  %s3 = inlined_call_operand.vmem [shape: f32[2,1,2,128], index: 3, kind: output, shape index: {1}]
  %4 = xla_tuple %s2, %s3
  %s5 = sld [smem:[#allocation0]]
  $region49: #{bottleneck_forward.4} parent=0
    _
  %s7 = ssub.s32 1, %s5
  %s8 = scalar_select 0, %s7, %s5
  loop: start=0, step=1, limit=4
  $region2: #{bottleneck_forward.4} parent=0 // loop_pre_header
    _
  $region3: #{bottleneck_forward.4} parent=0 // loop_header
    %s10 = sphi 0, %s14
    %p11 = scmp.ge.s32.totalorder %s10, 4
    %s17 = sphi 0, %s29
    %s18 = sphi 0, %s25
    %s19 = sphi 0, %s17
    %s20 = sphi 0, %s18
    %s21 = sphi 0, %s19
    %s22 = sphi 0, %s20
    %s34 = sphi 0, %s36
    %s37 = sphi 0, %s34
    %s38 = sphi 0, %s37
    %s54 = sphi 0, %s38
    %s58 = sphi 0, %s58
    %s60 = sphi 0, %s58
    %s61 = sphi 0, %s60
    %s75 = sphi 0, %s61
    %s83 = sphi 0, %s85
    %s86 = sphi 0, %s83
    %s87 = sphi 0, %s86
    %s103 = sphi 0, %s87
    %s111 = sphi 0, %s113
    %s114 = sphi 0, %s111
    %s115 = sphi 0, %s114
    %s131 = sphi 0, %s115
  $region4: #{bottleneck_forward.4} parent=0 // loop_header_branch
    %13 = sbr.rel (%p11) target = $region8
  $region5: #{bottleneck_forward.4} parent=0 // loop_body
    %s15 = ssub.s32 %s10, 1
    %s16 = ssub.s32 %s10, 2
    %s23 = sadd.s32 1, %s18
    %p24 = scmp.ge.s32.totalorder %s23, 1
    %s25 = scalar_select %p24, 0, %s23
    %s26 = sadd.s32 1, %s17
    %s27 = scalar_select %p24, %s26, %s17
    %p28 = scmp.ge.s32.totalorder %s27, 2
    %s29 = scalar_select %p28, 0, %s27
    %s30 = ssub.s32 %s17, %s29
    %s31 = ssub.s32 %s18, %s25
    %s32 = sor.u32 %s30, %s31
    %p33 = scmp.eq.s32.totalorder %s32, 0
    %s35 = sadd.s32 %s34, 1
    %s36 = scalar_select %p33, %s34, %s35
    %p39 = pneg %p33
    %p40 = scmp.eq.s32.totalorder %s10, 1
    %p41 = por %p39, %p40
    %p42 = scmp.ne.s32.totalorder %s34, %s37
    %p43 = scmp.eq.s32.totalorder %s10, 0
    %p44 = por %p42, %p43
    %p45 = scmp.ne.s32.totalorder %s34, %s37
    %p46 = scmp.eq.s32.totalorder %s15, 1
    %p47 = por %p45, %p46
    %p48 = scmp.ne.s32.totalorder %s37, %s38
    %p49 = scmp.eq.s32.totalorder %s15, 0
    %p50 = por %p48, %p49
    %p51 = scmp.ne.s32.totalorder %s37, %s38
    %p52 = scmp.eq.s32.totalorder %s16, 1
    %p53 = por %p51, %p52
    %p55 = scmp.ne.s32.totalorder %s38, %s54
    %p56 = scmp.eq.s32.totalorder %s16, 0
    %p57 = por %p55, %p56
    %s59 = sadd.s32 %s58, 1
    %p62 = scmp.eq.s32.totalorder %s10, 1
    %p63 = scmp.ne.s32.totalorder %s58, %s60
    %p64 = scmp.eq.s32.totalorder %s10, 0
    %p65 = por %p63, %p64
    %p66 = scmp.ne.s32.totalorder %s58, %s60
    %p67 = scmp.eq.s32.totalorder %s15, 1
    %p68 = por %p66, %p67
    %p69 = scmp.ne.s32.totalorder %s60, %s61
    %p70 = scmp.eq.s32.totalorder %s15, 0
    %p71 = por %p69, %p70
    %p72 = scmp.ne.s32.totalorder %s60, %s61
    %p73 = scmp.eq.s32.totalorder %s16, 1
    %p74 = por %p72, %p73
    %p76 = scmp.ne.s32.totalorder %s61, %s75
    %p77 = scmp.eq.s32.totalorder %s16, 0
    %p78 = por %p76, %p77
    %s79 = ssub.s32 %s17, %s29
    %s80 = ssub.s32 %s18, %s25
    %s81 = sor.u32 %s79, %s80
    %p82 = scmp.eq.s32.totalorder %s81, 0
    %s84 = sadd.s32 %s83, 1
    %s85 = scalar_select %p82, %s83, %s84
    %p88 = pneg %p82
    %p89 = scmp.eq.s32.totalorder %s10, 1
    %p90 = por %p88, %p89
    %p91 = scmp.ne.s32.totalorder %s83, %s86
    %p92 = scmp.eq.s32.totalorder %s10, 0
    %p93 = por %p91, %p92
    %p94 = scmp.ne.s32.totalorder %s83, %s86
    %p95 = scmp.eq.s32.totalorder %s15, 1
    %p96 = por %p94, %p95
    %p97 = scmp.ne.s32.totalorder %s86, %s87
    %p98 = scmp.eq.s32.totalorder %s15, 0
    %p99 = por %p97, %p98
    %p100 = scmp.ne.s32.totalorder %s86, %s87
    %p101 = scmp.eq.s32.totalorder %s16, 1
    %p102 = por %p100, %p101
    %p104 = scmp.ne.s32.totalorder %s87, %s103
    %p105 = scmp.eq.s32.totalorder %s16, 0
    %p106 = por %p104, %p105
    %s107 = ssub.s32 %s17, %s29
    %s108 = ssub.s32 %s18, %s25
    %s109 = sor.u32 %s107, %s108
    %p110 = scmp.eq.s32.totalorder %s109, 0
    %s112 = sadd.s32 %s111, 1
    %s113 = scalar_select %p110, %s111, %s112
    %p116 = pneg %p110
    %p117 = scmp.eq.s32.totalorder %s10, 1
    %p118 = por %p116, %p117
    %p119 = scmp.ne.s32.totalorder %s111, %s114
    %p120 = scmp.eq.s32.totalorder %s10, 0
    %p121 = por %p119, %p120
    %p122 = scmp.ne.s32.totalorder %s111, %s114
    %p123 = scmp.eq.s32.totalorder %s15, 1
    %p124 = por %p122, %p123
    %p125 = scmp.ne.s32.totalorder %s114, %s115
    %p126 = scmp.eq.s32.totalorder %s15, 0
    %p127 = por %p125, %p126
    %p128 = scmp.ne.s32.totalorder %s114, %s115
    %p129 = scmp.eq.s32.totalorder %s16, 1
    %p130 = por %p128, %p129
    %p132 = scmp.ne.s32.totalorder %s115, %s131
    %p133 = scmp.eq.s32.totalorder %s16, 0
    %p134 = por %p132, %p133
    %p135 = scmp.le.s32.totalorder 1, %s10
    %p136 = scmp.lt.s32.totalorder %s10, 3
    %p137 = pnand %p135, %p136
    %p138 = pneg %p137
    // Predicated region
    $region9: #{bottleneck_forward.4} parent=5 // pred_check
      _
    $region10: #{bottleneck_forward.4} parent=5 // pred_check_branch
      %140 = sbr.rel (%p137) target = $region12
    $region11: #{bottleneck_forward.4} parent=5 // pred_region
      %s141 = ssub.s32 %s10, 1
      // Predicated region
      $region13: #{bottleneck_forward.4} parent=11 // pred_check
        %p142 = pneg %p71
      $region14: #{bottleneck_forward.4} parent=11 // pred_check_branch
        %144 = sbr.rel (%p142) target = $region16
      $region15: #{bottleneck_forward.4} parent=11 // pred_region
        _
      $region16: #{bottleneck_forward.4} parent=11 // pred_fallthru
        _
    $region12: #{bottleneck_forward.4} parent=5 // pred_fallthru
      _
    %p145 = scmp.lt.s32.totalorder %s10, 2
    // Predicated region
    $region17: #{bottleneck_forward.4} parent=5 // pred_check
      %p146 = pneg %p145
    $region18: #{bottleneck_forward.4} parent=5 // pred_check_branch
      %148 = sbr.rel (%p146) target = $region20
    $region19: #{bottleneck_forward.4} parent=5 // pred_region
      // Predicated region
      $region21: #{bottleneck_forward.4} parent=19 // pred_check
        %p149 = pneg %p44
      $region22: #{bottleneck_forward.4} parent=19 // pred_check_branch
        %151 = sbr.rel (%p149) target = $region24
      $region23: #{bottleneck_forward.4} parent=19 // pred_region
        %s152 = smul.u32 8, %s18
        %p153 = scmp.lt.s32.totalorder %s17, 1
        %s154 = scalar_select %p153, %s17, 1
        %p155 = scmp.lt.s32.totalorder %s152, 7
        %s156 = scalar_select %p155, %s152, 7
        %s157 = smul.addr %s154, 8
        %s158 = sadd.s32 %s156, %s157
        %s159 = smul.addr %s158, 4
        %s160 = scalar_lea.vmem %s0, %s159
        %s161 = smul.u32 8, %s18
      $region24: #{bottleneck_forward.4} parent=19 // pred_fallthru
        _
    $region20: #{bottleneck_forward.4} parent=5 // pred_fallthru
      _
    %p162 = scmp.le.s32.totalorder 1, %s10
    %p163 = scmp.lt.s32.totalorder %s10, 3
    %p164 = pnand %p162, %p163
    %p165 = pneg %p164
    // Predicated region
    $region25: #{bottleneck_forward.4} parent=5 // pred_check
      _
    $region26: #{bottleneck_forward.4} parent=5 // pred_check_branch
      %167 = sbr.rel (%p164) target = $region28
    $region27: #{bottleneck_forward.4} parent=5 // pred_region
      %s168 = ssub.s32 %s10, 1
      %s169 = smul.u32 8, %s20
      %p170 = scmp.lt.s32.totalorder %s19, 1
      %s171 = scalar_select %p170, %s19, 1
      %p172 = scmp.lt.s32.totalorder %s169, 7
      %s173 = scalar_select %p172, %s169, 7
      %s174 = smul.addr %s171, 8
      %s175 = sadd.s32 %s173, %s174
      %s176 = smul.addr %s175, 4
      %s177 = scalar_lea.vmem %s0, %s176
      %p178 = pneg %p50
      %p179 = pneg %p47
      %p180 = pneg %p71
      %p181 = pneg %p68
      %p182 = pneg %p99
      %p183 = pneg %p96
      %s184 = smul.u32 8, %s20
      %p185 = scmp.lt.s32.totalorder %s19, 1
      %s186 = scalar_select %p185, %s19, 1
      %p187 = scmp.lt.s32.totalorder %s184, 7
      %s188 = scalar_select %p187, %s184, 7
      %s189 = smul.addr %s186, 8
      %s190 = sadd.s32 %s188, %s189
      %s191 = smul.addr %s190, 4
      %s192 = scalar_lea.vmem %s2, %s191
      %p193 = pneg %p127
      %p194 = pneg %p124
      %p195 = scmp.lt.s32.totalorder %s19, 1
      %s196 = scalar_select %p195, %s19, 1
      %p197 = scmp.lt.s32.totalorder %s20, 0
      %s198 = scalar_select %p197, %s20, 0
      %s199 = sadd.s32 %s198, %s196
      %s200 = smul.addr %s199, 2
      %s201 = scalar_lea.vmem %s3, %s200
      %s202 = smul.u32 8, %s20
      %p203 = scmp.lt.s32.totalorder %s19, 1
      %s204 = scalar_select %p203, %s19, 1
      %p205 = scmp.lt.s32.totalorder %s202, 7
      %s206 = scalar_select %p205, %s202, 7
      %s207 = smul.addr %s204, 8
      %s208 = sadd.s32 %s206, %s207
      %s209 = smul.addr %s208, 4
      %s210 = scalar_lea.vmem %s0, %s209
      %s211 = smul.u32 8, %s20
      %s212 = smul.u32 8, %s20
      %p213 = scmp.lt.s32.totalorder %s19, 1
      %s214 = scalar_select %p213, %s19, 1
      %p215 = scmp.lt.s32.totalorder %s212, 7
      %s216 = scalar_select %p215, %s212, 7
      %s217 = smul.addr %s214, 8
      %s218 = sadd.s32 %s216, %s217
      %s219 = smul.addr %s218, 4
      %s220 = scalar_lea.vmem %s2, %s219
      %s221 = smul.u32 8, %s20
      %p222 = scmp.lt.s32.totalorder %s19, 1
      %s223 = scalar_select %p222, %s19, 1
      %p224 = scmp.lt.s32.totalorder %s20, 0
      %s225 = scalar_select %p224, %s20, 0
      %s226 = sadd.s32 %s225, %s223
      %s227 = smul.addr %s226, 2
      %s228 = scalar_lea.vmem %s3, %s227
      %v230 = vld [vmem:[%s210] sm:$0xf]
      %v231 = vld [vmem:[%s210 + $0x4] sm:$0xf]
      %v232 = vld [vmem:[%s210 + $0x8] sm:$0xf]
      %v233 = vld [vmem:[%s210 + $0xc] sm:$0xf]
      %v234 = vld [vmem:[%s210 + $0x10] sm:$0xf]
      %v235 = vld [vmem:[%s210 + $0x14] sm:$0xf]
      %v236 = vld [vmem:[%s210 + $0x18] sm:$0xf]
      %v237 = vld [vmem:[%s210 + $0x1c] sm:$0xf]
      %v238 = vld [vmem:[%s1] sm:$0xf]
      %v239 = vld [vmem:[%s1 + $0x4] sm:$0xf]
      %v240 = vld [vmem:[%s1 + $0x8] sm:$0xf]
      %v241 = vld [vmem:[%s1 + $0xc] sm:$0xf]
      %v242 = vld [vmem:[%s1 + $0x10] sm:$0xf]
      %v243 = vld [vmem:[%s1 + $0x14] sm:$0xf]
      %v244 = vld [vmem:[%s1 + $0x18] sm:$0xf]
      %v245 = vld [vmem:[%s1 + $0x1c] sm:$0xf]
      %v246 = vld [vmem:[%s1 + $0x20] sm:$0xf]
      %v247 = vld [vmem:[%s1 + $0x24] sm:$0xf]
      %v248 = vld [vmem:[%s1 + $0x28] sm:$0xf]
      %v249 = vld [vmem:[%s1 + $0x2c] sm:$0xf]
      %v250 = vld [vmem:[%s1 + $0x30] sm:$0xf]
      %v251 = vld [vmem:[%s1 + $0x34] sm:$0xf]
      %v252 = vld [vmem:[%s1 + $0x38] sm:$0xf]
      %v253 = vld [vmem:[%s1 + $0x3c] sm:$0xf]
      %v262 = vunpack.c.l.b16 %v230
      %v263 = vunpack.c.l.b16 %v231
      %v264 = vunpack.c.l.b16 %v232
      %v265 = vunpack.c.l.b16 %v233
      %v266 = vunpack.c.l.b16 %v234
      %v267 = vunpack.c.l.b16 %v235
      %v268 = vunpack.c.l.b16 %v236
      %v269 = vunpack.c.l.b16 %v237
      %v270 = vpack.c.b16 %v263, %v262
      %v271 = vpack.c.b16 %v265, %v264
      %v272 = vpack.c.b16 %v267, %v266
      %v273 = vpack.c.b16 %v269, %v268
      %v294 = vunpack.c.l.b16 %v238
      %v295 = vunpack.c.l.b16 %v239
      %v296 = vunpack.c.l.b16 %v240
      %v297 = vunpack.c.l.b16 %v241
      %v298 = vunpack.c.l.b16 %v242
      %v299 = vunpack.c.l.b16 %v243
      %v300 = vunpack.c.l.b16 %v244
      %v301 = vunpack.c.l.b16 %v245
      %v302 = vunpack.c.l.b16 %v246
      %v303 = vunpack.c.l.b16 %v247
      %v304 = vunpack.c.l.b16 %v248
      %v305 = vunpack.c.l.b16 %v249
      %v306 = vunpack.c.l.b16 %v250
      %v307 = vunpack.c.l.b16 %v251
      %v308 = vunpack.c.l.b16 %v252
      %v309 = vunpack.c.l.b16 %v253
      %v310 = vpack.c.b16 %v295, %v294
      %v311 = vpack.c.b16 %v297, %v296
      %v312 = vpack.c.b16 %v299, %v298
      %v313 = vpack.c.b16 %v301, %v300
      %v314 = vpack.c.b16 %v303, %v302
      %v315 = vpack.c.b16 %v305, %v304
      %v316 = vpack.c.b16 %v307, %v306
      %v317 = vpack.c.b16 %v309, %v308
      %326 = vmatprep.subr.bf16.mxu0 0
      %327 = vmatpush1.bf16.msra.mxu0 %v317
      %328 = vmatprep.subr.bf16.mxu0 0
      %329 = vmatpush1.bf16.msra.mxu0 %v316
      %330 = vmatprep.subr.bf16.mxu0 0
      %331 = vmatpush1.bf16.msra.mxu0 %v315
      %332 = vmatprep.subr.bf16.mxu0 0
      %333 = vmatpush1.bf16.msra.mxu0 %v314
      %334 = vmatprep.subr.bf16.mxu0 0
      %335 = vmatpush1.bf16.msra.mxu0 %v313
      %336 = vmatprep.subr.bf16.mxu0 0
      %337 = vmatpush1.bf16.msra.mxu0 %v312
      %338 = vmatprep.subr.bf16.mxu0 0
      %339 = vmatpush1.bf16.msra.mxu0 %v311
      %340 = vmatprep.subr.bf16.mxu0 0
      %341 = vmatpush1.bf16.msra.mxu0 %v310
      %342 = vmatprep.subr.bf16.mxu0 0
      %343 = vmatpush2.bf16.msra.mxu0 0
      %344 = vmatprep.subr.bf16.mxu0 0
      %345 = vmatpush2.bf16.msra.mxu0 0
      %346 = vmatprep.subr.bf16.mxu0 0
      %347 = vmatpush2.bf16.msra.mxu0 0
      %348 = vmatprep.subr.bf16.mxu0 0
      %349 = vmatpush2.bf16.msra.mxu0 0
      %350 = vmatprep.subr.bf16.mxu0 0
      %351 = vmatpush2.bf16.msra.mxu0 0
      %352 = vmatprep.subr.bf16.mxu0 0
      %353 = vmatpush2.bf16.msra.mxu0 0
      %354 = vmatprep.subr.bf16.mxu0 0
      %355 = vmatpush2.bf16.msra.mxu0 0
      %356 = vmatprep.subr.bf16.mxu0 0
      %357 = vmatpush2.bf16.msra.mxu0 0
      %358 = vmatprep.mubr.bf16.mxu0 0
      %359 = vmatmul.mubr.bf16.gmra.mxu0 %v270
      %v360 = vpop.f32.mrf.mxu0
      %v361 = vadd.f32 0.0, %v360
      %v362 = vpop.f32.mrf.mxu0
      %v363 = vpop.f32.mrf.mxu0
      %v364 = vadd.f32 0.0, %v363
      %v365 = vpop.f32.mrf.mxu0
      %366 = vmatprep.mubr.bf16.mxu0 0
      %367 = vmatmul.mubr.bf16.gmra.mxu0 %v271
      %v368 = vpop.f32.mrf.mxu0
      %v369 = vadd.f32 0.0, %v368
      %v370 = vpop.f32.mrf.mxu0
      %v371 = vpop.f32.mrf.mxu0
      %v372 = vadd.f32 0.0, %v371
      %v373 = vpop.f32.mrf.mxu0
      %374 = vmatprep.mubr.bf16.mxu0 0
      %375 = vmatmul.mubr.bf16.gmra.mxu0 %v272
      %v376 = vpop.f32.mrf.mxu0
      %v377 = vadd.f32 0.0, %v376
      %v378 = vpop.f32.mrf.mxu0
      %v379 = vpop.f32.mrf.mxu0
      %v380 = vadd.f32 0.0, %v379
      %v381 = vpop.f32.mrf.mxu0
      %382 = vmatprep.mubr.bf16.mxu0 0
      %383 = vmatmul.mubr.bf16.gmra.mxu0 %v273
      %v384 = vpop.f32.mrf.mxu0
      %v385 = vadd.f32 0.0, %v384
      %v386 = vpop.f32.mrf.mxu0
      %v387 = vpop.f32.mrf.mxu0
      %v388 = vadd.f32 0.0, %v387
      %v389 = vpop.f32.mrf.mxu0
      %390 = vdwg.mxu0
      %v391 = vadd.f32 %v361, %v364
      %v392 = vadd.f32 %v391, %v369
      %v393 = vadd.f32 %v392, %v372
      %v394 = vadd.f32 %v393, %v377
      %v395 = vadd.f32 %v394, %v380
      %v396 = vadd.f32 %v395, %v385
      %v397 = vadd.f32 %v396, %v388
      %v398 = vrot.slane %v397, 4
      %v399 = vadd.f32 %v397, %v398
      %v400 = vrot.slane %v399, 2
      %v401 = vadd.f32 %v399, %v400
      %v402 = vrot.slane %v401, 1
      %v403 = vadd.f32 %v401, %v402
      %v404 = vmul.f32 %v361, %v361
      %v405 = vmul.f32 %v364, %v364
      %v406 = vmul.f32 %v369, %v369
      %v407 = vmul.f32 %v372, %v372
      %v408 = vmul.f32 %v377, %v377
      %v409 = vmul.f32 %v380, %v380
      %v410 = vmul.f32 %v385, %v385
      %v411 = vmul.f32 %v388, %v388
      %v412 = vadd.f32 %v404, %v405
      %v413 = vadd.f32 %v412, %v406
      %v414 = vadd.f32 %v413, %v407
      %v415 = vadd.f32 %v414, %v408
      %v416 = vadd.f32 %v415, %v409
      %v417 = vadd.f32 %v416, %v410
      %v418 = vadd.f32 %v417, %v411
      %v419 = vrot.slane %v418, 4
      %v420 = vadd.f32 %v418, %v419
      %v421 = vrot.slane %v420, 2
      %v422 = vadd.f32 %v420, %v421
      %v423 = vrot.slane %v422, 1
      %v424 = vadd.f32 %v422, %v423
      %vm425 = vcmask 1040384
      %v426 = vsel %vm425, %v403, %v424
      %427 = vst [vmem:[%s228] sm:$0x3] %v426
      %v428 = vpack.c.bf16 %v364, %v361
      %v429 = vpack.c.bf16 %v372, %v369
      %v430 = vpack.c.bf16 %v380, %v377
      %v431 = vpack.c.bf16 %v388, %v385
      %v436 = vunpack.c.l.b16 %v428
      %v437 = vunpack.c.h.b16 %v428
      %v438 = vunpack.c.l.b16 %v429
      %v439 = vunpack.c.h.b16 %v429
      %v440 = vunpack.c.l.b16 %v430
      %v441 = vunpack.c.h.b16 %v430
      %v442 = vunpack.c.l.b16 %v431
      %v443 = vunpack.c.h.b16 %v431
      %v444 = vpack.c.b16 %v436, %v436
      %v445 = vpack.c.b16 %v437, %v437
      %v446 = vpack.c.b16 %v438, %v438
      %v447 = vpack.c.b16 %v439, %v439
      %v448 = vpack.c.b16 %v440, %v440
      %v449 = vpack.c.b16 %v441, %v441
      %v450 = vpack.c.b16 %v442, %v442
      %v451 = vpack.c.b16 %v443, %v443
      %460 = vst [vmem:[%s220] sm:$0xf] %v444
      %461 = vst [vmem:[%s220 + $0x4] sm:$0xf] %v445
      %462 = vst [vmem:[%s220 + $0x8] sm:$0xf] %v446
      %463 = vst [vmem:[%s220 + $0xc] sm:$0xf] %v447
      %464 = vst [vmem:[%s220 + $0x10] sm:$0xf] %v448
      %465 = vst [vmem:[%s220 + $0x14] sm:$0xf] %v449
      %466 = vst [vmem:[%s220 + $0x18] sm:$0xf] %v450
      %467 = vst [vmem:[%s220 + $0x1c] sm:$0xf] %v451
      %s468 = smul.u32 8, %s20
      %p469 = scmp.lt.s32.totalorder %s19, 1
      %s470 = scalar_select %p469, %s19, 1
      %p471 = scmp.lt.s32.totalorder %s468, 7
      %s472 = scalar_select %p471, %s468, 7
      %s473 = smul.addr %s470, 8
      %s474 = sadd.s32 %s472, %s473
      %s475 = smul.addr %s474, 4
      %s476 = scalar_lea.vmem %s2, %s475
      %p477 = scmp.lt.s32.totalorder %s19, 1
      %s478 = scalar_select %p477, %s19, 1
      %p479 = scmp.lt.s32.totalorder %s20, 0
      %s480 = scalar_select %p479, %s20, 0
      %s481 = sadd.s32 %s480, %s478
      %s482 = smul.addr %s481, 2
      %s483 = scalar_lea.vmem %s3, %s482
      // Predicated region
      $region29: #{bottleneck_forward.4} parent=27 // pred_check
        %p484 = pneg %p96
      $region30: #{bottleneck_forward.4} parent=27 // pred_check_branch
        %486 = sbr.rel (%p484) target = $region32
      $region31: #{bottleneck_forward.4} parent=27 // pred_region
        %s487 = smul.u32 8, %s20
      $region32: #{bottleneck_forward.4} parent=27 // pred_fallthru
        _
      // Predicated region
      $region33: #{bottleneck_forward.4} parent=27 // pred_check
        %p488 = pneg %p124
      $region34: #{bottleneck_forward.4} parent=27 // pred_check_branch
        %490 = sbr.rel (%p488) target = $region36
      $region35: #{bottleneck_forward.4} parent=27 // pred_region
        _
      $region36: #{bottleneck_forward.4} parent=27 // pred_fallthru
        _
    $region28: #{bottleneck_forward.4} parent=5 // pred_fallthru
      _
    %p491 = scmp.le.s32.totalorder 2, %s10
    // Predicated region
    $region37: #{bottleneck_forward.4} parent=5 // pred_check
      %p492 = pneg %p491
    $region38: #{bottleneck_forward.4} parent=5 // pred_check_branch
      %494 = sbr.rel (%p492) target = $region40
    $region39: #{bottleneck_forward.4} parent=5 // pred_region
      %s495 = ssub.s32 %s10, 2
      // Predicated region
      $region41: #{bottleneck_forward.4} parent=39 // pred_check
        %p496 = pneg %p102
      $region42: #{bottleneck_forward.4} parent=39 // pred_check_branch
        %498 = sbr.rel (%p496) target = $region44
      $region43: #{bottleneck_forward.4} parent=39 // pred_region
        %s499 = smul.u32 8, %s22
        %p500 = scmp.lt.s32.totalorder %s21, 1
        %s501 = scalar_select %p500, %s21, 1
        %p502 = scmp.lt.s32.totalorder %s499, 7
        %s503 = scalar_select %p502, %s499, 7
        %s504 = smul.addr %s501, 8
        %s505 = sadd.s32 %s503, %s504
        %s506 = smul.addr %s505, 4
        %s507 = scalar_lea.vmem %s2, %s506
      $region44: #{bottleneck_forward.4} parent=39 // pred_fallthru
        _
      // Predicated region
      $region45: #{bottleneck_forward.4} parent=39 // pred_check
        %p508 = pneg %p130
      $region46: #{bottleneck_forward.4} parent=39 // pred_check_branch
        %510 = sbr.rel (%p508) target = $region48
      $region47: #{bottleneck_forward.4} parent=39 // pred_region
        %p511 = scmp.lt.s32.totalorder %s21, 1
        %s512 = scalar_select %p511, %s21, 1
        %p513 = scmp.lt.s32.totalorder %s22, 0
        %s514 = scalar_select %p513, %s22, 0
        %s515 = sadd.s32 %s514, %s512
        %s516 = smul.addr %s515, 2
        %s517 = scalar_lea.vmem %s3, %s516
      $region48: #{bottleneck_forward.4} parent=39 // pred_fallthru
        _
    $region40: #{bottleneck_forward.4} parent=5 // pred_fallthru
      _
  $region6: #{bottleneck_forward.4} parent=0 // loop_footer
    %s14 = sadd.s32 1, %s10
  $region7: #{bottleneck_forward.4} parent=0 // loop_footer_branch
    %9 = sbr.rel target = $region3
  $region8: #{bottleneck_forward.4} parent=0 // loop_exit
    _

// kernel: bottleneck_forward.6
$region0: #{bottleneck_forward.6}
  #allocation0 [shape = 'u32[]', space=smem, size = 0x4, offset = 0x4, fixed_abs, tag = 'smem constant byte address 0x4 - core index']
  #allocation1 [shape = 'u32[144,128]{1,0:T(1,128)}', space=vmem, size = 0x12000, scoped, tag = 'internal scratch']
  %s0 = inlined_call_operand.vmem [shape: bf16[2,8,8,128], index: 0, kind: input, shape index: {}]
  %s1 = inlined_call_operand.vmem [shape: bf16[128,128], index: 1, kind: input, shape index: {}]
  %s2 = inlined_call_operand.vmem [shape: f32[1,128], index: 2, kind: input, shape index: {}]
  %s3 = inlined_call_operand.vmem [shape: f32[1,128], index: 3, kind: input, shape index: {}]
  %s4 = inlined_call_operand.vmem [shape: bf16[2,8,8,128], index: 4, kind: output, shape index: {0}]
  %s5 = inlined_call_operand.vmem [shape: f32[2,1,2,128], index: 5, kind: output, shape index: {1}]
  %6 = xla_tuple %s4, %s5
  %s7 = sld [smem:[#allocation0]]
  $region57: #{bottleneck_forward.6} parent=0
    _
  %s9 = ssub.s32 1, %s7
  %s10 = scalar_select 0, %s9, %s7
  loop: start=0, step=1, limit=4
  $region2: #{bottleneck_forward.6} parent=0 // loop_pre_header
    _
  $region3: #{bottleneck_forward.6} parent=0 // loop_header
    %s12 = sphi 0, %s16
    %p13 = scmp.ge.s32.totalorder %s12, 4
    %s19 = sphi 0, %s31
    %s20 = sphi 0, %s27
    %s21 = sphi 0, %s19
    %s22 = sphi 0, %s20
    %s23 = sphi 0, %s21
    %s24 = sphi 0, %s22
    %s36 = sphi 0, %s38
    %s39 = sphi 0, %s36
    %s40 = sphi 0, %s39
    %s56 = sphi 0, %s40
    %s60 = sphi 0, %s60
    %s62 = sphi 0, %s60
    %s63 = sphi 0, %s62
    %s77 = sphi 0, %s63
    %s81 = sphi 0, %s81
    %s83 = sphi 0, %s81
    %s84 = sphi 0, %s83
    %s98 = sphi 0, %s84
    %s102 = sphi 0, %s102
    %s104 = sphi 0, %s102
    %s105 = sphi 0, %s104
    %s119 = sphi 0, %s105
    %s127 = sphi 0, %s129
    %s130 = sphi 0, %s127
    %s131 = sphi 0, %s130
    %s147 = sphi 0, %s131
    %s155 = sphi 0, %s157
    %s158 = sphi 0, %s155
    %s159 = sphi 0, %s158
    %s175 = sphi 0, %s159
  $region4: #{bottleneck_forward.6} parent=0 // loop_header_branch
    %15 = sbr.rel (%p13) target = $region8
  $region5: #{bottleneck_forward.6} parent=0 // loop_body
    %s17 = ssub.s32 %s12, 1
    %s18 = ssub.s32 %s12, 2
    %s25 = sadd.s32 1, %s20
    %p26 = scmp.ge.s32.totalorder %s25, 1
    %s27 = scalar_select %p26, 0, %s25
    %s28 = sadd.s32 1, %s19
    %s29 = scalar_select %p26, %s28, %s19
    %p30 = scmp.ge.s32.totalorder %s29, 2
    %s31 = scalar_select %p30, 0, %s29
    %s32 = ssub.s32 %s19, %s31
    %s33 = ssub.s32 %s20, %s27
    %s34 = sor.u32 %s32, %s33
    %p35 = scmp.eq.s32.totalorder %s34, 0
    %s37 = sadd.s32 %s36, 1
    %s38 = scalar_select %p35, %s36, %s37
    %p41 = pneg %p35
    %p42 = scmp.eq.s32.totalorder %s12, 1
    %p43 = por %p41, %p42
    %p44 = scmp.ne.s32.totalorder %s36, %s39
    %p45 = scmp.eq.s32.totalorder %s12, 0
    %p46 = por %p44, %p45
    %p47 = scmp.ne.s32.totalorder %s36, %s39
    %p48 = scmp.eq.s32.totalorder %s17, 1
    %p49 = por %p47, %p48
    %p50 = scmp.ne.s32.totalorder %s39, %s40
    %p51 = scmp.eq.s32.totalorder %s17, 0
    %p52 = por %p50, %p51
    %p53 = scmp.ne.s32.totalorder %s39, %s40
    %p54 = scmp.eq.s32.totalorder %s18, 1
    %p55 = por %p53, %p54
    %p57 = scmp.ne.s32.totalorder %s40, %s56
    %p58 = scmp.eq.s32.totalorder %s18, 0
    %p59 = por %p57, %p58
    %s61 = sadd.s32 %s60, 1
    %p64 = scmp.eq.s32.totalorder %s12, 1
    %p65 = scmp.ne.s32.totalorder %s60, %s62
    %p66 = scmp.eq.s32.totalorder %s12, 0
    %p67 = por %p65, %p66
    %p68 = scmp.ne.s32.totalorder %s60, %s62
    %p69 = scmp.eq.s32.totalorder %s17, 1
    %p70 = por %p68, %p69
    %p71 = scmp.ne.s32.totalorder %s62, %s63
    %p72 = scmp.eq.s32.totalorder %s17, 0
    %p73 = por %p71, %p72
    %p74 = scmp.ne.s32.totalorder %s62, %s63
    %p75 = scmp.eq.s32.totalorder %s18, 1
    %p76 = por %p74, %p75
    %p78 = scmp.ne.s32.totalorder %s63, %s77
    %p79 = scmp.eq.s32.totalorder %s18, 0
    %p80 = por %p78, %p79
    %s82 = sadd.s32 %s81, 1
    %p85 = scmp.eq.s32.totalorder %s12, 1
    %p86 = scmp.ne.s32.totalorder %s81, %s83
    %p87 = scmp.eq.s32.totalorder %s12, 0
    %p88 = por %p86, %p87
    %p89 = scmp.ne.s32.totalorder %s81, %s83
    %p90 = scmp.eq.s32.totalorder %s17, 1
    %p91 = por %p89, %p90
    %p92 = scmp.ne.s32.totalorder %s83, %s84
    %p93 = scmp.eq.s32.totalorder %s17, 0
    %p94 = por %p92, %p93
    %p95 = scmp.ne.s32.totalorder %s83, %s84
    %p96 = scmp.eq.s32.totalorder %s18, 1
    %p97 = por %p95, %p96
    %p99 = scmp.ne.s32.totalorder %s84, %s98
    %p100 = scmp.eq.s32.totalorder %s18, 0
    %p101 = por %p99, %p100
    %s103 = sadd.s32 %s102, 1
    %p106 = scmp.eq.s32.totalorder %s12, 1
    %p107 = scmp.ne.s32.totalorder %s102, %s104
    %p108 = scmp.eq.s32.totalorder %s12, 0
    %p109 = por %p107, %p108
    %p110 = scmp.ne.s32.totalorder %s102, %s104
    %p111 = scmp.eq.s32.totalorder %s17, 1
    %p112 = por %p110, %p111
    %p113 = scmp.ne.s32.totalorder %s104, %s105
    %p114 = scmp.eq.s32.totalorder %s17, 0
    %p115 = por %p113, %p114
    %p116 = scmp.ne.s32.totalorder %s104, %s105
    %p117 = scmp.eq.s32.totalorder %s18, 1
    %p118 = por %p116, %p117
    %p120 = scmp.ne.s32.totalorder %s105, %s119
    %p121 = scmp.eq.s32.totalorder %s18, 0
    %p122 = por %p120, %p121
    %s123 = ssub.s32 %s19, %s31
    %s124 = ssub.s32 %s20, %s27
    %s125 = sor.u32 %s123, %s124
    %p126 = scmp.eq.s32.totalorder %s125, 0
    %s128 = sadd.s32 %s127, 1
    %s129 = scalar_select %p126, %s127, %s128
    %p132 = pneg %p126
    %p133 = scmp.eq.s32.totalorder %s12, 1
    %p134 = por %p132, %p133
    %p135 = scmp.ne.s32.totalorder %s127, %s130
    %p136 = scmp.eq.s32.totalorder %s12, 0
    %p137 = por %p135, %p136
    %p138 = scmp.ne.s32.totalorder %s127, %s130
    %p139 = scmp.eq.s32.totalorder %s17, 1
    %p140 = por %p138, %p139
    %p141 = scmp.ne.s32.totalorder %s130, %s131
    %p142 = scmp.eq.s32.totalorder %s17, 0
    %p143 = por %p141, %p142
    %p144 = scmp.ne.s32.totalorder %s130, %s131
    %p145 = scmp.eq.s32.totalorder %s18, 1
    %p146 = por %p144, %p145
    %p148 = scmp.ne.s32.totalorder %s131, %s147
    %p149 = scmp.eq.s32.totalorder %s18, 0
    %p150 = por %p148, %p149
    %s151 = ssub.s32 %s19, %s31
    %s152 = ssub.s32 %s20, %s27
    %s153 = sor.u32 %s151, %s152
    %p154 = scmp.eq.s32.totalorder %s153, 0
    %s156 = sadd.s32 %s155, 1
    %s157 = scalar_select %p154, %s155, %s156
    %p160 = pneg %p154
    %p161 = scmp.eq.s32.totalorder %s12, 1
    %p162 = por %p160, %p161
    %p163 = scmp.ne.s32.totalorder %s155, %s158
    %p164 = scmp.eq.s32.totalorder %s12, 0
    %p165 = por %p163, %p164
    %p166 = scmp.ne.s32.totalorder %s155, %s158
    %p167 = scmp.eq.s32.totalorder %s17, 1
    %p168 = por %p166, %p167
    %p169 = scmp.ne.s32.totalorder %s158, %s159
    %p170 = scmp.eq.s32.totalorder %s17, 0
    %p171 = por %p169, %p170
    %p172 = scmp.ne.s32.totalorder %s158, %s159
    %p173 = scmp.eq.s32.totalorder %s18, 1
    %p174 = por %p172, %p173
    %p176 = scmp.ne.s32.totalorder %s159, %s175
    %p177 = scmp.eq.s32.totalorder %s18, 0
    %p178 = por %p176, %p177
    %p179 = scmp.le.s32.totalorder 1, %s12
    %p180 = scmp.lt.s32.totalorder %s12, 3
    %p181 = pnand %p179, %p180
    %p182 = pneg %p181
    // Predicated region
    $region9: #{bottleneck_forward.6} parent=5 // pred_check
      _
    $region10: #{bottleneck_forward.6} parent=5 // pred_check_branch
      %184 = sbr.rel (%p181) target = $region12
    $region11: #{bottleneck_forward.6} parent=5 // pred_region
      %s185 = ssub.s32 %s12, 1
      // Predicated region
      $region13: #{bottleneck_forward.6} parent=11 // pred_check
        %p186 = pneg %p73
      $region14: #{bottleneck_forward.6} parent=11 // pred_check_branch
        %188 = sbr.rel (%p186) target = $region16
      $region15: #{bottleneck_forward.6} parent=11 // pred_region
        _
      $region16: #{bottleneck_forward.6} parent=11 // pred_fallthru
        _
      // Predicated region
      $region17: #{bottleneck_forward.6} parent=11 // pred_check
        %p189 = pneg %p94
      $region18: #{bottleneck_forward.6} parent=11 // pred_check_branch
        %191 = sbr.rel (%p189) target = $region20
      $region19: #{bottleneck_forward.6} parent=11 // pred_region
        _
      $region20: #{bottleneck_forward.6} parent=11 // pred_fallthru
        _
      // Predicated region
      $region21: #{bottleneck_forward.6} parent=11 // pred_check
        %p192 = pneg %p115
      $region22: #{bottleneck_forward.6} parent=11 // pred_check_branch
        %194 = sbr.rel (%p192) target = $region24
      $region23: #{bottleneck_forward.6} parent=11 // pred_region
        _
      $region24: #{bottleneck_forward.6} parent=11 // pred_fallthru
        _
    $region12: #{bottleneck_forward.6} parent=5 // pred_fallthru
      _
    %p195 = scmp.lt.s32.totalorder %s12, 2
    // Predicated region
    $region25: #{bottleneck_forward.6} parent=5 // pred_check
      %p196 = pneg %p195
    $region26: #{bottleneck_forward.6} parent=5 // pred_check_branch
      %198 = sbr.rel (%p196) target = $region28
    $region27: #{bottleneck_forward.6} parent=5 // pred_region
      // Predicated region
      $region29: #{bottleneck_forward.6} parent=27 // pred_check
        %p199 = pneg %p46
      $region30: #{bottleneck_forward.6} parent=27 // pred_check_branch
        %201 = sbr.rel (%p199) target = $region32
      $region31: #{bottleneck_forward.6} parent=27 // pred_region
        %s202 = smul.u32 8, %s20
        %p203 = scmp.lt.s32.totalorder %s19, 1
        %s204 = scalar_select %p203, %s19, 1
        %p205 = scmp.lt.s32.totalorder %s202, 7
        %s206 = scalar_select %p205, %s202, 7
        %s207 = smul.addr %s204, 8
        %s208 = sadd.s32 %s206, %s207
        %s209 = smul.addr %s208, 4
        %s210 = scalar_lea.vmem %s0, %s209
        %s211 = smul.u32 8, %s20
      $region32: #{bottleneck_forward.6} parent=27 // pred_fallthru
        _
    $region28: #{bottleneck_forward.6} parent=5 // pred_fallthru
      _
    %p212 = scmp.le.s32.totalorder 1, %s12
    %p213 = scmp.lt.s32.totalorder %s12, 3
    %p214 = pnand %p212, %p213
    %p215 = pneg %p214
    // Predicated region
    $region33: #{bottleneck_forward.6} parent=5 // pred_check
      _
    $region34: #{bottleneck_forward.6} parent=5 // pred_check_branch
      %217 = sbr.rel (%p214) target = $region36
    $region35: #{bottleneck_forward.6} parent=5 // pred_region
      %s218 = ssub.s32 %s12, 1
      %s219 = smul.u32 8, %s22
      %p220 = scmp.lt.s32.totalorder %s21, 1
      %s221 = scalar_select %p220, %s21, 1
      %p222 = scmp.lt.s32.totalorder %s219, 7
      %s223 = scalar_select %p222, %s219, 7
      %s224 = smul.addr %s221, 8
      %s225 = sadd.s32 %s223, %s224
      %s226 = smul.addr %s225, 4
      %s227 = scalar_lea.vmem %s0, %s226
      %p228 = pneg %p52
      %p229 = pneg %p49
      %p230 = pneg %p73
      %p231 = pneg %p70
      %p232 = pneg %p94
      %p233 = pneg %p91
      %p234 = pneg %p115
      %p235 = pneg %p112
      %p236 = pneg %p143
      %p237 = pneg %p140
      %s238 = smul.u32 8, %s22
      %p239 = scmp.lt.s32.totalorder %s21, 1
      %s240 = scalar_select %p239, %s21, 1
      %p241 = scmp.lt.s32.totalorder %s238, 7
      %s242 = scalar_select %p241, %s238, 7
      %s243 = smul.addr %s240, 8
      %s244 = sadd.s32 %s242, %s243
      %s245 = smul.addr %s244, 4
      %s246 = scalar_lea.vmem %s4, %s245
      %p247 = pneg %p171
      %p248 = pneg %p168
      %p249 = scmp.lt.s32.totalorder %s21, 1
      %s250 = scalar_select %p249, %s21, 1
      %p251 = scmp.lt.s32.totalorder %s22, 0
      %s252 = scalar_select %p251, %s22, 0
      %s253 = sadd.s32 %s252, %s250
      %s254 = smul.addr %s253, 2
      %s255 = scalar_lea.vmem %s5, %s254
      %s256 = smul.u32 8, %s22
      %p257 = scmp.lt.s32.totalorder %s21, 1
      %s258 = scalar_select %p257, %s21, 1
      %p259 = scmp.lt.s32.totalorder %s256, 7
      %s260 = scalar_select %p259, %s256, 7
      %s261 = smul.addr %s258, 8
      %s262 = sadd.s32 %s260, %s261
      %s263 = smul.addr %s262, 4
      %s264 = scalar_lea.vmem %s0, %s263
      %s265 = smul.u32 8, %s22
      %s266 = smul.u32 8, %s22
      %p267 = scmp.lt.s32.totalorder %s21, 1
      %s268 = scalar_select %p267, %s21, 1
      %p269 = scmp.lt.s32.totalorder %s266, 7
      %s270 = scalar_select %p269, %s266, 7
      %s271 = smul.addr %s268, 8
      %s272 = sadd.s32 %s270, %s271
      %s273 = smul.addr %s272, 4
      %s274 = scalar_lea.vmem %s4, %s273
      %s275 = smul.u32 8, %s22
      %p276 = scmp.lt.s32.totalorder %s21, 1
      %s277 = scalar_select %p276, %s21, 1
      %p278 = scmp.lt.s32.totalorder %s22, 0
      %s279 = scalar_select %p278, %s22, 0
      %s280 = sadd.s32 %s279, %s277
      %s281 = smul.addr %s280, 2
      %s282 = scalar_lea.vmem %s5, %s281
      %v284 = vld [vmem:[%s264] sm:$0xf]
      %v285 = vld [vmem:[%s264 + $0x4] sm:$0xf]
      %v286 = vld [vmem:[%s264 + $0x8] sm:$0xf]
      %v287 = vld [vmem:[%s264 + $0xc] sm:$0xf]
      %v288 = vld [vmem:[%s264 + $0x10] sm:$0xf]
      %v289 = vld [vmem:[%s264 + $0x14] sm:$0xf]
      %v290 = vld [vmem:[%s264 + $0x18] sm:$0xf]
      %v291 = vld [vmem:[%s264 + $0x1c] sm:$0xf]
      %v292 = vunpack.c.l.bf16 %v284
      %v293 = vunpack.c.l.bf16 %v285
      %v294 = vunpack.c.l.bf16 %v286
      %v295 = vunpack.c.l.bf16 %v287
      %v296 = vunpack.c.l.bf16 %v288
      %v297 = vunpack.c.l.bf16 %v289
      %v298 = vunpack.c.l.bf16 %v290
      %v299 = vunpack.c.l.bf16 %v291
      %v300 = vld [vmem:[%s2] sm:$0x1]
      %v302 = vlaneseq
      %v303 = vshrl.u32 %v302, 7
      %v304 = vsub.s32 0, %v303
      %v305 = vrot.slane %v300, %v304
      %v307 = vmul.f32 %v292, %v305
      %v308 = vmul.f32 %v293, %v305
      %v309 = vmul.f32 %v294, %v305
      %v310 = vmul.f32 %v295, %v305
      %v311 = vmul.f32 %v296, %v305
      %v312 = vmul.f32 %v297, %v305
      %v313 = vmul.f32 %v298, %v305
      %v314 = vmul.f32 %v299, %v305
      %v315 = vld [vmem:[%s3] sm:$0x1]
      %v317 = vlaneseq
      %v318 = vshrl.u32 %v317, 7
      %v319 = vsub.s32 0, %v318
      %v320 = vrot.slane %v315, %v319
      %v322 = vadd.f32 %v307, %v320
      %v323 = vadd.f32 %v308, %v320
      %v324 = vadd.f32 %v309, %v320
      %v325 = vadd.f32 %v310, %v320
      %v326 = vadd.f32 %v311, %v320
      %v327 = vadd.f32 %v312, %v320
      %v328 = vadd.f32 %v313, %v320
      %v329 = vadd.f32 %v314, %v320
      %v330 = vmax.f32 %v322, 0.0
      %v331 = vmax.f32 %v323, 0.0
      %v332 = vmax.f32 %v324, 0.0
      %v333 = vmax.f32 %v325, 0.0
      %v334 = vmax.f32 %v326, 0.0
      %v335 = vmax.f32 %v327, 0.0
      %v336 = vmax.f32 %v328, 0.0
      %v337 = vmax.f32 %v329, 0.0
      %v338 = vpack.c.bf16 %v331, %v330
      %v339 = vpack.c.bf16 %v333, %v332
      %v340 = vpack.c.bf16 %v335, %v334
      %v341 = vpack.c.bf16 %v337, %v336
      %v342 = vld [vmem:[%s1] sm:$0xf]
      %v343 = vld [vmem:[%s1 + $0x4] sm:$0xf]
      %v344 = vld [vmem:[%s1 + $0x8] sm:$0xf]
      %v345 = vld [vmem:[%s1 + $0xc] sm:$0xf]
      %v346 = vld [vmem:[%s1 + $0x10] sm:$0xf]
      %v347 = vld [vmem:[%s1 + $0x14] sm:$0xf]
      %v348 = vld [vmem:[%s1 + $0x18] sm:$0xf]
      %v349 = vld [vmem:[%s1 + $0x1c] sm:$0xf]
      %v350 = vld [vmem:[%s1 + $0x20] sm:$0xf]
      %v351 = vld [vmem:[%s1 + $0x24] sm:$0xf]
      %v352 = vld [vmem:[%s1 + $0x28] sm:$0xf]
      %v353 = vld [vmem:[%s1 + $0x2c] sm:$0xf]
      %v354 = vld [vmem:[%s1 + $0x30] sm:$0xf]
      %v355 = vld [vmem:[%s1 + $0x34] sm:$0xf]
      %v356 = vld [vmem:[%s1 + $0x38] sm:$0xf]
      %v357 = vld [vmem:[%s1 + $0x3c] sm:$0xf]
      %v374 = vunpack.c.l.b16 %v342
      %v375 = vunpack.c.l.b16 %v343
      %v376 = vunpack.c.l.b16 %v344
      %v377 = vunpack.c.l.b16 %v345
      %v378 = vunpack.c.l.b16 %v346
      %v379 = vunpack.c.l.b16 %v347
      %v380 = vunpack.c.l.b16 %v348
      %v381 = vunpack.c.l.b16 %v349
      %v382 = vunpack.c.l.b16 %v350
      %v383 = vunpack.c.l.b16 %v351
      %v384 = vunpack.c.l.b16 %v352
      %v385 = vunpack.c.l.b16 %v353
      %v386 = vunpack.c.l.b16 %v354
      %v387 = vunpack.c.l.b16 %v355
      %v388 = vunpack.c.l.b16 %v356
      %v389 = vunpack.c.l.b16 %v357
      %v390 = vpack.c.b16 %v375, %v374
      %v391 = vpack.c.b16 %v377, %v376
      %v392 = vpack.c.b16 %v379, %v378
      %v393 = vpack.c.b16 %v381, %v380
      %v394 = vpack.c.b16 %v383, %v382
      %v395 = vpack.c.b16 %v385, %v384
      %v396 = vpack.c.b16 %v387, %v386
      %v397 = vpack.c.b16 %v389, %v388
      %406 = vmatprep.subr.bf16.mxu0 0
      %407 = vmatpush1.bf16.msra.mxu0 %v397
      %408 = vmatprep.subr.bf16.mxu0 0
      %409 = vmatpush1.bf16.msra.mxu0 %v396
      %410 = vmatprep.subr.bf16.mxu0 0
      %411 = vmatpush1.bf16.msra.mxu0 %v395
      %412 = vmatprep.subr.bf16.mxu0 0
      %413 = vmatpush1.bf16.msra.mxu0 %v394
      %414 = vmatprep.subr.bf16.mxu0 0
      %415 = vmatpush1.bf16.msra.mxu0 %v393
      %416 = vmatprep.subr.bf16.mxu0 0
      %417 = vmatpush1.bf16.msra.mxu0 %v392
      %418 = vmatprep.subr.bf16.mxu0 0
      %419 = vmatpush1.bf16.msra.mxu0 %v391
      %420 = vmatprep.subr.bf16.mxu0 0
      %421 = vmatpush1.bf16.msra.mxu0 %v390
      %422 = vmatprep.subr.bf16.mxu0 0
      %423 = vmatpush2.bf16.msra.mxu0 0
      %424 = vmatprep.subr.bf16.mxu0 0
      %425 = vmatpush2.bf16.msra.mxu0 0
      %426 = vmatprep.subr.bf16.mxu0 0
      %427 = vmatpush2.bf16.msra.mxu0 0
      %428 = vmatprep.subr.bf16.mxu0 0
      %429 = vmatpush2.bf16.msra.mxu0 0
      %430 = vmatprep.subr.bf16.mxu0 0
      %431 = vmatpush2.bf16.msra.mxu0 0
      %432 = vmatprep.subr.bf16.mxu0 0
      %433 = vmatpush2.bf16.msra.mxu0 0
      %434 = vmatprep.subr.bf16.mxu0 0
      %435 = vmatpush2.bf16.msra.mxu0 0
      %436 = vmatprep.subr.bf16.mxu0 0
      %437 = vmatpush2.bf16.msra.mxu0 0
      %438 = vmatprep.mubr.bf16.mxu0 0
      %439 = vmatmul.mubr.bf16.gmra.mxu0 %v338
      %v440 = vpop.f32.mrf.mxu0
      %v441 = vadd.f32 0.0, %v440
      %v442 = vpop.f32.mrf.mxu0
      %v443 = vpop.f32.mrf.mxu0
      %v444 = vadd.f32 0.0, %v443
      %v445 = vpop.f32.mrf.mxu0
      %446 = vmatprep.mubr.bf16.mxu0 0
      %447 = vmatmul.mubr.bf16.gmra.mxu0 %v339
      %v448 = vpop.f32.mrf.mxu0
      %v449 = vadd.f32 0.0, %v448
      %v450 = vpop.f32.mrf.mxu0
      %v451 = vpop.f32.mrf.mxu0
      %v452 = vadd.f32 0.0, %v451
      %v453 = vpop.f32.mrf.mxu0
      %454 = vmatprep.mubr.bf16.mxu0 0
      %455 = vmatmul.mubr.bf16.gmra.mxu0 %v340
      %v456 = vpop.f32.mrf.mxu0
      %v457 = vadd.f32 0.0, %v456
      %v458 = vpop.f32.mrf.mxu0
      %v459 = vpop.f32.mrf.mxu0
      %v460 = vadd.f32 0.0, %v459
      %v461 = vpop.f32.mrf.mxu0
      %462 = vmatprep.mubr.bf16.mxu0 0
      %463 = vmatmul.mubr.bf16.gmra.mxu0 %v341
      %v464 = vpop.f32.mrf.mxu0
      %v465 = vadd.f32 0.0, %v464
      %v466 = vpop.f32.mrf.mxu0
      %v467 = vpop.f32.mrf.mxu0
      %v468 = vadd.f32 0.0, %v467
      %v469 = vpop.f32.mrf.mxu0
      %470 = vdwg.mxu0
      %v471 = vadd.f32 %v441, %v444
      %v472 = vadd.f32 %v471, %v449
      %v473 = vadd.f32 %v472, %v452
      %v474 = vadd.f32 %v473, %v457
      %v475 = vadd.f32 %v474, %v460
      %v476 = vadd.f32 %v475, %v465
      %v477 = vadd.f32 %v476, %v468
      %v478 = vrot.slane %v477, 4
      %v479 = vadd.f32 %v477, %v478
      %v480 = vrot.slane %v479, 2
      %v481 = vadd.f32 %v479, %v480
      %v482 = vrot.slane %v481, 1
      %v483 = vadd.f32 %v481, %v482
      %v484 = vmul.f32 %v441, %v441
      %v485 = vmul.f32 %v444, %v444
      %v486 = vmul.f32 %v449, %v449
      %v487 = vmul.f32 %v452, %v452
      %v488 = vmul.f32 %v457, %v457
      %v489 = vmul.f32 %v460, %v460
      %v490 = vmul.f32 %v465, %v465
      %v491 = vmul.f32 %v468, %v468
      %v492 = vadd.f32 %v484, %v485
      %v493 = vadd.f32 %v492, %v486
      %v494 = vadd.f32 %v493, %v487
      %v495 = vadd.f32 %v494, %v488
      %v496 = vadd.f32 %v495, %v489
      %v497 = vadd.f32 %v496, %v490
      %v498 = vadd.f32 %v497, %v491
      %v499 = vrot.slane %v498, 4
      %v500 = vadd.f32 %v498, %v499
      %v501 = vrot.slane %v500, 2
      %v502 = vadd.f32 %v500, %v501
      %v503 = vrot.slane %v502, 1
      %v504 = vadd.f32 %v502, %v503
      %vm505 = vcmask 1040384
      %v506 = vsel %vm505, %v483, %v504
      %507 = vst [vmem:[%s282] sm:$0x3] %v506
      %v508 = vpack.c.bf16 %v444, %v441
      %v509 = vpack.c.bf16 %v452, %v449
      %v510 = vpack.c.bf16 %v460, %v457
      %v511 = vpack.c.bf16 %v468, %v465
      %v516 = vunpack.c.l.b16 %v508
      %v517 = vunpack.c.h.b16 %v508
      %v518 = vunpack.c.l.b16 %v509
      %v519 = vunpack.c.h.b16 %v509
      %v520 = vunpack.c.l.b16 %v510
      %v521 = vunpack.c.h.b16 %v510
      %v522 = vunpack.c.l.b16 %v511
      %v523 = vunpack.c.h.b16 %v511
      %v524 = vpack.c.b16 %v516, %v516
      %v525 = vpack.c.b16 %v517, %v517
      %v526 = vpack.c.b16 %v518, %v518
      %v527 = vpack.c.b16 %v519, %v519
      %v528 = vpack.c.b16 %v520, %v520
      %v529 = vpack.c.b16 %v521, %v521
      %v530 = vpack.c.b16 %v522, %v522
      %v531 = vpack.c.b16 %v523, %v523
      %540 = vst [vmem:[%s274] sm:$0xf] %v524
      %541 = vst [vmem:[%s274 + $0x4] sm:$0xf] %v525
      %542 = vst [vmem:[%s274 + $0x8] sm:$0xf] %v526
      %543 = vst [vmem:[%s274 + $0xc] sm:$0xf] %v527
      %544 = vst [vmem:[%s274 + $0x10] sm:$0xf] %v528
      %545 = vst [vmem:[%s274 + $0x14] sm:$0xf] %v529
      %546 = vst [vmem:[%s274 + $0x18] sm:$0xf] %v530
      %547 = vst [vmem:[%s274 + $0x1c] sm:$0xf] %v531
      %s548 = smul.u32 8, %s22
      %p549 = scmp.lt.s32.totalorder %s21, 1
      %s550 = scalar_select %p549, %s21, 1
      %p551 = scmp.lt.s32.totalorder %s548, 7
      %s552 = scalar_select %p551, %s548, 7
      %s553 = smul.addr %s550, 8
      %s554 = sadd.s32 %s552, %s553
      %s555 = smul.addr %s554, 4
      %s556 = scalar_lea.vmem %s4, %s555
      %p557 = scmp.lt.s32.totalorder %s21, 1
      %s558 = scalar_select %p557, %s21, 1
      %p559 = scmp.lt.s32.totalorder %s22, 0
      %s560 = scalar_select %p559, %s22, 0
      %s561 = sadd.s32 %s560, %s558
      %s562 = smul.addr %s561, 2
      %s563 = scalar_lea.vmem %s5, %s562
      // Predicated region
      $region37: #{bottleneck_forward.6} parent=35 // pred_check
        %p564 = pneg %p140
      $region38: #{bottleneck_forward.6} parent=35 // pred_check_branch
        %566 = sbr.rel (%p564) target = $region40
      $region39: #{bottleneck_forward.6} parent=35 // pred_region
        %s567 = smul.u32 8, %s22
      $region40: #{bottleneck_forward.6} parent=35 // pred_fallthru
        _
      // Predicated region
      $region41: #{bottleneck_forward.6} parent=35 // pred_check
        %p568 = pneg %p168
      $region42: #{bottleneck_forward.6} parent=35 // pred_check_branch
        %570 = sbr.rel (%p568) target = $region44
      $region43: #{bottleneck_forward.6} parent=35 // pred_region
        _
      $region44: #{bottleneck_forward.6} parent=35 // pred_fallthru
        _
    $region36: #{bottleneck_forward.6} parent=5 // pred_fallthru
      _
    %p571 = scmp.le.s32.totalorder 2, %s12
    // Predicated region
    $region45: #{bottleneck_forward.6} parent=5 // pred_check
      %p572 = pneg %p571
    $region46: #{bottleneck_forward.6} parent=5 // pred_check_branch
      %574 = sbr.rel (%p572) target = $region48
    $region47: #{bottleneck_forward.6} parent=5 // pred_region
      %s575 = ssub.s32 %s12, 2
      // Predicated region
      $region49: #{bottleneck_forward.6} parent=47 // pred_check
        %p576 = pneg %p146
      $region50: #{bottleneck_forward.6} parent=47 // pred_check_branch
        %578 = sbr.rel (%p576) target = $region52
      $region51: #{bottleneck_forward.6} parent=47 // pred_region
        %s579 = smul.u32 8, %s24
        %p580 = scmp.lt.s32.totalorder %s23, 1
        %s581 = scalar_select %p580, %s23, 1
        %p582 = scmp.lt.s32.totalorder %s579, 7
        %s583 = scalar_select %p582, %s579, 7
        %s584 = smul.addr %s581, 8
        %s585 = sadd.s32 %s583, %s584
        %s586 = smul.addr %s585, 4
        %s587 = scalar_lea.vmem %s4, %s586
      $region52: #{bottleneck_forward.6} parent=47 // pred_fallthru
        _
      // Predicated region
      $region53: #{bottleneck_forward.6} parent=47 // pred_check
        %p588 = pneg %p174
      $region54: #{bottleneck_forward.6} parent=47 // pred_check_branch
        %590 = sbr.rel (%p588) target = $region56
      $region55: #{bottleneck_forward.6} parent=47 // pred_region
        %p591 = scmp.lt.s32.totalorder %s23, 1
        %s592 = scalar_select %p591, %s23, 1
        %p593 = scmp.lt.s32.totalorder %s24, 0
        %s594 = scalar_select %p593, %s24, 0
        %s595 = sadd.s32 %s594, %s592
        %s596 = smul.addr %s595, 2
        %s597 = scalar_lea.vmem %s5, %s596
      $region56: #{bottleneck_forward.6} parent=47 // pred_fallthru
        _
    $region48: #{bottleneck_forward.6} parent=5 // pred_fallthru
      _
  $region6: #{bottleneck_forward.6} parent=0 // loop_footer
    %s16 = sadd.s32 1, %s12
  $region7: #{bottleneck_forward.6} parent=0 // loop_footer_branch
    %11 = sbr.rel target = $region3
  $region8: #{bottleneck_forward.6} parent=0 // loop_exit
    _

// kernel: bottleneck_forward.5
$region0: #{bottleneck_forward.5}
  #allocation0 [shape = 'u32[]', space=smem, size = 0x4, offset = 0x4, fixed_abs, tag = 'smem constant byte address 0x4 - core index']
  #allocation1 [shape = 'u32[144,128]{1,0:T(1,128)}', space=vmem, size = 0x12000, scoped, tag = 'internal scratch']
  %s0 = inlined_call_operand.vmem [shape: bf16[2,8,8,128], index: 0, kind: input, shape index: {}]
  %s1 = inlined_call_operand.vmem [shape: bf16[1152,128], index: 1, kind: input, shape index: {}]
  %s2 = inlined_call_operand.vmem [shape: f32[1,128], index: 2, kind: input, shape index: {}]
  %s3 = inlined_call_operand.vmem [shape: f32[1,128], index: 3, kind: input, shape index: {}]
  %s4 = inlined_call_operand.vmem [shape: bf16[2,8,8,128], index: 4, kind: output, shape index: {0}]
  %s5 = inlined_call_operand.vmem [shape: f32[2,2,128], index: 5, kind: output, shape index: {1}]
  %6 = xla_tuple %s4, %s5
  %s7 = sld [smem:[#allocation0]]
  $region57: #{bottleneck_forward.5} parent=0
    _
  %s9 = ssub.s32 1, %s7
  %s10 = scalar_select 0, %s9, %s7
  loop: start=0, step=1, limit=4
  $region2: #{bottleneck_forward.5} parent=0 // loop_pre_header
    _
  $region3: #{bottleneck_forward.5} parent=0 // loop_header
    %s12 = sphi 0, %s16
    %p13 = scmp.ge.s32.totalorder %s12, 4
    %s22 = sphi 0, %s24
    %s25 = sphi 0, %s22
    %s26 = sphi 0, %s25
    %s42 = sphi 0, %s26
    %s46 = sphi 0, %s46
    %s48 = sphi 0, %s46
    %s49 = sphi 0, %s48
    %s63 = sphi 0, %s49
    %s67 = sphi 0, %s67
    %s69 = sphi 0, %s67
    %s70 = sphi 0, %s69
    %s84 = sphi 0, %s70
    %s88 = sphi 0, %s88
    %s90 = sphi 0, %s88
    %s91 = sphi 0, %s90
    %s105 = sphi 0, %s91
    %s111 = sphi 0, %s113
    %s114 = sphi 0, %s111
    %s115 = sphi 0, %s114
    %s131 = sphi 0, %s115
    %s137 = sphi 0, %s139
    %s140 = sphi 0, %s137
    %s141 = sphi 0, %s140
    %s157 = sphi 0, %s141
  $region4: #{bottleneck_forward.5} parent=0 // loop_header_branch
    %15 = sbr.rel (%p13) target = $region8
  $region5: #{bottleneck_forward.5} parent=0 // loop_body
    %s17 = ssub.s32 %s12, 1
    %s18 = ssub.s32 %s12, 2
    %s19 = sadd.s32 %s12, 1
    %s20 = ssub.s32 %s12, %s19
    %p21 = scmp.eq.s32.totalorder %s20, 0
    %s23 = sadd.s32 %s22, 1
    %s24 = scalar_select %p21, %s22, %s23
    %p27 = pneg %p21
    %p28 = scmp.eq.s32.totalorder %s12, 1
    %p29 = por %p27, %p28
    %p30 = scmp.ne.s32.totalorder %s22, %s25
    %p31 = scmp.eq.s32.totalorder %s12, 0
    %p32 = por %p30, %p31
    %p33 = scmp.ne.s32.totalorder %s22, %s25
    %p34 = scmp.eq.s32.totalorder %s17, 1
    %p35 = por %p33, %p34
    %p36 = scmp.ne.s32.totalorder %s25, %s26
    %p37 = scmp.eq.s32.totalorder %s17, 0
    %p38 = por %p36, %p37
    %p39 = scmp.ne.s32.totalorder %s25, %s26
    %p40 = scmp.eq.s32.totalorder %s18, 1
    %p41 = por %p39, %p40
    %p43 = scmp.ne.s32.totalorder %s26, %s42
    %p44 = scmp.eq.s32.totalorder %s18, 0
    %p45 = por %p43, %p44
    %s47 = sadd.s32 %s46, 1
    %p50 = scmp.eq.s32.totalorder %s12, 1
    %p51 = scmp.ne.s32.totalorder %s46, %s48
    %p52 = scmp.eq.s32.totalorder %s12, 0
    %p53 = por %p51, %p52
    %p54 = scmp.ne.s32.totalorder %s46, %s48
    %p55 = scmp.eq.s32.totalorder %s17, 1
    %p56 = por %p54, %p55
    %p57 = scmp.ne.s32.totalorder %s48, %s49
    %p58 = scmp.eq.s32.totalorder %s17, 0
    %p59 = por %p57, %p58
    %p60 = scmp.ne.s32.totalorder %s48, %s49
    %p61 = scmp.eq.s32.totalorder %s18, 1
    %p62 = por %p60, %p61
    %p64 = scmp.ne.s32.totalorder %s49, %s63
    %p65 = scmp.eq.s32.totalorder %s18, 0
    %p66 = por %p64, %p65
    %s68 = sadd.s32 %s67, 1
    %p71 = scmp.eq.s32.totalorder %s12, 1
    %p72 = scmp.ne.s32.totalorder %s67, %s69
    %p73 = scmp.eq.s32.totalorder %s12, 0
    %p74 = por %p72, %p73
    %p75 = scmp.ne.s32.totalorder %s67, %s69
    %p76 = scmp.eq.s32.totalorder %s17, 1
    %p77 = por %p75, %p76
    %p78 = scmp.ne.s32.totalorder %s69, %s70
    %p79 = scmp.eq.s32.totalorder %s17, 0
    %p80 = por %p78, %p79
    %p81 = scmp.ne.s32.totalorder %s69, %s70
    %p82 = scmp.eq.s32.totalorder %s18, 1
    %p83 = por %p81, %p82
    %p85 = scmp.ne.s32.totalorder %s70, %s84
    %p86 = scmp.eq.s32.totalorder %s18, 0
    %p87 = por %p85, %p86
    %s89 = sadd.s32 %s88, 1
    %p92 = scmp.eq.s32.totalorder %s12, 1
    %p93 = scmp.ne.s32.totalorder %s88, %s90
    %p94 = scmp.eq.s32.totalorder %s12, 0
    %p95 = por %p93, %p94
    %p96 = scmp.ne.s32.totalorder %s88, %s90
    %p97 = scmp.eq.s32.totalorder %s17, 1
    %p98 = por %p96, %p97
    %p99 = scmp.ne.s32.totalorder %s90, %s91
    %p100 = scmp.eq.s32.totalorder %s17, 0
    %p101 = por %p99, %p100
    %p102 = scmp.ne.s32.totalorder %s90, %s91
    %p103 = scmp.eq.s32.totalorder %s18, 1
    %p104 = por %p102, %p103
    %p106 = scmp.ne.s32.totalorder %s91, %s105
    %p107 = scmp.eq.s32.totalorder %s18, 0
    %p108 = por %p106, %p107
    %s109 = ssub.s32 %s12, %s19
    %p110 = scmp.eq.s32.totalorder %s109, 0
    %s112 = sadd.s32 %s111, 1
    %s113 = scalar_select %p110, %s111, %s112
    %p116 = pneg %p110
    %p117 = scmp.eq.s32.totalorder %s12, 1
    %p118 = por %p116, %p117
    %p119 = scmp.ne.s32.totalorder %s111, %s114
    %p120 = scmp.eq.s32.totalorder %s12, 0
    %p121 = por %p119, %p120
    %p122 = scmp.ne.s32.totalorder %s111, %s114
    %p123 = scmp.eq.s32.totalorder %s17, 1
    %p124 = por %p122, %p123
    %p125 = scmp.ne.s32.totalorder %s114, %s115
    %p126 = scmp.eq.s32.totalorder %s17, 0
    %p127 = por %p125, %p126
    %p128 = scmp.ne.s32.totalorder %s114, %s115
    %p129 = scmp.eq.s32.totalorder %s18, 1
    %p130 = por %p128, %p129
    %p132 = scmp.ne.s32.totalorder %s115, %s131
    %p133 = scmp.eq.s32.totalorder %s18, 0
    %p134 = por %p132, %p133
    %s135 = ssub.s32 %s12, %s19
    %p136 = scmp.eq.s32.totalorder %s135, 0
    %s138 = sadd.s32 %s137, 1
    %s139 = scalar_select %p136, %s137, %s138
    %p142 = pneg %p136
    %p143 = scmp.eq.s32.totalorder %s12, 1
    %p144 = por %p142, %p143
    %p145 = scmp.ne.s32.totalorder %s137, %s140
    %p146 = scmp.eq.s32.totalorder %s12, 0
    %p147 = por %p145, %p146
    %p148 = scmp.ne.s32.totalorder %s137, %s140
    %p149 = scmp.eq.s32.totalorder %s17, 1
    %p150 = por %p148, %p149
    %p151 = scmp.ne.s32.totalorder %s140, %s141
    %p152 = scmp.eq.s32.totalorder %s17, 0
    %p153 = por %p151, %p152
    %p154 = scmp.ne.s32.totalorder %s140, %s141
    %p155 = scmp.eq.s32.totalorder %s18, 1
    %p156 = por %p154, %p155
    %p158 = scmp.ne.s32.totalorder %s141, %s157
    %p159 = scmp.eq.s32.totalorder %s18, 0
    %p160 = por %p158, %p159
    %p161 = scmp.le.s32.totalorder 1, %s12
    %p162 = scmp.lt.s32.totalorder %s12, 3
    %p163 = pnand %p161, %p162
    %p164 = pneg %p163
    // Predicated region
    $region9: #{bottleneck_forward.5} parent=5 // pred_check
      _
    $region10: #{bottleneck_forward.5} parent=5 // pred_check_branch
      %166 = sbr.rel (%p163) target = $region12
    $region11: #{bottleneck_forward.5} parent=5 // pred_region
      %s167 = ssub.s32 %s12, 1
      // Predicated region
      $region13: #{bottleneck_forward.5} parent=11 // pred_check
        %p168 = pneg %p59
      $region14: #{bottleneck_forward.5} parent=11 // pred_check_branch
        %170 = sbr.rel (%p168) target = $region16
      $region15: #{bottleneck_forward.5} parent=11 // pred_region
        _
      $region16: #{bottleneck_forward.5} parent=11 // pred_fallthru
        _
      // Predicated region
      $region17: #{bottleneck_forward.5} parent=11 // pred_check
        %p171 = pneg %p80
      $region18: #{bottleneck_forward.5} parent=11 // pred_check_branch
        %173 = sbr.rel (%p171) target = $region20
      $region19: #{bottleneck_forward.5} parent=11 // pred_region
        _
      $region20: #{bottleneck_forward.5} parent=11 // pred_fallthru
        _
      // Predicated region
      $region21: #{bottleneck_forward.5} parent=11 // pred_check
        %p174 = pneg %p101
      $region22: #{bottleneck_forward.5} parent=11 // pred_check_branch
        %176 = sbr.rel (%p174) target = $region24
      $region23: #{bottleneck_forward.5} parent=11 // pred_region
        _
      $region24: #{bottleneck_forward.5} parent=11 // pred_fallthru
        _
    $region12: #{bottleneck_forward.5} parent=5 // pred_fallthru
      _
    %p177 = scmp.lt.s32.totalorder %s12, 2
    // Predicated region
    $region25: #{bottleneck_forward.5} parent=5 // pred_check
      %p178 = pneg %p177
    $region26: #{bottleneck_forward.5} parent=5 // pred_check_branch
      %180 = sbr.rel (%p178) target = $region28
    $region27: #{bottleneck_forward.5} parent=5 // pred_region
      // Predicated region
      $region29: #{bottleneck_forward.5} parent=27 // pred_check
        %p181 = pneg %p32
      $region30: #{bottleneck_forward.5} parent=27 // pred_check_branch
        %183 = sbr.rel (%p181) target = $region32
      $region31: #{bottleneck_forward.5} parent=27 // pred_region
        %p184 = scmp.lt.s32.totalorder %s12, 1
        %s185 = scalar_select %p184, %s12, 1
        %s186 = smul.addr %s185, 8
        %s187 = smul.addr %s186, 4
        %s188 = scalar_lea.vmem %s0, %s187
      $region32: #{bottleneck_forward.5} parent=27 // pred_fallthru
        _
    $region28: #{bottleneck_forward.5} parent=5 // pred_fallthru
      _
    %p189 = scmp.le.s32.totalorder 1, %s12
    %p190 = scmp.lt.s32.totalorder %s12, 3
    %p191 = pnand %p189, %p190
    %p192 = pneg %p191
    // Predicated region
    $region33: #{bottleneck_forward.5} parent=5 // pred_check
      _
    $region34: #{bottleneck_forward.5} parent=5 // pred_check_branch
      %194 = sbr.rel (%p191) target = $region36
    $region35: #{bottleneck_forward.5} parent=5 // pred_region
      %s195 = ssub.s32 %s12, 1
      %p196 = scmp.lt.s32.totalorder %s17, 1
      %s197 = scalar_select %p196, %s17, 1
      %s198 = smul.addr %s197, 8
      %s199 = smul.addr %s198, 4
      %s200 = scalar_lea.vmem %s0, %s199
      %p201 = pneg %p38
      %p202 = pneg %p35
      %p203 = pneg %p59
      %p204 = pneg %p56
      %p205 = pneg %p80
      %p206 = pneg %p77
      %p207 = pneg %p101
      %p208 = pneg %p98
      %p209 = pneg %p127
      %p210 = pneg %p124
      %p211 = scmp.lt.s32.totalorder %s17, 1
      %s212 = scalar_select %p211, %s17, 1
      %s213 = smul.addr %s212, 8
      %s214 = smul.addr %s213, 4
      %s215 = scalar_lea.vmem %s4, %s214
      %p216 = pneg %p153
      %p217 = pneg %p150
      %p218 = scmp.lt.s32.totalorder %s17, 1
      %s219 = scalar_select %p218, %s17, 1
      %s220 = smul.addr %s219, 2
      %s221 = scalar_lea.vmem %s5, %s220
      %p222 = scmp.lt.s32.totalorder %s17, 1
      %s223 = scalar_select %p222, %s17, 1
      %s224 = smul.addr %s223, 8
      %s225 = smul.addr %s224, 4
      %s226 = scalar_lea.vmem %s0, %s225
      %p227 = scmp.lt.s32.totalorder %s17, 1
      %s228 = scalar_select %p227, %s17, 1
      %s229 = smul.addr %s228, 8
      %s230 = smul.addr %s229, 4
      %s231 = scalar_lea.vmem %s4, %s230
      %p232 = scmp.lt.s32.totalorder %s17, 1
      %s233 = scalar_select %p232, %s17, 1
      %s234 = smul.addr %s233, 2
      %s235 = scalar_lea.vmem %s5, %s234
      %v237 = vld [vmem:[%s226] sm:$0xf]
      %v238 = vld [vmem:[%s226 + $0x4] sm:$0xf]
      %v239 = vld [vmem:[%s226 + $0x8] sm:$0xf]
      %v240 = vld [vmem:[%s226 + $0xc] sm:$0xf]
      %v241 = vld [vmem:[%s226 + $0x10] sm:$0xf]
      %v242 = vld [vmem:[%s226 + $0x14] sm:$0xf]
      %v243 = vld [vmem:[%s226 + $0x18] sm:$0xf]
      %v244 = vld [vmem:[%s226 + $0x1c] sm:$0xf]
      %v245 = vunpack.c.l.bf16 %v237
      %v246 = vunpack.c.l.bf16 %v238
      %v247 = vunpack.c.l.bf16 %v239
      %v248 = vunpack.c.l.bf16 %v240
      %v249 = vunpack.c.l.bf16 %v241
      %v250 = vunpack.c.l.bf16 %v242
      %v251 = vunpack.c.l.bf16 %v243
      %v252 = vunpack.c.l.bf16 %v244
      %v253 = vld [vmem:[%s2] sm:$0x1]
      %v255 = vlaneseq
      %v256 = vshrl.u32 %v255, 7
      %v257 = vsub.s32 0, %v256
      %v258 = vrot.slane %v253, %v257
      %v260 = vmul.f32 %v245, %v258
      %v261 = vmul.f32 %v246, %v258
      %v262 = vmul.f32 %v247, %v258
      %v263 = vmul.f32 %v248, %v258
      %v264 = vmul.f32 %v249, %v258
      %v265 = vmul.f32 %v250, %v258
      %v266 = vmul.f32 %v251, %v258
      %v267 = vmul.f32 %v252, %v258
      %v268 = vld [vmem:[%s3] sm:$0x1]
      %v270 = vlaneseq
      %v271 = vshrl.u32 %v270, 7
      %v272 = vsub.s32 0, %v271
      %v273 = vrot.slane %v268, %v272
      %v275 = vadd.f32 %v260, %v273
      %v276 = vadd.f32 %v261, %v273
      %v277 = vadd.f32 %v262, %v273
      %v278 = vadd.f32 %v263, %v273
      %v279 = vadd.f32 %v264, %v273
      %v280 = vadd.f32 %v265, %v273
      %v281 = vadd.f32 %v266, %v273
      %v282 = vadd.f32 %v267, %v273
      %v283 = vmax.f32 %v275, 0.0
      %v284 = vmax.f32 %v276, 0.0
      %v285 = vmax.f32 %v277, 0.0
      %v286 = vmax.f32 %v278, 0.0
      %v287 = vmax.f32 %v279, 0.0
      %v288 = vmax.f32 %v280, 0.0
      %v289 = vmax.f32 %v281, 0.0
      %v290 = vmax.f32 %v282, 0.0
      %v291 = vpack.c.bf16 %v283, %v283
      %v292 = vpack.c.bf16 %v284, %v284
      %v293 = vpack.c.bf16 %v285, %v285
      %v294 = vpack.c.bf16 %v286, %v286
      %v295 = vpack.c.bf16 %v287, %v287
      %v296 = vpack.c.bf16 %v288, %v288
      %v297 = vpack.c.bf16 %v289, %v289
      %v298 = vpack.c.bf16 %v290, %v290
      %v300 = vshrl.u32 %v291, 16
      %v302 = vrot.slane %v300, 7
      %v303 = vshll.u32 %v291, 16
      %v305 = vor.u32 %v302, %v303
      %v307 = vshrl.u32 %v292, 16
      %v309 = vrot.slane %v307, 7
      %v310 = vshll.u32 %v292, 16
      %v312 = vor.u32 %v309, %v310
      %v314 = vshrl.u32 %v293, 16
      %v316 = vrot.slane %v314, 7
      %v317 = vshll.u32 %v293, 16
      %v319 = vor.u32 %v316, %v317
      %v321 = vshrl.u32 %v294, 16
      %v323 = vrot.slane %v321, 7
      %v324 = vshll.u32 %v294, 16
      %v326 = vor.u32 %v323, %v324
      %v328 = vshrl.u32 %v295, 16
      %v330 = vrot.slane %v328, 7
      %v331 = vshll.u32 %v295, 16
      %v333 = vor.u32 %v330, %v331
      %v335 = vshrl.u32 %v296, 16
      %v337 = vrot.slane %v335, 7
      %v338 = vshll.u32 %v296, 16
      %v340 = vor.u32 %v337, %v338
      %v342 = vshrl.u32 %v297, 16
      %v344 = vrot.slane %v342, 7
      %v345 = vshll.u32 %v297, 16
      %v347 = vor.u32 %v344, %v345
      %v349 = vshrl.u32 %v298, 16
      %v351 = vrot.slane %v349, 7
      %v352 = vshll.u32 %v298, 16
      %v354 = vor.u32 %v351, %v352
      %vm363 = vcmask 1040384
      %vm364 = vsmask.f32 256
      %vm365 = vmand %vm363, %vm364
      %v366 = vsel %vm365, 0, %v305
      %v367 = vsel %vm365, 0, %v312
      %v368 = vsel %vm365, 0, %v319
      %v369 = vsel %vm365, 0, %v326
      %v370 = vsel %vm365, 0, %v333
      %v371 = vsel %vm365, 0, %v340
      %v372 = vsel %vm365, 0, %v347
      %v373 = vsel %vm365, 0, %v354
      %v374 = vrot.slane %v303, 1
      %v375 = vor.u32 %v300, %v374
      %v376 = vrot.slane %v310, 1
      %v377 = vor.u32 %v307, %v376
      %v378 = vrot.slane %v317, 1
      %v379 = vor.u32 %v314, %v378
      %v380 = vrot.slane %v324, 1
      %v381 = vor.u32 %v321, %v380
      %v382 = vrot.slane %v331, 1
      %v383 = vor.u32 %v328, %v382
      %v384 = vrot.slane %v338, 1
      %v385 = vor.u32 %v335, %v384
      %v386 = vrot.slane %v345, 1
      %v387 = vor.u32 %v342, %v386
      %v388 = vrot.slane %v352, 1
      %v389 = vor.u32 %v349, %v388
      %vm398 = vcmask 1043456
      %vm399 = vsmask.f32 3328
      %vm400 = vmand %vm398, %vm399
      %v401 = vsel %vm400, %v375, 0
      %v402 = vsel %vm400, %v377, 0
      %v403 = vsel %vm400, %v379, 0
      %v404 = vsel %vm400, %v381, 0
      %v405 = vsel %vm400, %v383, 0
      %v406 = vsel %vm400, %v385, 0
      %v407 = vsel %vm400, %v387, 0
      %v408 = vsel %vm400, %v389, 0
      %v434 = vunpack.c.l.b16 0
      %v435 = vunpack.c.l.b16 %v366
      %v436 = vunpack.c.l.b16 %v291
      %v437 = vunpack.c.l.b16 %v401
      %v438 = vunpack.c.l.b16 %v367
      %v439 = vunpack.c.l.b16 %v292
      %v440 = vunpack.c.l.b16 %v402
      %v441 = vunpack.c.l.b16 %v368
      %v442 = vunpack.c.l.b16 %v293
      %v443 = vunpack.c.l.b16 %v403
      %v444 = vunpack.c.l.b16 %v369
      %v445 = vunpack.c.l.b16 %v294
      %v446 = vunpack.c.l.b16 %v404
      %v447 = vunpack.c.l.b16 %v370
      %v448 = vunpack.c.l.b16 %v295
      %v449 = vunpack.c.l.b16 %v405
      %v450 = vunpack.c.l.b16 %v371
      %v451 = vunpack.c.l.b16 %v296
      %v452 = vunpack.c.l.b16 %v406
      %v453 = vunpack.c.l.b16 %v372
      %v454 = vunpack.c.l.b16 %v297
      %v455 = vunpack.c.l.b16 %v407
      %v456 = vunpack.c.l.b16 %v373
      %v457 = vunpack.c.l.b16 %v298
      %v458 = vunpack.c.l.b16 %v408
      %v459 = vld [vmem:[%s1] sm:$0xf]
      %v460 = vld [vmem:[%s1 + $0x4] sm:$0xf]
      %v461 = vld [vmem:[%s1 + $0x8] sm:$0xf]
      %v462 = vld [vmem:[%s1 + $0xc] sm:$0xf]
      %v463 = vld [vmem:[%s1 + $0x10] sm:$0xf]
      %v464 = vld [vmem:[%s1 + $0x14] sm:$0xf]
      %v465 = vld [vmem:[%s1 + $0x18] sm:$0xf]
      %v466 = vld [vmem:[%s1 + $0x1c] sm:$0xf]
      %v467 = vld [vmem:[%s1 + $0x20] sm:$0xf]
      %v468 = vld [vmem:[%s1 + $0x24] sm:$0xf]
      %v469 = vld [vmem:[%s1 + $0x28] sm:$0xf]
      %v470 = vld [vmem:[%s1 + $0x2c] sm:$0xf]
      %v471 = vld [vmem:[%s1 + $0x30] sm:$0xf]
      %v472 = vld [vmem:[%s1 + $0x34] sm:$0xf]
      %v473 = vld [vmem:[%s1 + $0x38] sm:$0xf]
      %v474 = vld [vmem:[%s1 + $0x3c] sm:$0xf]
      %v475 = vld [vmem:[%s1 + $0x40] sm:$0xf]
      %v476 = vld [vmem:[%s1 + $0x44] sm:$0xf]
      %v477 = vld [vmem:[%s1 + $0x48] sm:$0xf]
      %v478 = vld [vmem:[%s1 + $0x4c] sm:$0xf]
      %v479 = vld [vmem:[%s1 + $0x50] sm:$0xf]
      %v480 = vld [vmem:[%s1 + $0x54] sm:$0xf]
      %v481 = vld [vmem:[%s1 + $0x58] sm:$0xf]
      %v482 = vld [vmem:[%s1 + $0x5c] sm:$0xf]
      %v483 = vld [vmem:[%s1 + $0x60] sm:$0xf]
      %v484 = vld [vmem:[%s1 + $0x64] sm:$0xf]
      %v485 = vld [vmem:[%s1 + $0x68] sm:$0xf]
      %v486 = vld [vmem:[%s1 + $0x6c] sm:$0xf]
      %v487 = vld [vmem:[%s1 + $0x70] sm:$0xf]
      %v488 = vld [vmem:[%s1 + $0x74] sm:$0xf]
      %v489 = vld [vmem:[%s1 + $0x78] sm:$0xf]
      %v490 = vld [vmem:[%s1 + $0x7c] sm:$0xf]
      %v491 = vld [vmem:[%s1 + $0x80] sm:$0xf]
      %v492 = vld [vmem:[%s1 + $0x84] sm:$0xf]
      %v493 = vld [vmem:[%s1 + $0x88] sm:$0xf]
      %v494 = vld [vmem:[%s1 + $0x8c] sm:$0xf]
      %v495 = vld [vmem:[%s1 + $0x90] sm:$0xf]
      %v496 = vld [vmem:[%s1 + $0x94] sm:$0xf]
      %v497 = vld [vmem:[%s1 + $0x98] sm:$0xf]
      %v498 = vld [vmem:[%s1 + $0x9c] sm:$0xf]
      %v499 = vld [vmem:[%s1 + $0xa0] sm:$0xf]
      %v500 = vld [vmem:[%s1 + $0xa4] sm:$0xf]
      %v501 = vld [vmem:[%s1 + $0xa8] sm:$0xf]
      %v502 = vld [vmem:[%s1 + $0xac] sm:$0xf]
      %v503 = vld [vmem:[%s1 + $0xb0] sm:$0xf]
      %v504 = vld [vmem:[%s1 + $0xb4] sm:$0xf]
      %v505 = vld [vmem:[%s1 + $0xb8] sm:$0xf]
      %v506 = vld [vmem:[%s1 + $0xbc] sm:$0xf]
      %v507 = vld [vmem:[%s1 + $0xc0] sm:$0xf]
      %v508 = vld [vmem:[%s1 + $0xc4] sm:$0xf]
      %v509 = vld [vmem:[%s1 + $0xc8] sm:$0xf]
      %v510 = vld [vmem:[%s1 + $0xcc] sm:$0xf]
      %v511 = vld [vmem:[%s1 + $0xd0] sm:$0xf]
      %v512 = vld [vmem:[%s1 + $0xd4] sm:$0xf]
      %v513 = vld [vmem:[%s1 + $0xd8] sm:$0xf]
      %v514 = vld [vmem:[%s1 + $0xdc] sm:$0xf]
      %v515 = vld [vmem:[%s1 + $0xe0] sm:$0xf]
      %v516 = vld [vmem:[%s1 + $0xe4] sm:$0xf]
      %v517 = vld [vmem:[%s1 + $0xe8] sm:$0xf]
      %v518 = vld [vmem:[%s1 + $0xec] sm:$0xf]
      %v519 = vld [vmem:[%s1 + $0xf0] sm:$0xf]
      %v520 = vld [vmem:[%s1 + $0xf4] sm:$0xf]
      %v521 = vld [vmem:[%s1 + $0xf8] sm:$0xf]
      %v522 = vld [vmem:[%s1 + $0xfc] sm:$0xf]
      %v523 = vld [vmem:[%s1 + $0x100] sm:$0xf]
      %v524 = vld [vmem:[%s1 + $0x104] sm:$0xf]
      %v525 = vld [vmem:[%s1 + $0x108] sm:$0xf]
      %v526 = vld [vmem:[%s1 + $0x10c] sm:$0xf]
      %v527 = vld [vmem:[%s1 + $0x110] sm:$0xf]
      %v528 = vld [vmem:[%s1 + $0x114] sm:$0xf]
      %v529 = vld [vmem:[%s1 + $0x118] sm:$0xf]
      %v530 = vld [vmem:[%s1 + $0x11c] sm:$0xf]
      %v531 = vld [vmem:[%s1 + $0x120] sm:$0xf]
      %v532 = vld [vmem:[%s1 + $0x124] sm:$0xf]
      %v533 = vld [vmem:[%s1 + $0x128] sm:$0xf]
      %v534 = vld [vmem:[%s1 + $0x12c] sm:$0xf]
      %v535 = vld [vmem:[%s1 + $0x130] sm:$0xf]
      %v536 = vld [vmem:[%s1 + $0x134] sm:$0xf]
      %v537 = vld [vmem:[%s1 + $0x138] sm:$0xf]
      %v538 = vld [vmem:[%s1 + $0x13c] sm:$0xf]
      %v539 = vld [vmem:[%s1 + $0x140] sm:$0xf]
      %v540 = vld [vmem:[%s1 + $0x144] sm:$0xf]
      %v541 = vld [vmem:[%s1 + $0x148] sm:$0xf]
      %v542 = vld [vmem:[%s1 + $0x14c] sm:$0xf]
      %v543 = vld [vmem:[%s1 + $0x150] sm:$0xf]
      %v544 = vld [vmem:[%s1 + $0x154] sm:$0xf]
      %v545 = vld [vmem:[%s1 + $0x158] sm:$0xf]
      %v546 = vld [vmem:[%s1 + $0x15c] sm:$0xf]
      %v547 = vld [vmem:[%s1 + $0x160] sm:$0xf]
      %v548 = vld [vmem:[%s1 + $0x164] sm:$0xf]
      %v549 = vld [vmem:[%s1 + $0x168] sm:$0xf]
      %v550 = vld [vmem:[%s1 + $0x16c] sm:$0xf]
      %v551 = vld [vmem:[%s1 + $0x170] sm:$0xf]
      %v552 = vld [vmem:[%s1 + $0x174] sm:$0xf]
      %v553 = vld [vmem:[%s1 + $0x178] sm:$0xf]
      %v554 = vld [vmem:[%s1 + $0x17c] sm:$0xf]
      %v555 = vld [vmem:[%s1 + $0x180] sm:$0xf]
      %v556 = vld [vmem:[%s1 + $0x184] sm:$0xf]
      %v557 = vld [vmem:[%s1 + $0x188] sm:$0xf]
      %v558 = vld [vmem:[%s1 + $0x18c] sm:$0xf]
      %v559 = vld [vmem:[%s1 + $0x190] sm:$0xf]
      %v560 = vld [vmem:[%s1 + $0x194] sm:$0xf]
      %v561 = vld [vmem:[%s1 + $0x198] sm:$0xf]
      %v562 = vld [vmem:[%s1 + $0x19c] sm:$0xf]
      %v563 = vld [vmem:[%s1 + $0x1a0] sm:$0xf]
      %v564 = vld [vmem:[%s1 + $0x1a4] sm:$0xf]
      %v565 = vld [vmem:[%s1 + $0x1a8] sm:$0xf]
      %v566 = vld [vmem:[%s1 + $0x1ac] sm:$0xf]
      %v567 = vld [vmem:[%s1 + $0x1b0] sm:$0xf]
      %v568 = vld [vmem:[%s1 + $0x1b4] sm:$0xf]
      %v569 = vld [vmem:[%s1 + $0x1b8] sm:$0xf]
      %v570 = vld [vmem:[%s1 + $0x1bc] sm:$0xf]
      %v571 = vld [vmem:[%s1 + $0x1c0] sm:$0xf]
      %v572 = vld [vmem:[%s1 + $0x1c4] sm:$0xf]
      %v573 = vld [vmem:[%s1 + $0x1c8] sm:$0xf]
      %v574 = vld [vmem:[%s1 + $0x1cc] sm:$0xf]
      %v575 = vld [vmem:[%s1 + $0x1d0] sm:$0xf]
      %v576 = vld [vmem:[%s1 + $0x1d4] sm:$0xf]
      %v577 = vld [vmem:[%s1 + $0x1d8] sm:$0xf]
      %v578 = vld [vmem:[%s1 + $0x1dc] sm:$0xf]
      %v579 = vld [vmem:[%s1 + $0x1e0] sm:$0xf]
      %v580 = vld [vmem:[%s1 + $0x1e4] sm:$0xf]
      %v581 = vld [vmem:[%s1 + $0x1e8] sm:$0xf]
      %v582 = vld [vmem:[%s1 + $0x1ec] sm:$0xf]
      %v583 = vld [vmem:[%s1 + $0x1f0] sm:$0xf]
      %v584 = vld [vmem:[%s1 + $0x1f4] sm:$0xf]
      %v585 = vld [vmem:[%s1 + $0x1f8] sm:$0xf]
      %v586 = vld [vmem:[%s1 + $0x1fc] sm:$0xf]
      %v587 = vld [vmem:[%s1 + $0x200] sm:$0xf]
      %v588 = vld [vmem:[%s1 + $0x204] sm:$0xf]
      %v589 = vld [vmem:[%s1 + $0x208] sm:$0xf]
      %v590 = vld [vmem:[%s1 + $0x20c] sm:$0xf]
      %v591 = vld [vmem:[%s1 + $0x210] sm:$0xf]
      %v592 = vld [vmem:[%s1 + $0x214] sm:$0xf]
      %v593 = vld [vmem:[%s1 + $0x218] sm:$0xf]
      %v594 = vld [vmem:[%s1 + $0x21c] sm:$0xf]
      %v595 = vld [vmem:[%s1 + $0x220] sm:$0xf]
      %v596 = vld [vmem:[%s1 + $0x224] sm:$0xf]
      %v597 = vld [vmem:[%s1 + $0x228] sm:$0xf]
      %v598 = vld [vmem:[%s1 + $0x22c] sm:$0xf]
      %v599 = vld [vmem:[%s1 + $0x230] sm:$0xf]
      %v600 = vld [vmem:[%s1 + $0x234] sm:$0xf]
      %v601 = vld [vmem:[%s1 + $0x238] sm:$0xf]
      %v602 = vld [vmem:[%s1 + $0x23c] sm:$0xf]
      %v603 = vpack.c.b16 %v435, %v434
      %v604 = vpack.c.b16 %v436, %v434
      %v605 = vpack.c.b16 %v437, %v434
      %v606 = vpack.c.b16 %v438, %v435
      %v607 = vpack.c.b16 %v439, %v436
      %v608 = vpack.c.b16 %v440, %v437
      %v609 = vpack.c.b16 %v441, %v438
      %v610 = vpack.c.b16 %v442, %v439
      %v611 = vpack.c.b16 %v443, %v440
      %v612 = vpack.c.b16 %v444, %v441
      %v613 = vpack.c.b16 %v445, %v442
      %v614 = vpack.c.b16 %v446, %v443
      %v615 = vpack.c.b16 %v447, %v444
      %v616 = vpack.c.b16 %v448, %v445
      %v617 = vpack.c.b16 %v449, %v446
      %v618 = vpack.c.b16 %v450, %v447
      %v619 = vpack.c.b16 %v451, %v448
      %v620 = vpack.c.b16 %v452, %v449
      %v621 = vpack.c.b16 %v453, %v450
      %v622 = vpack.c.b16 %v454, %v451
      %v623 = vpack.c.b16 %v455, %v452
      %v624 = vpack.c.b16 %v456, %v453
      %v625 = vpack.c.b16 %v457, %v454
      %v626 = vpack.c.b16 %v458, %v455
      %v627 = vpack.c.b16 %v434, %v456
      %v628 = vpack.c.b16 %v434, %v457
      %v629 = vpack.c.b16 %v434, %v458
      %v801 = vunpack.c.l.b16 %v459
      %v802 = vunpack.c.l.b16 %v460
      %v803 = vunpack.c.l.b16 %v461
      %v804 = vunpack.c.l.b16 %v462
      %v805 = vunpack.c.l.b16 %v463
      %v806 = vunpack.c.l.b16 %v464
      %v807 = vunpack.c.l.b16 %v465
      %v808 = vunpack.c.l.b16 %v466
      %v809 = vunpack.c.l.b16 %v467
      %v810 = vunpack.c.l.b16 %v468
      %v811 = vunpack.c.l.b16 %v469
      %v812 = vunpack.c.l.b16 %v470
      %v813 = vunpack.c.l.b16 %v471
      %v814 = vunpack.c.l.b16 %v472
      %v815 = vunpack.c.l.b16 %v473
      %v816 = vunpack.c.l.b16 %v474
      %v817 = vunpack.c.l.b16 %v475
      %v818 = vunpack.c.l.b16 %v476
      %v819 = vunpack.c.l.b16 %v477
      %v820 = vunpack.c.l.b16 %v478
      %v821 = vunpack.c.l.b16 %v479
      %v822 = vunpack.c.l.b16 %v480
      %v823 = vunpack.c.l.b16 %v481
      %v824 = vunpack.c.l.b16 %v482
      %v825 = vunpack.c.l.b16 %v483
      %v826 = vunpack.c.l.b16 %v484
      %v827 = vunpack.c.l.b16 %v485
      %v828 = vunpack.c.l.b16 %v486
      %v829 = vunpack.c.l.b16 %v487
      %v830 = vunpack.c.l.b16 %v488
      %v831 = vunpack.c.l.b16 %v489
      %v832 = vunpack.c.l.b16 %v490
      %v833 = vunpack.c.l.b16 %v491
      %v834 = vunpack.c.l.b16 %v492
      %v835 = vunpack.c.l.b16 %v493
      %v836 = vunpack.c.l.b16 %v494
      %v837 = vunpack.c.l.b16 %v495
      %v838 = vunpack.c.l.b16 %v496
      %v839 = vunpack.c.l.b16 %v497
      %v840 = vunpack.c.l.b16 %v498
      %v841 = vunpack.c.l.b16 %v499
      %v842 = vunpack.c.l.b16 %v500
      %v843 = vunpack.c.l.b16 %v501
      %v844 = vunpack.c.l.b16 %v502
      %v845 = vunpack.c.l.b16 %v503
      %v846 = vunpack.c.l.b16 %v504
      %v847 = vunpack.c.l.b16 %v505
      %v848 = vunpack.c.l.b16 %v506
      %v849 = vunpack.c.l.b16 %v507
      %v850 = vunpack.c.l.b16 %v508
      %v851 = vunpack.c.l.b16 %v509
      %v852 = vunpack.c.l.b16 %v510
      %v853 = vunpack.c.l.b16 %v511
      %v854 = vunpack.c.l.b16 %v512
      %v855 = vunpack.c.l.b16 %v513
      %v856 = vunpack.c.l.b16 %v514
      %v857 = vunpack.c.l.b16 %v515
      %v858 = vunpack.c.l.b16 %v516
      %v859 = vunpack.c.l.b16 %v517
      %v860 = vunpack.c.l.b16 %v518
      %v861 = vunpack.c.l.b16 %v519
      %v862 = vunpack.c.l.b16 %v520
      %v863 = vunpack.c.l.b16 %v521
      %v864 = vunpack.c.l.b16 %v522
      %v865 = vunpack.c.l.b16 %v523
      %v866 = vunpack.c.l.b16 %v524
      %v867 = vunpack.c.l.b16 %v525
      %v868 = vunpack.c.l.b16 %v526
      %v869 = vunpack.c.l.b16 %v527
      %v870 = vunpack.c.l.b16 %v528
      %v871 = vunpack.c.l.b16 %v529
      %v872 = vunpack.c.l.b16 %v530
      %v873 = vunpack.c.l.b16 %v531
      %v874 = vunpack.c.l.b16 %v532
      %v875 = vunpack.c.l.b16 %v533
      %v876 = vunpack.c.l.b16 %v534
      %v877 = vunpack.c.l.b16 %v535
      %v878 = vunpack.c.l.b16 %v536
      %v879 = vunpack.c.l.b16 %v537
      %v880 = vunpack.c.l.b16 %v538
      %v881 = vunpack.c.l.b16 %v539
      %v882 = vunpack.c.l.b16 %v540
      %v883 = vunpack.c.l.b16 %v541
      %v884 = vunpack.c.l.b16 %v542
      %v885 = vunpack.c.l.b16 %v543
      %v886 = vunpack.c.l.b16 %v544
      %v887 = vunpack.c.l.b16 %v545
      %v888 = vunpack.c.l.b16 %v546
      %v889 = vunpack.c.l.b16 %v547
      %v890 = vunpack.c.l.b16 %v548
      %v891 = vunpack.c.l.b16 %v549
      %v892 = vunpack.c.l.b16 %v550
      %v893 = vunpack.c.l.b16 %v551
      %v894 = vunpack.c.l.b16 %v552
      %v895 = vunpack.c.l.b16 %v553
      %v896 = vunpack.c.l.b16 %v554
      %v897 = vunpack.c.l.b16 %v555
      %v898 = vunpack.c.l.b16 %v556
      %v899 = vunpack.c.l.b16 %v557
      %v900 = vunpack.c.l.b16 %v558
      %v901 = vunpack.c.l.b16 %v559
      %v902 = vunpack.c.l.b16 %v560
      %v903 = vunpack.c.l.b16 %v561
      %v904 = vunpack.c.l.b16 %v562
      %v905 = vunpack.c.l.b16 %v563
      %v906 = vunpack.c.l.b16 %v564
      %v907 = vunpack.c.l.b16 %v565
      %v908 = vunpack.c.l.b16 %v566
      %v909 = vunpack.c.l.b16 %v567
      %v910 = vunpack.c.l.b16 %v568
      %v911 = vunpack.c.l.b16 %v569
      %v912 = vunpack.c.l.b16 %v570
      %v913 = vunpack.c.l.b16 %v571
      %v914 = vunpack.c.l.b16 %v572
      %v915 = vunpack.c.l.b16 %v573
      %v916 = vunpack.c.l.b16 %v574
      %v917 = vunpack.c.l.b16 %v575
      %v918 = vunpack.c.l.b16 %v576
      %v919 = vunpack.c.l.b16 %v577
      %v920 = vunpack.c.l.b16 %v578
      %v921 = vunpack.c.l.b16 %v579
      %v922 = vunpack.c.l.b16 %v580
      %v923 = vunpack.c.l.b16 %v581
      %v924 = vunpack.c.l.b16 %v582
      %v925 = vunpack.c.l.b16 %v583
      %v926 = vunpack.c.l.b16 %v584
      %v927 = vunpack.c.l.b16 %v585
      %v928 = vunpack.c.l.b16 %v586
      %v929 = vunpack.c.l.b16 %v587
      %v930 = vunpack.c.l.b16 %v588
      %v931 = vunpack.c.l.b16 %v589
      %v932 = vunpack.c.l.b16 %v590
      %v933 = vunpack.c.l.b16 %v591
      %v934 = vunpack.c.l.b16 %v592
      %v935 = vunpack.c.l.b16 %v593
      %v936 = vunpack.c.l.b16 %v594
      %v937 = vunpack.c.l.b16 %v595
      %v938 = vunpack.c.l.b16 %v596
      %v939 = vunpack.c.l.b16 %v597
      %v940 = vunpack.c.l.b16 %v598
      %v941 = vunpack.c.l.b16 %v599
      %v942 = vunpack.c.l.b16 %v600
      %v943 = vunpack.c.l.b16 %v601
      %v944 = vunpack.c.l.b16 %v602
      %v945 = vpack.c.b16 %v802, %v801
      %v946 = vpack.c.b16 %v804, %v803
      %v947 = vpack.c.b16 %v806, %v805
      %v948 = vpack.c.b16 %v808, %v807
      %v949 = vpack.c.b16 %v810, %v809
      %v950 = vpack.c.b16 %v812, %v811
      %v951 = vpack.c.b16 %v814, %v813
      %v952 = vpack.c.b16 %v816, %v815
      %v953 = vpack.c.b16 %v818, %v817
      %v954 = vpack.c.b16 %v820, %v819
      %v955 = vpack.c.b16 %v822, %v821
      %v956 = vpack.c.b16 %v824, %v823
      %v957 = vpack.c.b16 %v826, %v825
      %v958 = vpack.c.b16 %v828, %v827
      %v959 = vpack.c.b16 %v830, %v829
      %v960 = vpack.c.b16 %v832, %v831
      %v961 = vpack.c.b16 %v834, %v833
      %v962 = vpack.c.b16 %v836, %v835
      %v963 = vpack.c.b16 %v838, %v837
      %v964 = vpack.c.b16 %v840, %v839
      %v965 = vpack.c.b16 %v842, %v841
      %v966 = vpack.c.b16 %v844, %v843
      %v967 = vpack.c.b16 %v846, %v845
      %v968 = vpack.c.b16 %v848, %v847
      %v969 = vpack.c.b16 %v850, %v849
      %v970 = vpack.c.b16 %v852, %v851
      %v971 = vpack.c.b16 %v854, %v853
      %v972 = vpack.c.b16 %v856, %v855
      %v973 = vpack.c.b16 %v858, %v857
      %v974 = vpack.c.b16 %v860, %v859
      %v975 = vpack.c.b16 %v862, %v861
      %v976 = vpack.c.b16 %v864, %v863
      %v977 = vpack.c.b16 %v866, %v865
      %v978 = vpack.c.b16 %v868, %v867
      %v979 = vpack.c.b16 %v870, %v869
      %v980 = vpack.c.b16 %v872, %v871
      %v981 = vpack.c.b16 %v874, %v873
      %v982 = vpack.c.b16 %v876, %v875
      %v983 = vpack.c.b16 %v878, %v877
      %v984 = vpack.c.b16 %v880, %v879
      %v985 = vpack.c.b16 %v882, %v881
      %v986 = vpack.c.b16 %v884, %v883
      %v987 = vpack.c.b16 %v886, %v885
      %v988 = vpack.c.b16 %v888, %v887
      %v989 = vpack.c.b16 %v890, %v889
      %v990 = vpack.c.b16 %v892, %v891
      %v991 = vpack.c.b16 %v894, %v893
      %v992 = vpack.c.b16 %v896, %v895
      %v993 = vpack.c.b16 %v898, %v897
      %v994 = vpack.c.b16 %v900, %v899
      %v995 = vpack.c.b16 %v902, %v901
      %v996 = vpack.c.b16 %v904, %v903
      %v997 = vpack.c.b16 %v906, %v905
      %v998 = vpack.c.b16 %v908, %v907
      %v999 = vpack.c.b16 %v910, %v909
      %v1000 = vpack.c.b16 %v912, %v911
      %v1001 = vpack.c.b16 %v914, %v913
      %v1002 = vpack.c.b16 %v916, %v915
      %v1003 = vpack.c.b16 %v918, %v917
      %v1004 = vpack.c.b16 %v920, %v919
      %v1005 = vpack.c.b16 %v922, %v921
      %v1006 = vpack.c.b16 %v924, %v923
      %v1007 = vpack.c.b16 %v926, %v925
      %v1008 = vpack.c.b16 %v928, %v927
      %v1009 = vpack.c.b16 %v930, %v929
      %v1010 = vpack.c.b16 %v932, %v931
      %v1011 = vpack.c.b16 %v934, %v933
      %v1012 = vpack.c.b16 %v936, %v935
      %v1013 = vpack.c.b16 %v938, %v937
      %v1014 = vpack.c.b16 %v940, %v939
      %v1015 = vpack.c.b16 %v942, %v941
      %v1016 = vpack.c.b16 %v944, %v943
      %1089 = vmatprep.subr.bf16.mxu0 0
      %1090 = vmatpush1.bf16.msra.mxu0 %v952
      %1091 = vmatprep.subr.bf16.mxu0 0
      %1092 = vmatpush1.bf16.msra.mxu0 %v951
      %1093 = vmatprep.subr.bf16.mxu0 0
      %1094 = vmatpush1.bf16.msra.mxu0 %v950
      %1095 = vmatprep.subr.bf16.mxu0 0
      %1096 = vmatpush1.bf16.msra.mxu0 %v949
      %1097 = vmatprep.subr.bf16.mxu0 0
      %1098 = vmatpush1.bf16.msra.mxu0 %v948
      %1099 = vmatprep.subr.bf16.mxu0 0
      %1100 = vmatpush1.bf16.msra.mxu0 %v947
      %1101 = vmatprep.subr.bf16.mxu0 0
      %1102 = vmatpush1.bf16.msra.mxu0 %v946
      %1103 = vmatprep.subr.bf16.mxu0 0
      %1104 = vmatpush1.bf16.msra.mxu0 %v945
      %1105 = vmatprep.subr.bf16.mxu0 0
      %1106 = vmatpush2.bf16.msra.mxu0 %v960
      %1107 = vmatprep.subr.bf16.mxu0 0
      %1108 = vmatpush2.bf16.msra.mxu0 %v959
      %1109 = vmatprep.subr.bf16.mxu0 0
      %1110 = vmatpush2.bf16.msra.mxu0 %v958
      %1111 = vmatprep.subr.bf16.mxu0 0
      %1112 = vmatpush2.bf16.msra.mxu0 %v957
      %1113 = vmatprep.subr.bf16.mxu0 0
      %1114 = vmatpush2.bf16.msra.mxu0 %v956
      %1115 = vmatprep.subr.bf16.mxu0 0
      %1116 = vmatpush2.bf16.msra.mxu0 %v955
      %1117 = vmatprep.subr.bf16.mxu0 0
      %1118 = vmatpush2.bf16.msra.mxu0 %v954
      %1119 = vmatprep.subr.bf16.mxu0 0
      %1120 = vmatpush2.bf16.msra.mxu0 %v953
      %1121 = vmatprep.mubr.bf16.mxu0 %v604
      %1122 = vmatmul.mubr.bf16.gmra.mxu0 %v603
      %v1123 = vpop.f32.mrf.mxu0
      %v1124 = vadd.f32 0.0, %v1123
      %v1125 = vpop.f32.mrf.mxu0
      %v1126 = vpop.f32.mrf.mxu0
      %v1127 = vadd.f32 0.0, %v1126
      %v1128 = vpop.f32.mrf.mxu0
      %1129 = vmatprep.mubr.bf16.mxu0 %v610
      %1130 = vmatmul.mubr.bf16.gmra.mxu0 %v609
      %v1131 = vpop.f32.mrf.mxu0
      %v1132 = vadd.f32 0.0, %v1131
      %v1133 = vpop.f32.mrf.mxu0
      %v1134 = vpop.f32.mrf.mxu0
      %v1135 = vadd.f32 0.0, %v1134
      %v1136 = vpop.f32.mrf.mxu0
      %1137 = vmatprep.mubr.bf16.mxu0 %v616
      %1138 = vmatmul.mubr.bf16.gmra.mxu0 %v615
      %v1139 = vpop.f32.mrf.mxu0
      %v1140 = vadd.f32 0.0, %v1139
      %v1141 = vpop.f32.mrf.mxu0
      %v1142 = vpop.f32.mrf.mxu0
      %v1143 = vadd.f32 0.0, %v1142
      %v1144 = vpop.f32.mrf.mxu0
      %1145 = vmatprep.mubr.bf16.mxu0 %v622
      %1146 = vmatmul.mubr.bf16.gmra.mxu0 %v621
      %v1147 = vpop.f32.mrf.mxu0
      %v1148 = vadd.f32 0.0, %v1147
      %v1149 = vpop.f32.mrf.mxu0
      %v1150 = vpop.f32.mrf.mxu0
      %v1151 = vadd.f32 0.0, %v1150
      %v1152 = vpop.f32.mrf.mxu0
      %1153 = vdwg.mxu0
      %1154 = vmatprep.subr.bf16.mxu0 0
      %1155 = vmatpush1.bf16.msra.mxu0 %v968
      %1156 = vmatprep.subr.bf16.mxu0 0
      %1157 = vmatpush1.bf16.msra.mxu0 %v967
      %1158 = vmatprep.subr.bf16.mxu0 0
      %1159 = vmatpush1.bf16.msra.mxu0 %v966
      %1160 = vmatprep.subr.bf16.mxu0 0
      %1161 = vmatpush1.bf16.msra.mxu0 %v965
      %1162 = vmatprep.subr.bf16.mxu0 0
      %1163 = vmatpush1.bf16.msra.mxu0 %v964
      %1164 = vmatprep.subr.bf16.mxu0 0
      %1165 = vmatpush1.bf16.msra.mxu0 %v963
      %1166 = vmatprep.subr.bf16.mxu0 0
      %1167 = vmatpush1.bf16.msra.mxu0 %v962
      %1168 = vmatprep.subr.bf16.mxu0 0
      %1169 = vmatpush1.bf16.msra.mxu0 %v961
      %1170 = vmatprep.subr.bf16.mxu0 0
      %1171 = vmatpush2.bf16.msra.mxu0 %v976
      %1172 = vmatprep.subr.bf16.mxu0 0
      %1173 = vmatpush2.bf16.msra.mxu0 %v975
      %1174 = vmatprep.subr.bf16.mxu0 0
      %1175 = vmatpush2.bf16.msra.mxu0 %v974
      %1176 = vmatprep.subr.bf16.mxu0 0
      %1177 = vmatpush2.bf16.msra.mxu0 %v973
      %1178 = vmatprep.subr.bf16.mxu0 0
      %1179 = vmatpush2.bf16.msra.mxu0 %v972
      %1180 = vmatprep.subr.bf16.mxu0 0
      %1181 = vmatpush2.bf16.msra.mxu0 %v971
      %1182 = vmatprep.subr.bf16.mxu0 0
      %1183 = vmatpush2.bf16.msra.mxu0 %v970
      %1184 = vmatprep.subr.bf16.mxu0 0
      %1185 = vmatpush2.bf16.msra.mxu0 %v969
      %1186 = vmatprep.mubr.bf16.mxu0 %v606
      %1187 = vmatmul.mubr.bf16.gmra.mxu0 %v605
      %v1188 = vpop.f32.mrf.mxu0
      %v1189 = vadd.f32 %v1124, %v1188
      %v1190 = vpop.f32.mrf.mxu0
      %v1191 = vpop.f32.mrf.mxu0
      %v1192 = vadd.f32 %v1127, %v1191
      %v1193 = vpop.f32.mrf.mxu0
      %1194 = vmatprep.mubr.bf16.mxu0 %v612
      %1195 = vmatmul.mubr.bf16.gmra.mxu0 %v611
      %v1196 = vpop.f32.mrf.mxu0
      %v1197 = vadd.f32 %v1132, %v1196
      %v1198 = vpop.f32.mrf.mxu0
      %v1199 = vpop.f32.mrf.mxu0
      %v1200 = vadd.f32 %v1135, %v1199
      %v1201 = vpop.f32.mrf.mxu0
      %1202 = vmatprep.mubr.bf16.mxu0 %v618
      %1203 = vmatmul.mubr.bf16.gmra.mxu0 %v617
      %v1204 = vpop.f32.mrf.mxu0
      %v1205 = vadd.f32 %v1140, %v1204
      %v1206 = vpop.f32.mrf.mxu0
      %v1207 = vpop.f32.mrf.mxu0
      %v1208 = vadd.f32 %v1143, %v1207
      %v1209 = vpop.f32.mrf.mxu0
      %1210 = vmatprep.mubr.bf16.mxu0 %v624
      %1211 = vmatmul.mubr.bf16.gmra.mxu0 %v623
      %v1212 = vpop.f32.mrf.mxu0
      %v1213 = vadd.f32 %v1148, %v1212
      %v1214 = vpop.f32.mrf.mxu0
      %v1215 = vpop.f32.mrf.mxu0
      %v1216 = vadd.f32 %v1151, %v1215
      %v1217 = vpop.f32.mrf.mxu0
      %1218 = vdwg.mxu0
      %1219 = vmatprep.subr.bf16.mxu0 0
      %1220 = vmatpush1.bf16.msra.mxu0 %v984
      %1221 = vmatprep.subr.bf16.mxu0 0
      %1222 = vmatpush1.bf16.msra.mxu0 %v983
      %1223 = vmatprep.subr.bf16.mxu0 0
      %1224 = vmatpush1.bf16.msra.mxu0 %v982
      %1225 = vmatprep.subr.bf16.mxu0 0
      %1226 = vmatpush1.bf16.msra.mxu0 %v981
      %1227 = vmatprep.subr.bf16.mxu0 0
      %1228 = vmatpush1.bf16.msra.mxu0 %v980
      %1229 = vmatprep.subr.bf16.mxu0 0
      %1230 = vmatpush1.bf16.msra.mxu0 %v979
      %1231 = vmatprep.subr.bf16.mxu0 0
      %1232 = vmatpush1.bf16.msra.mxu0 %v978
      %1233 = vmatprep.subr.bf16.mxu0 0
      %1234 = vmatpush1.bf16.msra.mxu0 %v977
      %1235 = vmatprep.subr.bf16.mxu0 0
      %1236 = vmatpush2.bf16.msra.mxu0 %v992
      %1237 = vmatprep.subr.bf16.mxu0 0
      %1238 = vmatpush2.bf16.msra.mxu0 %v991
      %1239 = vmatprep.subr.bf16.mxu0 0
      %1240 = vmatpush2.bf16.msra.mxu0 %v990
      %1241 = vmatprep.subr.bf16.mxu0 0
      %1242 = vmatpush2.bf16.msra.mxu0 %v989
      %1243 = vmatprep.subr.bf16.mxu0 0
      %1244 = vmatpush2.bf16.msra.mxu0 %v988
      %1245 = vmatprep.subr.bf16.mxu0 0
      %1246 = vmatpush2.bf16.msra.mxu0 %v987
      %1247 = vmatprep.subr.bf16.mxu0 0
      %1248 = vmatpush2.bf16.msra.mxu0 %v986
      %1249 = vmatprep.subr.bf16.mxu0 0
      %1250 = vmatpush2.bf16.msra.mxu0 %v985
      %1251 = vmatprep.mubr.bf16.mxu0 %v608
      %1252 = vmatmul.mubr.bf16.gmra.mxu0 %v607
      %v1253 = vpop.f32.mrf.mxu0
      %v1254 = vadd.f32 %v1189, %v1253
      %v1255 = vpop.f32.mrf.mxu0
      %v1256 = vpop.f32.mrf.mxu0
      %v1257 = vadd.f32 %v1192, %v1256
      %v1258 = vpop.f32.mrf.mxu0
      %1259 = vmatprep.mubr.bf16.mxu0 %v614
      %1260 = vmatmul.mubr.bf16.gmra.mxu0 %v613
      %v1261 = vpop.f32.mrf.mxu0
      %v1262 = vadd.f32 %v1197, %v1261
      %v1263 = vpop.f32.mrf.mxu0
      %v1264 = vpop.f32.mrf.mxu0
      %v1265 = vadd.f32 %v1200, %v1264
      %v1266 = vpop.f32.mrf.mxu0
      %1267 = vmatprep.mubr.bf16.mxu0 %v620
      %1268 = vmatmul.mubr.bf16.gmra.mxu0 %v619
      %v1269 = vpop.f32.mrf.mxu0
      %v1270 = vadd.f32 %v1205, %v1269
      %v1271 = vpop.f32.mrf.mxu0
      %v1272 = vpop.f32.mrf.mxu0
      %v1273 = vadd.f32 %v1208, %v1272
      %v1274 = vpop.f32.mrf.mxu0
      %1275 = vmatprep.mubr.bf16.mxu0 %v626
      %1276 = vmatmul.mubr.bf16.gmra.mxu0 %v625
      %v1277 = vpop.f32.mrf.mxu0
      %v1278 = vadd.f32 %v1213, %v1277
      %v1279 = vpop.f32.mrf.mxu0
      %v1280 = vpop.f32.mrf.mxu0
      %v1281 = vadd.f32 %v1216, %v1280
      %v1282 = vpop.f32.mrf.mxu0
      %1283 = vdwg.mxu0
      %1284 = vmatprep.subr.bf16.mxu0 0
      %1285 = vmatpush1.bf16.msra.mxu0 %v1000
      %1286 = vmatprep.subr.bf16.mxu0 0
      %1287 = vmatpush1.bf16.msra.mxu0 %v999
      %1288 = vmatprep.subr.bf16.mxu0 0
      %1289 = vmatpush1.bf16.msra.mxu0 %v998
      %1290 = vmatprep.subr.bf16.mxu0 0
      %1291 = vmatpush1.bf16.msra.mxu0 %v997
      %1292 = vmatprep.subr.bf16.mxu0 0
      %1293 = vmatpush1.bf16.msra.mxu0 %v996
      %1294 = vmatprep.subr.bf16.mxu0 0
      %1295 = vmatpush1.bf16.msra.mxu0 %v995
      %1296 = vmatprep.subr.bf16.mxu0 0
      %1297 = vmatpush1.bf16.msra.mxu0 %v994
      %1298 = vmatprep.subr.bf16.mxu0 0
      %1299 = vmatpush1.bf16.msra.mxu0 %v993
      %1300 = vmatprep.subr.bf16.mxu0 0
      %1301 = vmatpush2.bf16.msra.mxu0 %v1008
      %1302 = vmatprep.subr.bf16.mxu0 0
      %1303 = vmatpush2.bf16.msra.mxu0 %v1007
      %1304 = vmatprep.subr.bf16.mxu0 0
      %1305 = vmatpush2.bf16.msra.mxu0 %v1006
      %1306 = vmatprep.subr.bf16.mxu0 0
      %1307 = vmatpush2.bf16.msra.mxu0 %v1005
      %1308 = vmatprep.subr.bf16.mxu0 0
      %1309 = vmatpush2.bf16.msra.mxu0 %v1004
      %1310 = vmatprep.subr.bf16.mxu0 0
      %1311 = vmatpush2.bf16.msra.mxu0 %v1003
      %1312 = vmatprep.subr.bf16.mxu0 0
      %1313 = vmatpush2.bf16.msra.mxu0 %v1002
      %1314 = vmatprep.subr.bf16.mxu0 0
      %1315 = vmatpush2.bf16.msra.mxu0 %v1001
      %1316 = vmatprep.mubr.bf16.mxu0 %v610
      %1317 = vmatmul.mubr.bf16.gmra.mxu0 %v609
      %v1318 = vpop.f32.mrf.mxu0
      %v1319 = vadd.f32 %v1254, %v1318
      %v1320 = vpop.f32.mrf.mxu0
      %v1321 = vpop.f32.mrf.mxu0
      %v1322 = vadd.f32 %v1257, %v1321
      %v1323 = vpop.f32.mrf.mxu0
      %1324 = vmatprep.mubr.bf16.mxu0 %v616
      %1325 = vmatmul.mubr.bf16.gmra.mxu0 %v615
      %v1326 = vpop.f32.mrf.mxu0
      %v1327 = vadd.f32 %v1262, %v1326
      %v1328 = vpop.f32.mrf.mxu0
      %v1329 = vpop.f32.mrf.mxu0
      %v1330 = vadd.f32 %v1265, %v1329
      %v1331 = vpop.f32.mrf.mxu0
      %1332 = vmatprep.mubr.bf16.mxu0 %v622
      %1333 = vmatmul.mubr.bf16.gmra.mxu0 %v621
      %v1334 = vpop.f32.mrf.mxu0
      %v1335 = vadd.f32 %v1270, %v1334
      %v1336 = vpop.f32.mrf.mxu0
      %v1337 = vpop.f32.mrf.mxu0
      %v1338 = vadd.f32 %v1273, %v1337
      %v1339 = vpop.f32.mrf.mxu0
      %1340 = vmatprep.mubr.bf16.mxu0 %v628
      %1341 = vmatmul.mubr.bf16.gmra.mxu0 %v627
      %v1342 = vpop.f32.mrf.mxu0
      %v1343 = vadd.f32 %v1278, %v1342
      %v1344 = vpop.f32.mrf.mxu0
      %v1345 = vpop.f32.mrf.mxu0
      %v1346 = vadd.f32 %v1281, %v1345
      %v1347 = vpop.f32.mrf.mxu0
      %1348 = vdwg.mxu0
      %1349 = vmatprep.subr.bf16.mxu0 0
      %1350 = vmatpush1.bf16.msra.mxu0 %v1016
      %1351 = vmatprep.subr.bf16.mxu0 0
      %1352 = vmatpush1.bf16.msra.mxu0 %v1015
      %1353 = vmatprep.subr.bf16.mxu0 0
      %1354 = vmatpush1.bf16.msra.mxu0 %v1014
      %1355 = vmatprep.subr.bf16.mxu0 0
      %1356 = vmatpush1.bf16.msra.mxu0 %v1013
      %1357 = vmatprep.subr.bf16.mxu0 0
      %1358 = vmatpush1.bf16.msra.mxu0 %v1012
      %1359 = vmatprep.subr.bf16.mxu0 0
      %1360 = vmatpush1.bf16.msra.mxu0 %v1011
      %1361 = vmatprep.subr.bf16.mxu0 0
      %1362 = vmatpush1.bf16.msra.mxu0 %v1010
      %1363 = vmatprep.subr.bf16.mxu0 0
      %1364 = vmatpush1.bf16.msra.mxu0 %v1009
      %1365 = vmatprep.subr.bf16.mxu0 0
      %1366 = vmatpush2.bf16.msra.mxu0 0
      %1367 = vmatprep.subr.bf16.mxu0 0
      %1368 = vmatpush2.bf16.msra.mxu0 0
      %1369 = vmatprep.subr.bf16.mxu0 0
      %1370 = vmatpush2.bf16.msra.mxu0 0
      %1371 = vmatprep.subr.bf16.mxu0 0
      %1372 = vmatpush2.bf16.msra.mxu0 0
      %1373 = vmatprep.subr.bf16.mxu0 0
      %1374 = vmatpush2.bf16.msra.mxu0 0
      %1375 = vmatprep.subr.bf16.mxu0 0
      %1376 = vmatpush2.bf16.msra.mxu0 0
      %1377 = vmatprep.subr.bf16.mxu0 0
      %1378 = vmatpush2.bf16.msra.mxu0 0
      %1379 = vmatprep.subr.bf16.mxu0 0
      %1380 = vmatpush2.bf16.msra.mxu0 0
      %1381 = vmatprep.mubr.bf16.mxu0 0
      %1382 = vmatmul.mubr.bf16.gmra.mxu0 %v611
      %v1383 = vpop.f32.mrf.mxu0
      %v1384 = vadd.f32 %v1319, %v1383
      %v1385 = vpop.f32.mrf.mxu0
      %v1386 = vpop.f32.mrf.mxu0
      %v1387 = vadd.f32 %v1322, %v1386
      %v1388 = vpop.f32.mrf.mxu0
      %1389 = vmatprep.mubr.bf16.mxu0 0
      %1390 = vmatmul.mubr.bf16.gmra.mxu0 %v617
      %v1391 = vpop.f32.mrf.mxu0
      %v1392 = vadd.f32 %v1327, %v1391
      %v1393 = vpop.f32.mrf.mxu0
      %v1394 = vpop.f32.mrf.mxu0
      %v1395 = vadd.f32 %v1330, %v1394
      %v1396 = vpop.f32.mrf.mxu0
      %1397 = vmatprep.mubr.bf16.mxu0 0
      %1398 = vmatmul.mubr.bf16.gmra.mxu0 %v623
      %v1399 = vpop.f32.mrf.mxu0
      %v1400 = vadd.f32 %v1335, %v1399
      %v1401 = vpop.f32.mrf.mxu0
      %v1402 = vpop.f32.mrf.mxu0
      %v1403 = vadd.f32 %v1338, %v1402
      %v1404 = vpop.f32.mrf.mxu0
      %1405 = vmatprep.mubr.bf16.mxu0 0
      %1406 = vmatmul.mubr.bf16.gmra.mxu0 %v629
      %v1407 = vpop.f32.mrf.mxu0
      %v1408 = vadd.f32 %v1343, %v1407
      %v1409 = vpop.f32.mrf.mxu0
      %v1410 = vpop.f32.mrf.mxu0
      %v1411 = vadd.f32 %v1346, %v1410
      %v1412 = vpop.f32.mrf.mxu0
      %1413 = vdwg.mxu0
      %v1414 = vadd.f32 %v1384, %v1387
      %v1415 = vadd.f32 %v1414, %v1392
      %v1416 = vadd.f32 %v1415, %v1395
      %v1417 = vadd.f32 %v1416, %v1400
      %v1418 = vadd.f32 %v1417, %v1403
      %v1419 = vadd.f32 %v1418, %v1408
      %v1420 = vadd.f32 %v1419, %v1411
      %v1421 = vrot.slane %v1420, 4
      %v1422 = vadd.f32 %v1420, %v1421
      %v1423 = vrot.slane %v1422, 2
      %v1424 = vadd.f32 %v1422, %v1423
      %v1425 = vrot.slane %v1424, 1
      %v1426 = vadd.f32 %v1424, %v1425
      %v1427 = vmul.f32 %v1384, %v1384
      %v1428 = vmul.f32 %v1387, %v1387
      %v1429 = vmul.f32 %v1392, %v1392
      %v1430 = vmul.f32 %v1395, %v1395
      %v1431 = vmul.f32 %v1400, %v1400
      %v1432 = vmul.f32 %v1403, %v1403
      %v1433 = vmul.f32 %v1408, %v1408
      %v1434 = vmul.f32 %v1411, %v1411
      %v1435 = vadd.f32 %v1427, %v1428
      %v1436 = vadd.f32 %v1435, %v1429
      %v1437 = vadd.f32 %v1436, %v1430
      %v1438 = vadd.f32 %v1437, %v1431
      %v1439 = vadd.f32 %v1438, %v1432
      %v1440 = vadd.f32 %v1439, %v1433
      %v1441 = vadd.f32 %v1440, %v1434
      %v1442 = vrot.slane %v1441, 4
      %v1443 = vadd.f32 %v1441, %v1442
      %v1444 = vrot.slane %v1443, 2
      %v1445 = vadd.f32 %v1443, %v1444
      %v1446 = vrot.slane %v1445, 1
      %v1447 = vadd.f32 %v1445, %v1446
      %vm1448 = vcmask 1040384
      %v1449 = vsel %vm1448, %v1426, %v1447
      %1450 = vst [vmem:[%s235] sm:$0x3] %v1449
      %v1451 = vpack.c.bf16 %v1387, %v1384
      %v1452 = vpack.c.bf16 %v1395, %v1392
      %v1453 = vpack.c.bf16 %v1403, %v1400
      %v1454 = vpack.c.bf16 %v1411, %v1408
      %v1459 = vunpack.c.l.b16 %v1451
      %v1460 = vunpack.c.h.b16 %v1451
      %v1461 = vunpack.c.l.b16 %v1452
      %v1462 = vunpack.c.h.b16 %v1452
      %v1463 = vunpack.c.l.b16 %v1453
      %v1464 = vunpack.c.h.b16 %v1453
      %v1465 = vunpack.c.l.b16 %v1454
      %v1466 = vunpack.c.h.b16 %v1454
      %v1467 = vpack.c.b16 %v1459, %v1459
      %v1468 = vpack.c.b16 %v1460, %v1460
      %v1469 = vpack.c.b16 %v1461, %v1461
      %v1470 = vpack.c.b16 %v1462, %v1462
      %v1471 = vpack.c.b16 %v1463, %v1463
      %v1472 = vpack.c.b16 %v1464, %v1464
      %v1473 = vpack.c.b16 %v1465, %v1465
      %v1474 = vpack.c.b16 %v1466, %v1466
      %1483 = vst [vmem:[%s231] sm:$0xf] %v1467
      %1484 = vst [vmem:[%s231 + $0x4] sm:$0xf] %v1468
      %1485 = vst [vmem:[%s231 + $0x8] sm:$0xf] %v1469
      %1486 = vst [vmem:[%s231 + $0xc] sm:$0xf] %v1470
      %1487 = vst [vmem:[%s231 + $0x10] sm:$0xf] %v1471
      %1488 = vst [vmem:[%s231 + $0x14] sm:$0xf] %v1472
      %1489 = vst [vmem:[%s231 + $0x18] sm:$0xf] %v1473
      %1490 = vst [vmem:[%s231 + $0x1c] sm:$0xf] %v1474
      %p1491 = scmp.lt.s32.totalorder %s17, 1
      %s1492 = scalar_select %p1491, %s17, 1
      %s1493 = smul.addr %s1492, 8
      %s1494 = smul.addr %s1493, 4
      %s1495 = scalar_lea.vmem %s4, %s1494
      %p1496 = scmp.lt.s32.totalorder %s17, 1
      %s1497 = scalar_select %p1496, %s17, 1
      %s1498 = smul.addr %s1497, 2
      %s1499 = scalar_lea.vmem %s5, %s1498
      // Predicated region
      $region37: #{bottleneck_forward.5} parent=35 // pred_check
        %p1500 = pneg %p124
      $region38: #{bottleneck_forward.5} parent=35 // pred_check_branch
        %1502 = sbr.rel (%p1500) target = $region40
      $region39: #{bottleneck_forward.5} parent=35 // pred_region
        _
      $region40: #{bottleneck_forward.5} parent=35 // pred_fallthru
        _
      // Predicated region
      $region41: #{bottleneck_forward.5} parent=35 // pred_check
        %p1503 = pneg %p150
      $region42: #{bottleneck_forward.5} parent=35 // pred_check_branch
        %1505 = sbr.rel (%p1503) target = $region44
      $region43: #{bottleneck_forward.5} parent=35 // pred_region
        _
      $region44: #{bottleneck_forward.5} parent=35 // pred_fallthru
        _
    $region36: #{bottleneck_forward.5} parent=5 // pred_fallthru
      _
    %p1506 = scmp.le.s32.totalorder 2, %s12
    // Predicated region
    $region45: #{bottleneck_forward.5} parent=5 // pred_check
      %p1507 = pneg %p1506
    $region46: #{bottleneck_forward.5} parent=5 // pred_check_branch
      %1509 = sbr.rel (%p1507) target = $region48
    $region47: #{bottleneck_forward.5} parent=5 // pred_region
      %s1510 = ssub.s32 %s12, 2
      // Predicated region
      $region49: #{bottleneck_forward.5} parent=47 // pred_check
        %p1511 = pneg %p130
      $region50: #{bottleneck_forward.5} parent=47 // pred_check_branch
        %1513 = sbr.rel (%p1511) target = $region52
      $region51: #{bottleneck_forward.5} parent=47 // pred_region
        %p1514 = scmp.lt.s32.totalorder %s18, 1
        %s1515 = scalar_select %p1514, %s18, 1
        %s1516 = smul.addr %s1515, 8
        %s1517 = smul.addr %s1516, 4
        %s1518 = scalar_lea.vmem %s4, %s1517
      $region52: #{bottleneck_forward.5} parent=47 // pred_fallthru
        _
      // Predicated region
      $region53: #{bottleneck_forward.5} parent=47 // pred_check
        %p1519 = pneg %p156
      $region54: #{bottleneck_forward.5} parent=47 // pred_check_branch
        %1521 = sbr.rel (%p1519) target = $region56
      $region55: #{bottleneck_forward.5} parent=47 // pred_region
        %p1522 = scmp.lt.s32.totalorder %s18, 1
        %s1523 = scalar_select %p1522, %s18, 1
        %s1524 = smul.addr %s1523, 2
        %s1525 = scalar_lea.vmem %s5, %s1524
      $region56: #{bottleneck_forward.5} parent=47 // pred_fallthru
        _
    $region48: #{bottleneck_forward.5} parent=5 // pred_fallthru
      _
  $region6: #{bottleneck_forward.5} parent=0 // loop_footer
    %s16 = sadd.s32 1, %s12
  $region7: #{bottleneck_forward.5} parent=0 // loop_footer_branch
    %11 = sbr.rel target = $region3
  $region8: #{bottleneck_forward.5} parent=0 // loop_exit
    _

</llo_original>
